<compile_context>
chip_gen: v7x
topology: tpu7x:2x2x1
jax: 0.10.0
libtpu: 0.0.40
codegen_flags: <defaults>
</compile_context>

<pallas_src>
import functools

import jax
import jax.numpy as jnp
from jax.experimental import pallas as pl
from jax.experimental.pallas import tpu as pltpu


MXU_DTYPE = jnp.bfloat16   # set to jnp.float32 for strict f32 parity
CIN_PAD = 8                # head input channels padded 6 -> 8 (sublane aligned)
LANE_MARGIN = 128          # lane margin around the flat-spatial block (>= Wpad+1)


def _round_up(x, m):
    return ((x + m - 1) // m) * m


# --------------------------------------------------------------------------
# Fused kernel: one batch element per grid step, everything resident in VMEM.
# --------------------------------------------------------------------------
def edsr_fused_kernel(mask_ref, x_ref, wh_ref, bh_ref, wb_ref, bb_ref,
                      wt_ref, bt_ref, o_ref, hbuf, tbuf, *, Wpad, res_scale):
    Prows = o_ref.shape[2]                    # (H+2) * Wpad flat spatial extent
    cin_head = x_ref.shape[1]
    n_body_layers = wb_ref.shape[0]           # 2 * n_resblocks
    n_feats = hbuf.shape[0]
    ML = (hbuf.shape[1] - Prows) // 2         # lane margin inside the buffers
    mxu_dtype = wh_ref.dtype

    # Interior-pixel mask over the flat spatial (lane) axis, precomputed in the
    # wrapper; boundary / halo lanes are garbage and get zeroed via where().
    interior = mask_ref[...] > 0.5            # (1, Prows) bool

    def masked(v):
        return jnp.where(interior, v, 0.0)

    def conv3x3(src, cin, get_w, bias):
        """3x3 'same' conv over the padded-flat layout -> (cout, Prows) f32.

        Taps are grouped per kernel row kh: one (cout, 3*cin) x (3*cin, Prows)
        MXU matmul per kh.  The kw shifts are static lane-shifted slices of the
        channels-first activation buffer.  Bias is the accumulator init.
        """
        cout = bias.shape[0]
        acc = jnp.broadcast_to(bias, (cout, Prows))           # bias fold-in
        for kh in range(3):
            base = ML + (kh - 1) * Wpad - 1
            lhs = jnp.concatenate(
                [src[0:cin, base + kw: base + kw + Prows] for kw in range(3)],
                axis=0)                                        # (3*cin, Prows)
            acc = acc + jnp.dot(get_w(kh), lhs.astype(mxu_dtype),
                                preferred_element_type=jnp.float32)
        return acc

    # Zero both activation buffers once (keeps margins + zero-pad ring clean).
    hbuf[...] = jnp.zeros_like(hbuf)
    tbuf[...] = jnp.zeros_like(tbuf)

    # Stage the (already padded, channels-first, flattened) network input.
    tbuf[0:cin_head, ML:ML + Prows] = x_ref[0]

    # Head: conv(6 -> n_feats) + ReLU.
    acc = conv3x3(tbuf, cin_head, lambda kh: wh_ref[kh], bh_ref[...])
    hbuf[:, ML:ML + Prows] = masked(jnp.maximum(acc, 0.0))

    # Body: ResBlock[ conv -> ReLU -> conv ; h = h + res_scale * res ].
    for j in range(0, n_body_layers, 2):
        acc = conv3x3(hbuf, n_feats, lambda kh, j=j: wb_ref[j, kh], bb_ref[j])
        tbuf[:, ML:ML + Prows] = masked(jnp.maximum(acc, 0.0))
        acc = conv3x3(tbuf, n_feats, lambda kh, j=j: wb_ref[j + 1, kh],
                      bb_ref[j + 1])
        hbuf[:, ML:ML + Prows] = masked(hbuf[:, ML:ML + Prows] + res_scale * acc)

    # Tail conv (n_feats -> 4) fused with the global skip: pred = opt + res.
    acc = conv3x3(hbuf, n_feats, lambda kh: wt_ref[kh], bt_ref[...])
    o_ref[0] = masked(x_ref[0, 0:4, :] + acc).astype(o_ref.dtype)


# --------------------------------------------------------------------------
# Wrapper: pack weights / inputs into the kernel layout and call pallas_call.
# --------------------------------------------------------------------------
def _pack_conv_weight(w, mxu_dtype):
    # w: (3, 3, cin, cout) [HWIO] -> (3, cout, 3*cin), grouped by kernel row kh;
    # inner K index = kw*cin + c, matching the kernel's lhs concat order.
    kh, kw, cin, cout = w.shape
    return jnp.transpose(w, (0, 3, 1, 2)).reshape(kh, cout, kw * cin).astype(mxu_dtype)


def edsr_forward_nchw(params, opt, sar, res_scale, mxu_dtype=MXU_DTYPE):
    N, _, H, W = opt.shape
    w_head, b_head = params["head"]
    w_tail, b_tail = params["tail"]
    n_feats = w_head.shape[-1]
    n_resblocks = len(params["blocks"])
    assert n_resblocks >= 1

    Wpad = _round_up(W + 2, 8)                 # padded row stride (sublane-tile friendly)
    Prows = (H + 2) * Wpad                     # flat padded spatial extent
    Ptot = Prows + 2 * LANE_MARGIN
    assert Wpad + 1 <= LANE_MARGIN

    # ---- pack the input once: channels-first, zero-padded, flattened ----
    x = jnp.concatenate([opt, sar], axis=1)                                  # (N, 6, H, W)
    x = jnp.pad(x, ((0, 0), (0, CIN_PAD - x.shape[1]), (1, 1), (1, Wpad - W - 1)))
    x = x.reshape(N, CIN_PAD, Prows).astype(jnp.float32)

    # interior-pixel mask over the flat spatial axis (shared by every layer)
    mask = jnp.pad(jnp.ones((H, W), jnp.float32), ((1, 1), (1, Wpad - W - 1)))
    mask = mask.reshape(1, Prows)

    # ---- pack weights (grouped by kernel row, bf16 for the MXU) ----
    wh = _pack_conv_weight(
        jnp.pad(w_head, ((0, 0), (0, 0), (0, CIN_PAD - w_head.shape[2]), (0, 0))),
        mxu_dtype)
    bh = b_head.reshape(n_feats, 1).astype(jnp.float32)

    body_pairs = [cv for blk in params["blocks"]
                  for cv in (blk["conv1"], blk["conv2"])]
    wb = jnp.stack([_pack_conv_weight(w, mxu_dtype) for (w, _) in body_pairs])
    bb = jnp.stack([b.reshape(n_feats, 1) for (_, b) in body_pairs]).astype(jnp.float32)

    wt = _pack_conv_weight(w_tail, mxu_dtype)
    bt = b_tail.reshape(4, 1).astype(jnp.float32)

    kern = functools.partial(edsr_fused_kernel, Wpad=Wpad, res_scale=res_scale)

    out = pl.pallas_call(
        kern,
        out_shape=jax.ShapeDtypeStruct((N, 4, Prows), jnp.float32),
        grid_spec=pltpu.PrefetchScalarGridSpec(
            num_scalar_prefetch=0,
            grid=(N,),
            in_specs=[
                pl.BlockSpec((1, Prows), lambda n: (0, 0)),              # interior mask
                pl.BlockSpec((1, CIN_PAD, Prows), lambda n: (n, 0, 0)),  # packed input
                pl.BlockSpec(wh.shape, lambda n: (0, 0, 0)),             # head weights
                pl.BlockSpec(bh.shape, lambda n: (0, 0)),                # head bias
                pl.BlockSpec(wb.shape, lambda n: (0, 0, 0, 0)),          # body weights
                pl.BlockSpec(bb.shape, lambda n: (0, 0, 0)),             # body biases
                pl.BlockSpec(wt.shape, lambda n: (0, 0, 0)),             # tail weights
                pl.BlockSpec(bt.shape, lambda n: (0, 0)),                # tail bias
            ],
            out_specs=pl.BlockSpec((1, 4, Prows), lambda n: (n, 0, 0)),
            scratch_shapes=[pltpu.VMEM((n_feats, Ptot), jnp.float32),    # h buffer
                            pltpu.VMEM((n_feats, Ptot), jnp.float32)],   # t buffer
        ),
        compiler_params=pltpu.CompilerParams(
            dimension_semantics=("parallel",),    # one image per TensorCore on v7x
        ),
    )(mask, x, wh, bh, wb, bb, wt, bt)

    # lane-dense kernel output -> crop the zero-pad ring in the wrapper
    pred = out.reshape(N, 4, H + 2, Wpad)[:, :, 1:H + 1, 1:W + 1]
    return pred


@functools.partial(jax.jit, static_argnums=(3,))
def edsr_forward(params, opt_nchw, sar_nchw, res_scale):
    return edsr_forward_nchw(params, opt_nchw, sar_nchw, res_scale)


# --------------------------------------------------------------------------
# Parameters + pure-JAX reference (for a loose numerical self-check).
# --------------------------------------------------------------------------
def init_edsr_params(key, n_feats, n_resblocks):
    """Deterministic synthetic init (PyTorch-default-like uniform bounds)."""
    def conv_init(k, cin, cout):
        k1, k2 = jax.random.split(k)
        bound = 1.0 / float((cin * 9) ** 0.5)
        w = jax.random.uniform(k1, (3, 3, cin, cout), jnp.float32, -bound, bound)
        b = jax.random.uniform(k2, (cout,), jnp.float32, -bound, bound)
        return w, b

    keys = jax.random.split(key, 2 + 2 * n_resblocks)
    return {
        "head": conv_init(keys[0], 6, n_feats),
        "blocks": [
            {
                "conv1": conv_init(keys[1 + 2 * i], n_feats, n_feats),
                "conv2": conv_init(keys[2 + 2 * i], n_feats, n_feats),
            }
            for i in range(n_resblocks)
        ],
        "tail": conv_init(keys[-1], n_feats, 4),
    }


def edsr_reference(params, opt, sar, res_scale):
    def conv(x, wb):
        w, b = wb
        y = jax.lax.conv_general_dilated(
            x, w, window_strides=(1, 1), padding="SAME",
            dimension_numbers=("NCHW", "HWIO", "NCHW"))
        return y + b[None, :, None, None]

    h = jnp.maximum(conv(jnp.concatenate([opt, sar], axis=1), params["head"]), 0.0)
    for blk in params["blocks"]:
        t = jnp.maximum(conv(h, blk["conv1"]), 0.0)
        h = h + res_scale * conv(t, blk["conv2"])
    return opt + conv(h, params["tail"])


if __name__ == "__main__":
    # Small config: n_resblocks=2, n_feats=32, res_scale=0.1
    N, H, W = 2, 16, 16
    n_feats, n_resblocks, res_scale = 32, 2, 0.1

    key = jax.random.PRNGKey(0)
    k_opt, k_sar, k_par = jax.random.split(key, 3)
    opt = jax.random.normal(k_opt, (N, 4, H, W), jnp.float32)   # NCHW like PyTorch
    sar = jax.random.normal(k_sar, (N, 2, H, W), jnp.float32)
    params = init_edsr_params(k_par, n_feats, n_resblocks)

    pred = edsr_forward(params, opt, sar, res_scale)
    jax.block_until_ready(pred)
    assert pred.shape == (N, 4, H, W)

    # Loose check vs. an f32 XLA reference (kernel matmuls run in bf16).
    ref = edsr_reference(params, opt, sar, res_scale)
    err = float(jnp.max(jnp.abs(pred - ref)))
    assert err < 1e-1, f"max abs error vs reference too large: {err}"

    print("KERNEL_OK")
</pallas_src>

<mosaic_0001>
module attributes {stable_mosaic.version = 11 : i64} {
  func.func @edsr_fused_kernel(%arg0: i32, %arg1: memref<1x432xf32, #tpu.memory_space<vmem>>, %arg2: memref<1x8x432xf32, #tpu.memory_space<vmem>>, %arg3: memref<3x32x24xbf16, #tpu.memory_space<vmem>>, %arg4: memref<32x1xf32, #tpu.memory_space<vmem>>, %arg5: memref<4x3x32x96xbf16, #tpu.memory_space<vmem>>, %arg6: memref<4x32x1xf32, #tpu.memory_space<vmem>>, %arg7: memref<3x4x96xbf16, #tpu.memory_space<vmem>>, %arg8: memref<4x1xf32, #tpu.memory_space<vmem>>, %arg9: memref<1x4x432xf32, #tpu.memory_space<vmem>>, %arg10: memref<32x688xf32, #tpu.memory_space<vmem>>, %arg11: memref<32x688xf32, #tpu.memory_space<vmem>>) attributes {dimension_semantics = [#tpu.dimension_semantics<parallel>], iteration_bounds = array<i64: 2>, scalar_prefetch = 0 : i64, scratch_operands = 2 : i64, tpu.core_type = #tpu.core_type<tc>, window_params = [{pipeline_mode = #tpu.pipeline_mode<synchronous>, transform_indices = @transform_0, window_bounds = array<i64: 1, 432>}, {transform_indices = @transform_1, window_bounds = array<i64: 1, 8, 432>}, {pipeline_mode = #tpu.pipeline_mode<synchronous>, transform_indices = @transform_2, window_bounds = array<i64: 3, 32, 24>}, {pipeline_mode = #tpu.pipeline_mode<synchronous>, transform_indices = @transform_3, window_bounds = array<i64: 32, 1>}, {pipeline_mode = #tpu.pipeline_mode<synchronous>, transform_indices = @transform_4, window_bounds = array<i64: 4, 3, 32, 96>}, {pipeline_mode = #tpu.pipeline_mode<synchronous>, transform_indices = @transform_5, window_bounds = array<i64: 4, 32, 1>}, {pipeline_mode = #tpu.pipeline_mode<synchronous>, transform_indices = @transform_6, window_bounds = array<i64: 3, 4, 96>}, {pipeline_mode = #tpu.pipeline_mode<synchronous>, transform_indices = @transform_7, window_bounds = array<i64: 4, 1>}, {transform_indices = @transform_8, window_bounds = array<i64: 1, 4, 432>}]} {
    %c0 = arith.constant 0 : index
    %c0_0 = arith.constant 0 : index
    %0 = vector.load %arg1[%c0, %c0_0] : memref<1x432xf32, #tpu.memory_space<vmem>>, vector<1x432xf32>
    %cst = arith.constant 5.000000e-01 : f32
    %1 = vector.broadcast %cst : f32 to vector<1x432xf32>
    %2 = arith.cmpf ogt, %0, %1 : vector<1x432xf32>
    %cst_1 = arith.constant 0.000000e+00 : f32
    %3 = vector.broadcast %cst_1 : f32 to vector<32x688xf32>
    %c0_2 = arith.constant 0 : index
    %c0_3 = arith.constant 0 : index
    %4 = vector.load %arg10[%c0_2, %c0_3] : memref<32x688xf32, #tpu.memory_space<vmem>>, vector<32x688xf32>
    tpu.vector_store %arg10[%c0_2, %c0_3], %3 {strides = array<i32>} : memref<32x688xf32, #tpu.memory_space<vmem>>, vector<32x688xf32>,
    %cst_4 = arith.constant 0.000000e+00 : f32
    %5 = vector.broadcast %cst_4 : f32 to vector<32x688xf32>
    %c0_5 = arith.constant 0 : index
    %c0_6 = arith.constant 0 : index
    %6 = vector.load %arg11[%c0_5, %c0_6] : memref<32x688xf32, #tpu.memory_space<vmem>>, vector<32x688xf32>
    tpu.vector_store %arg11[%c0_5, %c0_6], %5 {strides = array<i32>} : memref<32x688xf32, #tpu.memory_space<vmem>>, vector<32x688xf32>,
    %c0_7 = arith.constant 0 : index
    %c0_8 = arith.constant 0 : index
    %c0_9 = arith.constant 0 : index
    %7 = vector.load %arg2[%c0_7, %c0_8, %c0_9] : memref<1x8x432xf32, #tpu.memory_space<vmem>>, vector<1x8x432xf32>
    %8 = vector.shape_cast %7 : vector<1x8x432xf32> to vector<8x432xf32>
    %c0_10 = arith.constant 0 : index
    %c128 = arith.constant 128 : index
    %9 = vector.load %arg11[%c0_10, %c128] : memref<32x688xf32, #tpu.memory_space<vmem>>, vector<8x432xf32>
    tpu.vector_store %arg11[%c0_10, %c128], %8 {strides = array<i32>} : memref<32x688xf32, #tpu.memory_space<vmem>>, vector<8x432xf32>,
    %c0_11 = arith.constant 0 : index
    %c0_12 = arith.constant 0 : index
    %10 = vector.load %arg4[%c0_11, %c0_12] : memref<32x1xf32, #tpu.memory_space<vmem>>, vector<32x1xf32>
    %11 = vector.shape_cast %10 : vector<32x1xf32> to vector<32x1xf32>
    %12 = vector.broadcast %11 : vector<32x1xf32> to vector<32x432xf32>
    %c0_13 = arith.constant 0 : index
    %c103 = arith.constant 103 : index
    %13 = vector.load %arg11[%c0_13, %c103] : memref<32x688xf32, #tpu.memory_space<vmem>>, vector<8x432xf32>
    %c0_14 = arith.constant 0 : index
    %c104 = arith.constant 104 : index
    %14 = vector.load %arg11[%c0_14, %c104] : memref<32x688xf32, #tpu.memory_space<vmem>>, vector<8x432xf32>
    %c0_15 = arith.constant 0 : index
    %c105 = arith.constant 105 : index
    %15 = vector.load %arg11[%c0_15, %c105] : memref<32x688xf32, #tpu.memory_space<vmem>>, vector<8x432xf32>
    %16 = tpu.concatenate %13, %14, %15 in 0 : vector<8x432xf32>, vector<8x432xf32>, vector<8x432xf32> -> vector<24x432xf32>
    %c0_16 = arith.constant 0 : index
    %c0_17 = arith.constant 0 : index
    %c0_18 = arith.constant 0 : index
    %17 = vector.load %arg3[%c0_16, %c0_17, %c0_18] : memref<3x32x24xbf16, #tpu.memory_space<vmem>>, vector<1x32x24xbf16>
    %18 = vector.shape_cast %17 : vector<1x32x24xbf16> to vector<32x24xbf16>
    %19 = arith.truncf %16 : vector<24x432xf32> to vector<24x432xbf16>
    %cst_19 = arith.constant dense<0.000000e+00> : vector<32x432xf32>
    %20 = tpu.matmul %18, %19, %cst_19 {dimension_numbers = #tpu.dot_dimension_numbers<[1], [0], [0], [1], [0, 0, 1, 1], [], []>} : vector<32x24xbf16>, vector<24x432xbf16>, vector<32x432xf32> -> vector<32x432xf32>
    %21 = arith.addf %12, %20 : vector<32x432xf32>
    %c0_20 = arith.constant 0 : index
    %c127 = arith.constant 127 : index
    %22 = vector.load %arg11[%c0_20, %c127] : memref<32x688xf32, #tpu.memory_space<vmem>>, vector<8x432xf32>
    %c0_21 = arith.constant 0 : index
    %c128_22 = arith.constant 128 : index
    %23 = vector.load %arg11[%c0_21, %c128_22] : memref<32x688xf32, #tpu.memory_space<vmem>>, vector<8x432xf32>
    %c0_23 = arith.constant 0 : index
    %c129 = arith.constant 129 : index
    %24 = vector.load %arg11[%c0_23, %c129] : memref<32x688xf32, #tpu.memory_space<vmem>>, vector<8x432xf32>
    %25 = tpu.concatenate %22, %23, %24 in 0 : vector<8x432xf32>, vector<8x432xf32>, vector<8x432xf32> -> vector<24x432xf32>
    %c1 = arith.constant 1 : index
    %c0_24 = arith.constant 0 : index
    %c0_25 = arith.constant 0 : index
    %26 = vector.load %arg3[%c1, %c0_24, %c0_25] : memref<3x32x24xbf16, #tpu.memory_space<vmem>>, vector<1x32x24xbf16>
    %27 = vector.shape_cast %26 : vector<1x32x24xbf16> to vector<32x24xbf16>
    %28 = arith.truncf %25 : vector<24x432xf32> to vector<24x432xbf16>
    %cst_26 = arith.constant dense<0.000000e+00> : vector<32x432xf32>
    %29 = tpu.matmul %27, %28, %cst_26 {dimension_numbers = #tpu.dot_dimension_numbers<[1], [0], [0], [1], [0, 0, 1, 1], [], []>} : vector<32x24xbf16>, vector<24x432xbf16>, vector<32x432xf32> -> vector<32x432xf32>
    %30 = arith.addf %21, %29 : vector<32x432xf32>
    %c0_27 = arith.constant 0 : index
    %c151 = arith.constant 151 : index
    %31 = vector.load %arg11[%c0_27, %c151] : memref<32x688xf32, #tpu.memory_space<vmem>>, vector<8x432xf32>
    %c0_28 = arith.constant 0 : index
    %c152 = arith.constant 152 : index
    %32 = vector.load %arg11[%c0_28, %c152] : memref<32x688xf32, #tpu.memory_space<vmem>>, vector<8x432xf32>
    %c0_29 = arith.constant 0 : index
    %c153 = arith.constant 153 : index
    %33 = vector.load %arg11[%c0_29, %c153] : memref<32x688xf32, #tpu.memory_space<vmem>>, vector<8x432xf32>
    %34 = tpu.concatenate %31, %32, %33 in 0 : vector<8x432xf32>, vector<8x432xf32>, vector<8x432xf32> -> vector<24x432xf32>
    %c2 = arith.constant 2 : index
    %c0_30 = arith.constant 0 : index
    %c0_31 = arith.constant 0 : index
    %35 = vector.load %arg3[%c2, %c0_30, %c0_31] : memref<3x32x24xbf16, #tpu.memory_space<vmem>>, vector<1x32x24xbf16>
    %36 = vector.shape_cast %35 : vector<1x32x24xbf16> to vector<32x24xbf16>
    %37 = arith.truncf %34 : vector<24x432xf32> to vector<24x432xbf16>
    %cst_32 = arith.constant dense<0.000000e+00> : vector<32x432xf32>
    %38 = tpu.matmul %36, %37, %cst_32 {dimension_numbers = #tpu.dot_dimension_numbers<[1], [0], [0], [1], [0, 0, 1, 1], [], []>} : vector<32x24xbf16>, vector<24x432xbf16>, vector<32x432xf32> -> vector<32x432xf32>
    %39 = arith.addf %30, %38 : vector<32x432xf32>
    %cst_33 = arith.constant 0.000000e+00 : f32
    %40 = vector.broadcast %cst_33 : f32 to vector<32x432xf32>
    %41 = arith.maximumf %39, %40 : vector<32x432xf32>
    %cst_34 = arith.constant 0.000000e+00 : f32
    %42 = vector.shape_cast %2 : vector<1x432xi1> to vector<1x432xi1>
    %43 = vector.broadcast %42 : vector<1x432xi1> to vector<32x432xi1>
    %44 = vector.broadcast %cst_34 : f32 to vector<32x432xf32>
    %45 = arith.select %43, %41, %44 : vector<32x432xi1>, vector<32x432xf32>
    %c0_35 = arith.constant 0 : index
    %c128_36 = arith.constant 128 : index
    %46 = vector.load %arg10[%c0_35, %c128_36] : memref<32x688xf32, #tpu.memory_space<vmem>>, vector<32x432xf32>
    tpu.vector_store %arg10[%c0_35, %c128_36], %45 {strides = array<i32>} : memref<32x688xf32, #tpu.memory_space<vmem>>, vector<32x432xf32>,
    %c0_37 = arith.constant 0 : index
    %c0_38 = arith.constant 0 : index
    %c0_39 = arith.constant 0 : index
    %47 = vector.load %arg6[%c0_37, %c0_38, %c0_39] : memref<4x32x1xf32, #tpu.memory_space<vmem>>, vector<1x32x1xf32>
    %48 = vector.shape_cast %47 : vector<1x32x1xf32> to vector<32x1xf32>
    %49 = vector.shape_cast %48 : vector<32x1xf32> to vector<32x1xf32>
    %50 = vector.broadcast %49 : vector<32x1xf32> to vector<32x432xf32>
    %c0_40 = arith.constant 0 : index
    %c103_41 = arith.constant 103 : index
    %51 = vector.load %arg10[%c0_40, %c103_41] : memref<32x688xf32, #tpu.memory_space<vmem>>, vector<32x432xf32>
    %c0_42 = arith.constant 0 : index
    %c104_43 = arith.constant 104 : index
    %52 = vector.load %arg10[%c0_42, %c104_43] : memref<32x688xf32, #tpu.memory_space<vmem>>, vector<32x432xf32>
    %c0_44 = arith.constant 0 : index
    %c105_45 = arith.constant 105 : index
    %53 = vector.load %arg10[%c0_44, %c105_45] : memref<32x688xf32, #tpu.memory_space<vmem>>, vector<32x432xf32>
    %54 = tpu.concatenate %51, %52, %53 in 0 : vector<32x432xf32>, vector<32x432xf32>, vector<32x432xf32> -> vector<96x432xf32>
    %c0_46 = arith.constant 0 : index
    %c0_47 = arith.constant 0 : index
    %c0_48 = arith.constant 0 : index
    %c0_49 = arith.constant 0 : index
    %55 = vector.load %arg5[%c0_46, %c0_47, %c0_48, %c0_49] : memref<4x3x32x96xbf16, #tpu.memory_space<vmem>>, vector<1x1x32x96xbf16>
    %56 = vector.shape_cast %55 : vector<1x1x32x96xbf16> to vector<32x96xbf16>
    %57 = arith.truncf %54 : vector<96x432xf32> to vector<96x432xbf16>
    %cst_50 = arith.constant dense<0.000000e+00> : vector<32x432xf32>
    %58 = tpu.matmul %56, %57, %cst_50 {dimension_numbers = #tpu.dot_dimension_numbers<[1], [0], [0], [1], [0, 0, 1, 1], [], []>} : vector<32x96xbf16>, vector<96x432xbf16>, vector<32x432xf32> -> vector<32x432xf32>
    %59 = arith.addf %50, %58 : vector<32x432xf32>
    %c0_51 = arith.constant 0 : index
    %c127_52 = arith.constant 127 : index
    %60 = vector.load %arg10[%c0_51, %c127_52] : memref<32x688xf32, #tpu.memory_space<vmem>>, vector<32x432xf32>
    %c0_53 = arith.constant 0 : index
    %c128_54 = arith.constant 128 : index
    %61 = vector.load %arg10[%c0_53, %c128_54] : memref<32x688xf32, #tpu.memory_space<vmem>>, vector<32x432xf32>
    %c0_55 = arith.constant 0 : index
    %c129_56 = arith.constant 129 : index
    %62 = vector.load %arg10[%c0_55, %c129_56] : memref<32x688xf32, #tpu.memory_space<vmem>>, vector<32x432xf32>
    %63 = tpu.concatenate %60, %61, %62 in 0 : vector<32x432xf32>, vector<32x432xf32>, vector<32x432xf32> -> vector<96x432xf32>
    %c0_57 = arith.constant 0 : index
    %c1_58 = arith.constant 1 : index
    %c0_59 = arith.constant 0 : index
    %c0_60 = arith.constant 0 : index
    %64 = vector.load %arg5[%c0_57, %c1_58, %c0_59, %c0_60] : memref<4x3x32x96xbf16, #tpu.memory_space<vmem>>, vector<1x1x32x96xbf16>
    %65 = vector.shape_cast %64 : vector<1x1x32x96xbf16> to vector<32x96xbf16>
    %66 = arith.truncf %63 : vector<96x432xf32> to vector<96x432xbf16>
    %cst_61 = arith.constant dense<0.000000e+00> : vector<32x432xf32>
    %67 = tpu.matmul %65, %66, %cst_61 {dimension_numbers = #tpu.dot_dimension_numbers<[1], [0], [0], [1], [0, 0, 1, 1], [], []>} : vector<32x96xbf16>, vector<96x432xbf16>, vector<32x432xf32> -> vector<32x432xf32>
    %68 = arith.addf %59, %67 : vector<32x432xf32>
    %c0_62 = arith.constant 0 : index
    %c151_63 = arith.constant 151 : index
    %69 = vector.load %arg10[%c0_62, %c151_63] : memref<32x688xf32, #tpu.memory_space<vmem>>, vector<32x432xf32>
    %c0_64 = arith.constant 0 : index
    %c152_65 = arith.constant 152 : index
    %70 = vector.load %arg10[%c0_64, %c152_65] : memref<32x688xf32, #tpu.memory_space<vmem>>, vector<32x432xf32>
    %c0_66 = arith.constant 0 : index
    %c153_67 = arith.constant 153 : index
    %71 = vector.load %arg10[%c0_66, %c153_67] : memref<32x688xf32, #tpu.memory_space<vmem>>, vector<32x432xf32>
    %72 = tpu.concatenate %69, %70, %71 in 0 : vector<32x432xf32>, vector<32x432xf32>, vector<32x432xf32> -> vector<96x432xf32>
    %c0_68 = arith.constant 0 : index
    %c2_69 = arith.constant 2 : index
    %c0_70 = arith.constant 0 : index
    %c0_71 = arith.constant 0 : index
    %73 = vector.load %arg5[%c0_68, %c2_69, %c0_70, %c0_71] : memref<4x3x32x96xbf16, #tpu.memory_space<vmem>>, vector<1x1x32x96xbf16>
    %74 = vector.shape_cast %73 : vector<1x1x32x96xbf16> to vector<32x96xbf16>
    %75 = arith.truncf %72 : vector<96x432xf32> to vector<96x432xbf16>
    %cst_72 = arith.constant dense<0.000000e+00> : vector<32x432xf32>
    %76 = tpu.matmul %74, %75, %cst_72 {dimension_numbers = #tpu.dot_dimension_numbers<[1], [0], [0], [1], [0, 0, 1, 1], [], []>} : vector<32x96xbf16>, vector<96x432xbf16>, vector<32x432xf32> -> vector<32x432xf32>
    %77 = arith.addf %68, %76 : vector<32x432xf32>
    %cst_73 = arith.constant 0.000000e+00 : f32
    %78 = vector.broadcast %cst_73 : f32 to vector<32x432xf32>
    %79 = arith.maximumf %77, %78 : vector<32x432xf32>
    %cst_74 = arith.constant 0.000000e+00 : f32
    %80 = vector.shape_cast %2 : vector<1x432xi1> to vector<1x432xi1>
    %81 = vector.broadcast %80 : vector<1x432xi1> to vector<32x432xi1>
    %82 = vector.broadcast %cst_74 : f32 to vector<32x432xf32>
    %83 = arith.select %81, %79, %82 : vector<32x432xi1>, vector<32x432xf32>
    %c0_75 = arith.constant 0 : index
    %c128_76 = arith.constant 128 : index
    %84 = vector.load %arg11[%c0_75, %c128_76] : memref<32x688xf32, #tpu.memory_space<vmem>>, vector<32x432xf32>
    tpu.vector_store %arg11[%c0_75, %c128_76], %83 {strides = array<i32>} : memref<32x688xf32, #tpu.memory_space<vmem>>, vector<32x432xf32>,
    %c1_77 = arith.constant 1 : index
    %c0_78 = arith.constant 0 : index
    %c0_79 = arith.constant 0 : index
    %85 = vector.load %arg6[%c1_77, %c0_78, %c0_79] : memref<4x32x1xf32, #tpu.memory_space<vmem>>, vector<1x32x1xf32>
    %86 = vector.shape_cast %85 : vector<1x32x1xf32> to vector<32x1xf32>
    %87 = vector.shape_cast %86 : vector<32x1xf32> to vector<32x1xf32>
    %88 = vector.broadcast %87 : vector<32x1xf32> to vector<32x432xf32>
    %c0_80 = arith.constant 0 : index
    %c103_81 = arith.constant 103 : index
    %89 = vector.load %arg11[%c0_80, %c103_81] : memref<32x688xf32, #tpu.memory_space<vmem>>, vector<32x432xf32>
    %c0_82 = arith.constant 0 : index
    %c104_83 = arith.constant 104 : index
    %90 = vector.load %arg11[%c0_82, %c104_83] : memref<32x688xf32, #tpu.memory_space<vmem>>, vector<32x432xf32>
    %c0_84 = arith.constant 0 : index
    %c105_85 = arith.constant 105 : index
    %91 = vector.load %arg11[%c0_84, %c105_85] : memref<32x688xf32, #tpu.memory_space<vmem>>, vector<32x432xf32>
    %92 = tpu.concatenate %89, %90, %91 in 0 : vector<32x432xf32>, vector<32x432xf32>, vector<32x432xf32> -> vector<96x432xf32>
    %c1_86 = arith.constant 1 : index
    %c0_87 = arith.constant 0 : index
    %c0_88 = arith.constant 0 : index
    %c0_89 = arith.constant 0 : index
    %93 = vector.load %arg5[%c1_86, %c0_87, %c0_88, %c0_89] : memref<4x3x32x96xbf16, #tpu.memory_space<vmem>>, vector<1x1x32x96xbf16>
    %94 = vector.shape_cast %93 : vector<1x1x32x96xbf16> to vector<32x96xbf16>
    %95 = arith.truncf %92 : vector<96x432xf32> to vector<96x432xbf16>
    %cst_90 = arith.constant dense<0.000000e+00> : vector<32x432xf32>
    %96 = tpu.matmul %94, %95, %cst_90 {dimension_numbers = #tpu.dot_dimension_numbers<[1], [0], [0], [1], [0, 0, 1, 1], [], []>} : vector<32x96xbf16>, vector<96x432xbf16>, vector<32x432xf32> -> vector<32x432xf32>
    %97 = arith.addf %88, %96 : vector<32x432xf32>
    %c0_91 = arith.constant 0 : index
    %c127_92 = arith.constant 127 : index
    %98 = vector.load %arg11[%c0_91, %c127_92] : memref<32x688xf32, #tpu.memory_space<vmem>>, vector<32x432xf32>
    %c0_93 = arith.constant 0 : index
    %c128_94 = arith.constant 128 : index
    %99 = vector.load %arg11[%c0_93, %c128_94] : memref<32x688xf32, #tpu.memory_space<vmem>>, vector<32x432xf32>
    %c0_95 = arith.constant 0 : index
    %c129_96 = arith.constant 129 : index
    %100 = vector.load %arg11[%c0_95, %c129_96] : memref<32x688xf32, #tpu.memory_space<vmem>>, vector<32x432xf32>
    %101 = tpu.concatenate %98, %99, %100 in 0 : vector<32x432xf32>, vector<32x432xf32>, vector<32x432xf32> -> vector<96x432xf32>
    %c1_97 = arith.constant 1 : index
    %c1_98 = arith.constant 1 : index
    %c0_99 = arith.constant 0 : index
    %c0_100 = arith.constant 0 : index
    %102 = vector.load %arg5[%c1_97, %c1_98, %c0_99, %c0_100] : memref<4x3x32x96xbf16, #tpu.memory_space<vmem>>, vector<1x1x32x96xbf16>
    %103 = vector.shape_cast %102 : vector<1x1x32x96xbf16> to vector<32x96xbf16>
    %104 = arith.truncf %101 : vector<96x432xf32> to vector<96x432xbf16>
    %cst_101 = arith.constant dense<0.000000e+00> : vector<32x432xf32>
    %105 = tpu.matmul %103, %104, %cst_101 {dimension_numbers = #tpu.dot_dimension_numbers<[1], [0], [0], [1], [0, 0, 1, 1], [], []>} : vector<32x96xbf16>, vector<96x432xbf16>, vector<32x432xf32> -> vector<32x432xf32>
    %106 = arith.addf %97, %105 : vector<32x432xf32>
    %c0_102 = arith.constant 0 : index
    %c151_103 = arith.constant 151 : index
    %107 = vector.load %arg11[%c0_102, %c151_103] : memref<32x688xf32, #tpu.memory_space<vmem>>, vector<32x432xf32>
    %c0_104 = arith.constant 0 : index
    %c152_105 = arith.constant 152 : index
    %108 = vector.load %arg11[%c0_104, %c152_105] : memref<32x688xf32, #tpu.memory_space<vmem>>, vector<32x432xf32>
    %c0_106 = arith.constant 0 : index
    %c153_107 = arith.constant 153 : index
    %109 = vector.load %arg11[%c0_106, %c153_107] : memref<32x688xf32, #tpu.memory_space<vmem>>, vector<32x432xf32>
    %110 = tpu.concatenate %107, %108, %109 in 0 : vector<32x432xf32>, vector<32x432xf32>, vector<32x432xf32> -> vector<96x432xf32>
    %c1_108 = arith.constant 1 : index
    %c2_109 = arith.constant 2 : index
    %c0_110 = arith.constant 0 : index
    %c0_111 = arith.constant 0 : index
    %111 = vector.load %arg5[%c1_108, %c2_109, %c0_110, %c0_111] : memref<4x3x32x96xbf16, #tpu.memory_space<vmem>>, vector<1x1x32x96xbf16>
    %112 = vector.shape_cast %111 : vector<1x1x32x96xbf16> to vector<32x96xbf16>
    %113 = arith.truncf %110 : vector<96x432xf32> to vector<96x432xbf16>
    %cst_112 = arith.constant dense<0.000000e+00> : vector<32x432xf32>
    %114 = tpu.matmul %112, %113, %cst_112 {dimension_numbers = #tpu.dot_dimension_numbers<[1], [0], [0], [1], [0, 0, 1, 1], [], []>} : vector<32x96xbf16>, vector<96x432xbf16>, vector<32x432xf32> -> vector<32x432xf32>
    %115 = arith.addf %106, %114 : vector<32x432xf32>
    %c0_113 = arith.constant 0 : index
    %c128_114 = arith.constant 128 : index
    %116 = vector.load %arg10[%c0_113, %c128_114] : memref<32x688xf32, #tpu.memory_space<vmem>>, vector<32x432xf32>
    %cst_115 = arith.constant 1.000000e-01 : f32
    %117 = vector.broadcast %cst_115 : f32 to vector<32x432xf32>
    %118 = arith.mulf %117, %115 : vector<32x432xf32>
    %119 = arith.addf %116, %118 : vector<32x432xf32>
    %cst_116 = arith.constant 0.000000e+00 : f32
    %120 = vector.shape_cast %2 : vector<1x432xi1> to vector<1x432xi1>
    %121 = vector.broadcast %120 : vector<1x432xi1> to vector<32x432xi1>
    %122 = vector.broadcast %cst_116 : f32 to vector<32x432xf32>
    %123 = arith.select %121, %119, %122 : vector<32x432xi1>, vector<32x432xf32>
    %c0_117 = arith.constant 0 : index
    %c128_118 = arith.constant 128 : index
    %124 = vector.load %arg10[%c0_117, %c128_118] : memref<32x688xf32, #tpu.memory_space<vmem>>, vector<32x432xf32>
    tpu.vector_store %arg10[%c0_117, %c128_118], %123 {strides = array<i32>} : memref<32x688xf32, #tpu.memory_space<vmem>>, vector<32x432xf32>,
    %c2_119 = arith.constant 2 : index
    %c0_120 = arith.constant 0 : index
    %c0_121 = arith.constant 0 : index
    %125 = vector.load %arg6[%c2_119, %c0_120, %c0_121] : memref<4x32x1xf32, #tpu.memory_space<vmem>>, vector<1x32x1xf32>
    %126 = vector.shape_cast %125 : vector<1x32x1xf32> to vector<32x1xf32>
    %127 = vector.shape_cast %126 : vector<32x1xf32> to vector<32x1xf32>
    %128 = vector.broadcast %127 : vector<32x1xf32> to vector<32x432xf32>
    %c0_122 = arith.constant 0 : index
    %c103_123 = arith.constant 103 : index
    %129 = vector.load %arg10[%c0_122, %c103_123] : memref<32x688xf32, #tpu.memory_space<vmem>>, vector<32x432xf32>
    %c0_124 = arith.constant 0 : index
    %c104_125 = arith.constant 104 : index
    %130 = vector.load %arg10[%c0_124, %c104_125] : memref<32x688xf32, #tpu.memory_space<vmem>>, vector<32x432xf32>
    %c0_126 = arith.constant 0 : index
    %c105_127 = arith.constant 105 : index
    %131 = vector.load %arg10[%c0_126, %c105_127] : memref<32x688xf32, #tpu.memory_space<vmem>>, vector<32x432xf32>
    %132 = tpu.concatenate %129, %130, %131 in 0 : vector<32x432xf32>, vector<32x432xf32>, vector<32x432xf32> -> vector<96x432xf32>
    %c2_128 = arith.constant 2 : index
    %c0_129 = arith.constant 0 : index
    %c0_130 = arith.constant 0 : index
    %c0_131 = arith.constant 0 : index
    %133 = vector.load %arg5[%c2_128, %c0_129, %c0_130, %c0_131] : memref<4x3x32x96xbf16, #tpu.memory_space<vmem>>, vector<1x1x32x96xbf16>
    %134 = vector.shape_cast %133 : vector<1x1x32x96xbf16> to vector<32x96xbf16>
    %135 = arith.truncf %132 : vector<96x432xf32> to vector<96x432xbf16>
    %cst_132 = arith.constant dense<0.000000e+00> : vector<32x432xf32>
    %136 = tpu.matmul %134, %135, %cst_132 {dimension_numbers = #tpu.dot_dimension_numbers<[1], [0], [0], [1], [0, 0, 1, 1], [], []>} : vector<32x96xbf16>, vector<96x432xbf16>, vector<32x432xf32> -> vector<32x432xf32>
    %137 = arith.addf %128, %136 : vector<32x432xf32>
    %c0_133 = arith.constant 0 : index
    %c127_134 = arith.constant 127 : index
    %138 = vector.load %arg10[%c0_133, %c127_134] : memref<32x688xf32, #tpu.memory_space<vmem>>, vector<32x432xf32>
    %c0_135 = arith.constant 0 : index
    %c128_136 = arith.constant 128 : index
    %139 = vector.load %arg10[%c0_135, %c128_136] : memref<32x688xf32, #tpu.memory_space<vmem>>, vector<32x432xf32>
    %c0_137 = arith.constant 0 : index
    %c129_138 = arith.constant 129 : index
    %140 = vector.load %arg10[%c0_137, %c129_138] : memref<32x688xf32, #tpu.memory_space<vmem>>, vector<32x432xf32>
    %141 = tpu.concatenate %138, %139, %140 in 0 : vector<32x432xf32>, vector<32x432xf32>, vector<32x432xf32> -> vector<96x432xf32>
    %c2_139 = arith.constant 2 : index
    %c1_140 = arith.constant 1 : index
    %c0_141 = arith.constant 0 : index
    %c0_142 = arith.constant 0 : index
    %142 = vector.load %arg5[%c2_139, %c1_140, %c0_141, %c0_142] : memref<4x3x32x96xbf16, #tpu.memory_space<vmem>>, vector<1x1x32x96xbf16>
    %143 = vector.shape_cast %142 : vector<1x1x32x96xbf16> to vector<32x96xbf16>
    %144 = arith.truncf %141 : vector<96x432xf32> to vector<96x432xbf16>
    %cst_143 = arith.constant dense<0.000000e+00> : vector<32x432xf32>
    %145 = tpu.matmul %143, %144, %cst_143 {dimension_numbers = #tpu.dot_dimension_numbers<[1], [0], [0], [1], [0, 0, 1, 1], [], []>} : vector<32x96xbf16>, vector<96x432xbf16>, vector<32x432xf32> -> vector<32x432xf32>
    %146 = arith.addf %137, %145 : vector<32x432xf32>
    %c0_144 = arith.constant 0 : index
    %c151_145 = arith.constant 151 : index
    %147 = vector.load %arg10[%c0_144, %c151_145] : memref<32x688xf32, #tpu.memory_space<vmem>>, vector<32x432xf32>
    %c0_146 = arith.constant 0 : index
    %c152_147 = arith.constant 152 : index
    %148 = vector.load %arg10[%c0_146, %c152_147] : memref<32x688xf32, #tpu.memory_space<vmem>>, vector<32x432xf32>
    %c0_148 = arith.constant 0 : index
    %c153_149 = arith.constant 153 : index
    %149 = vector.load %arg10[%c0_148, %c153_149] : memref<32x688xf32, #tpu.memory_space<vmem>>, vector<32x432xf32>
    %150 = tpu.concatenate %147, %148, %149 in 0 : vector<32x432xf32>, vector<32x432xf32>, vector<32x432xf32> -> vector<96x432xf32>
    %c2_150 = arith.constant 2 : index
    %c2_151 = arith.constant 2 : index
    %c0_152 = arith.constant 0 : index
    %c0_153 = arith.constant 0 : index
    %151 = vector.load %arg5[%c2_150, %c2_151, %c0_152, %c0_153] : memref<4x3x32x96xbf16, #tpu.memory_space<vmem>>, vector<1x1x32x96xbf16>
    %152 = vector.shape_cast %151 : vector<1x1x32x96xbf16> to vector<32x96xbf16>
    %153 = arith.truncf %150 : vector<96x432xf32> to vector<96x432xbf16>
    %cst_154 = arith.constant dense<0.000000e+00> : vector<32x432xf32>
    %154 = tpu.matmul %152, %153, %cst_154 {dimension_numbers = #tpu.dot_dimension_numbers<[1], [0], [0], [1], [0, 0, 1, 1], [], []>} : vector<32x96xbf16>, vector<96x432xbf16>, vector<32x432xf32> -> vector<32x432xf32>
    %155 = arith.addf %146, %154 : vector<32x432xf32>
    %cst_155 = arith.constant 0.000000e+00 : f32
    %156 = vector.broadcast %cst_155 : f32 to vector<32x432xf32>
    %157 = arith.maximumf %155, %156 : vector<32x432xf32>
    %cst_156 = arith.constant 0.000000e+00 : f32
    %158 = vector.shape_cast %2 : vector<1x432xi1> to vector<1x432xi1>
    %159 = vector.broadcast %158 : vector<1x432xi1> to vector<32x432xi1>
    %160 = vector.broadcast %cst_156 : f32 to vector<32x432xf32>
    %161 = arith.select %159, %157, %160 : vector<32x432xi1>, vector<32x432xf32>
    %c0_157 = arith.constant 0 : index
    %c128_158 = arith.constant 128 : index
    %162 = vector.load %arg11[%c0_157, %c128_158] : memref<32x688xf32, #tpu.memory_space<vmem>>, vector<32x432xf32>
    tpu.vector_store %arg11[%c0_157, %c128_158], %161 {strides = array<i32>} : memref<32x688xf32, #tpu.memory_space<vmem>>, vector<32x432xf32>,
    %c3 = arith.constant 3 : index
    %c0_159 = arith.constant 0 : index
    %c0_160 = arith.constant 0 : index
    %163 = vector.load %arg6[%c3, %c0_159, %c0_160] : memref<4x32x1xf32, #tpu.memory_space<vmem>>, vector<1x32x1xf32>
    %164 = vector.shape_cast %163 : vector<1x32x1xf32> to vector<32x1xf32>
    %165 = vector.shape_cast %164 : vector<32x1xf32> to vector<32x1xf32>
    %166 = vector.broadcast %165 : vector<32x1xf32> to vector<32x432xf32>
    %c0_161 = arith.constant 0 : index
    %c103_162 = arith.constant 103 : index
    %167 = vector.load %arg11[%c0_161, %c103_162] : memref<32x688xf32, #tpu.memory_space<vmem>>, vector<32x432xf32>
    %c0_163 = arith.constant 0 : index
    %c104_164 = arith.constant 104 : index
    %168 = vector.load %arg11[%c0_163, %c104_164] : memref<32x688xf32, #tpu.memory_space<vmem>>, vector<32x432xf32>
    %c0_165 = arith.constant 0 : index
    %c105_166 = arith.constant 105 : index
    %169 = vector.load %arg11[%c0_165, %c105_166] : memref<32x688xf32, #tpu.memory_space<vmem>>, vector<32x432xf32>
    %170 = tpu.concatenate %167, %168, %169 in 0 : vector<32x432xf32>, vector<32x432xf32>, vector<32x432xf32> -> vector<96x432xf32>
    %c3_167 = arith.constant 3 : index
    %c0_168 = arith.constant 0 : index
    %c0_169 = arith.constant 0 : index
    %c0_170 = arith.constant 0 : index
    %171 = vector.load %arg5[%c3_167, %c0_168, %c0_169, %c0_170] : memref<4x3x32x96xbf16, #tpu.memory_space<vmem>>, vector<1x1x32x96xbf16>
    %172 = vector.shape_cast %171 : vector<1x1x32x96xbf16> to vector<32x96xbf16>
    %173 = arith.truncf %170 : vector<96x432xf32> to vector<96x432xbf16>
    %cst_171 = arith.constant dense<0.000000e+00> : vector<32x432xf32>
    %174 = tpu.matmul %172, %173, %cst_171 {dimension_numbers = #tpu.dot_dimension_numbers<[1], [0], [0], [1], [0, 0, 1, 1], [], []>} : vector<32x96xbf16>, vector<96x432xbf16>, vector<32x432xf32> -> vector<32x432xf32>
    %175 = arith.addf %166, %174 : vector<32x432xf32>
    %c0_172 = arith.constant 0 : index
    %c127_173 = arith.constant 127 : index
    %176 = vector.load %arg11[%c0_172, %c127_173] : memref<32x688xf32, #tpu.memory_space<vmem>>, vector<32x432xf32>
    %c0_174 = arith.constant 0 : index
    %c128_175 = arith.constant 128 : index
    %177 = vector.load %arg11[%c0_174, %c128_175] : memref<32x688xf32, #tpu.memory_space<vmem>>, vector<32x432xf32>
    %c0_176 = arith.constant 0 : index
    %c129_177 = arith.constant 129 : index
    %178 = vector.load %arg11[%c0_176, %c129_177] : memref<32x688xf32, #tpu.memory_space<vmem>>, vector<32x432xf32>
    %179 = tpu.concatenate %176, %177, %178 in 0 : vector<32x432xf32>, vector<32x432xf32>, vector<32x432xf32> -> vector<96x432xf32>
    %c3_178 = arith.constant 3 : index
    %c1_179 = arith.constant 1 : index
    %c0_180 = arith.constant 0 : index
    %c0_181 = arith.constant 0 : index
    %180 = vector.load %arg5[%c3_178, %c1_179, %c0_180, %c0_181] : memref<4x3x32x96xbf16, #tpu.memory_space<vmem>>, vector<1x1x32x96xbf16>
    %181 = vector.shape_cast %180 : vector<1x1x32x96xbf16> to vector<32x96xbf16>
    %182 = arith.truncf %179 : vector<96x432xf32> to vector<96x432xbf16>
    %cst_182 = arith.constant dense<0.000000e+00> : vector<32x432xf32>
    %183 = tpu.matmul %181, %182, %cst_182 {dimension_numbers = #tpu.dot_dimension_numbers<[1], [0], [0], [1], [0, 0, 1, 1], [], []>} : vector<32x96xbf16>, vector<96x432xbf16>, vector<32x432xf32> -> vector<32x432xf32>
    %184 = arith.addf %175, %183 : vector<32x432xf32>
    %c0_183 = arith.constant 0 : index
    %c151_184 = arith.constant 151 : index
    %185 = vector.load %arg11[%c0_183, %c151_184] : memref<32x688xf32, #tpu.memory_space<vmem>>, vector<32x432xf32>
    %c0_185 = arith.constant 0 : index
    %c152_186 = arith.constant 152 : index
    %186 = vector.load %arg11[%c0_185, %c152_186] : memref<32x688xf32, #tpu.memory_space<vmem>>, vector<32x432xf32>
    %c0_187 = arith.constant 0 : index
    %c153_188 = arith.constant 153 : index
    %187 = vector.load %arg11[%c0_187, %c153_188] : memref<32x688xf32, #tpu.memory_space<vmem>>, vector<32x432xf32>
    %188 = tpu.concatenate %185, %186, %187 in 0 : vector<32x432xf32>, vector<32x432xf32>, vector<32x432xf32> -> vector<96x432xf32>
    %c3_189 = arith.constant 3 : index
    %c2_190 = arith.constant 2 : index
    %c0_191 = arith.constant 0 : index
    %c0_192 = arith.constant 0 : index
    %189 = vector.load %arg5[%c3_189, %c2_190, %c0_191, %c0_192] : memref<4x3x32x96xbf16, #tpu.memory_space<vmem>>, vector<1x1x32x96xbf16>
    %190 = vector.shape_cast %189 : vector<1x1x32x96xbf16> to vector<32x96xbf16>
    %191 = arith.truncf %188 : vector<96x432xf32> to vector<96x432xbf16>
    %cst_193 = arith.constant dense<0.000000e+00> : vector<32x432xf32>
    %192 = tpu.matmul %190, %191, %cst_193 {dimension_numbers = #tpu.dot_dimension_numbers<[1], [0], [0], [1], [0, 0, 1, 1], [], []>} : vector<32x96xbf16>, vector<96x432xbf16>, vector<32x432xf32> -> vector<32x432xf32>
    %193 = arith.addf %184, %192 : vector<32x432xf32>
    %c0_194 = arith.constant 0 : index
    %c128_195 = arith.constant 128 : index
    %194 = vector.load %arg10[%c0_194, %c128_195] : memref<32x688xf32, #tpu.memory_space<vmem>>, vector<32x432xf32>
    %cst_196 = arith.constant 1.000000e-01 : f32
    %195 = vector.broadcast %cst_196 : f32 to vector<32x432xf32>
    %196 = arith.mulf %195, %193 : vector<32x432xf32>
    %197 = arith.addf %194, %196 : vector<32x432xf32>
    %cst_197 = arith.constant 0.000000e+00 : f32
    %198 = vector.shape_cast %2 : vector<1x432xi1> to vector<1x432xi1>
    %199 = vector.broadcast %198 : vector<1x432xi1> to vector<32x432xi1>
    %200 = vector.broadcast %cst_197 : f32 to vector<32x432xf32>
    %201 = arith.select %199, %197, %200 : vector<32x432xi1>, vector<32x432xf32>
    %c0_198 = arith.constant 0 : index
    %c128_199 = arith.constant 128 : index
    %202 = vector.load %arg10[%c0_198, %c128_199] : memref<32x688xf32, #tpu.memory_space<vmem>>, vector<32x432xf32>
    tpu.vector_store %arg10[%c0_198, %c128_199], %201 {strides = array<i32>} : memref<32x688xf32, #tpu.memory_space<vmem>>, vector<32x432xf32>,
    %c0_200 = arith.constant 0 : index
    %c0_201 = arith.constant 0 : index
    %203 = vector.load %arg8[%c0_200, %c0_201] : memref<4x1xf32, #tpu.memory_space<vmem>>, vector<4x1xf32>
    %204 = vector.shape_cast %203 : vector<4x1xf32> to vector<4x1xf32>
    %205 = vector.broadcast %204 : vector<4x1xf32> to vector<4x432xf32>
    %c0_202 = arith.constant 0 : index
    %c103_203 = arith.constant 103 : index
    %206 = vector.load %arg10[%c0_202, %c103_203] : memref<32x688xf32, #tpu.memory_space<vmem>>, vector<32x432xf32>
    %c0_204 = arith.constant 0 : index
    %c104_205 = arith.constant 104 : index
    %207 = vector.load %arg10[%c0_204, %c104_205] : memref<32x688xf32, #tpu.memory_space<vmem>>, vector<32x432xf32>
    %c0_206 = arith.constant 0 : index
    %c105_207 = arith.constant 105 : index
    %208 = vector.load %arg10[%c0_206, %c105_207] : memref<32x688xf32, #tpu.memory_space<vmem>>, vector<32x432xf32>
    %209 = tpu.concatenate %206, %207, %208 in 0 : vector<32x432xf32>, vector<32x432xf32>, vector<32x432xf32> -> vector<96x432xf32>
    %c0_208 = arith.constant 0 : index
    %c0_209 = arith.constant 0 : index
    %c0_210 = arith.constant 0 : index
    %210 = vector.load %arg7[%c0_208, %c0_209, %c0_210] : memref<3x4x96xbf16, #tpu.memory_space<vmem>>, vector<1x4x96xbf16>
    %211 = vector.shape_cast %210 : vector<1x4x96xbf16> to vector<4x96xbf16>
    %212 = arith.truncf %209 : vector<96x432xf32> to vector<96x432xbf16>
    %cst_211 = arith.constant dense<0.000000e+00> : vector<4x432xf32>
    %213 = tpu.matmul %211, %212, %cst_211 {dimension_numbers = #tpu.dot_dimension_numbers<[1], [0], [0], [1], [0, 0, 1, 1], [], []>} : vector<4x96xbf16>, vector<96x432xbf16>, vector<4x432xf32> -> vector<4x432xf32>
    %214 = arith.addf %205, %213 : vector<4x432xf32>
    %c0_212 = arith.constant 0 : index
    %c127_213 = arith.constant 127 : index
    %215 = vector.load %arg10[%c0_212, %c127_213] : memref<32x688xf32, #tpu.memory_space<vmem>>, vector<32x432xf32>
    %c0_214 = arith.constant 0 : index
    %c128_215 = arith.constant 128 : index
    %216 = vector.load %arg10[%c0_214, %c128_215] : memref<32x688xf32, #tpu.memory_space<vmem>>, vector<32x432xf32>
    %c0_216 = arith.constant 0 : index
    %c129_217 = arith.constant 129 : index
    %217 = vector.load %arg10[%c0_216, %c129_217] : memref<32x688xf32, #tpu.memory_space<vmem>>, vector<32x432xf32>
    %218 = tpu.concatenate %215, %216, %217 in 0 : vector<32x432xf32>, vector<32x432xf32>, vector<32x432xf32> -> vector<96x432xf32>
    %c1_218 = arith.constant 1 : index
    %c0_219 = arith.constant 0 : index
    %c0_220 = arith.constant 0 : index
    %219 = vector.load %arg7[%c1_218, %c0_219, %c0_220] : memref<3x4x96xbf16, #tpu.memory_space<vmem>>, vector<1x4x96xbf16>
    %220 = vector.shape_cast %219 : vector<1x4x96xbf16> to vector<4x96xbf16>
    %221 = arith.truncf %218 : vector<96x432xf32> to vector<96x432xbf16>
    %cst_221 = arith.constant dense<0.000000e+00> : vector<4x432xf32>
    %222 = tpu.matmul %220, %221, %cst_221 {dimension_numbers = #tpu.dot_dimension_numbers<[1], [0], [0], [1], [0, 0, 1, 1], [], []>} : vector<4x96xbf16>, vector<96x432xbf16>, vector<4x432xf32> -> vector<4x432xf32>
    %223 = arith.addf %214, %222 : vector<4x432xf32>
    %c0_222 = arith.constant 0 : index
    %c151_223 = arith.constant 151 : index
    %224 = vector.load %arg10[%c0_222, %c151_223] : memref<32x688xf32, #tpu.memory_space<vmem>>, vector<32x432xf32>
    %c0_224 = arith.constant 0 : index
    %c152_225 = arith.constant 152 : index
    %225 = vector.load %arg10[%c0_224, %c152_225] : memref<32x688xf32, #tpu.memory_space<vmem>>, vector<32x432xf32>
    %c0_226 = arith.constant 0 : index
    %c153_227 = arith.constant 153 : index
    %226 = vector.load %arg10[%c0_226, %c153_227] : memref<32x688xf32, #tpu.memory_space<vmem>>, vector<32x432xf32>
    %227 = tpu.concatenate %224, %225, %226 in 0 : vector<32x432xf32>, vector<32x432xf32>, vector<32x432xf32> -> vector<96x432xf32>
    %c2_228 = arith.constant 2 : index
    %c0_229 = arith.constant 0 : index
    %c0_230 = arith.constant 0 : index
    %228 = vector.load %arg7[%c2_228, %c0_229, %c0_230] : memref<3x4x96xbf16, #tpu.memory_space<vmem>>, vector<1x4x96xbf16>
    %229 = vector.shape_cast %228 : vector<1x4x96xbf16> to vector<4x96xbf16>
    %230 = arith.truncf %227 : vector<96x432xf32> to vector<96x432xbf16>
    %cst_231 = arith.constant dense<0.000000e+00> : vector<4x432xf32>
    %231 = tpu.matmul %229, %230, %cst_231 {dimension_numbers = #tpu.dot_dimension_numbers<[1], [0], [0], [1], [0, 0, 1, 1], [], []>} : vector<4x96xbf16>, vector<96x432xbf16>, vector<4x432xf32> -> vector<4x432xf32>
    %232 = arith.addf %223, %231 : vector<4x432xf32>
    %c0_232 = arith.constant 0 : index
    %c0_233 = arith.constant 0 : index
    %c0_234 = arith.constant 0 : index
    %233 = vector.load %arg2[%c0_232, %c0_233, %c0_234] : memref<1x8x432xf32, #tpu.memory_space<vmem>>, vector<1x4x432xf32>
    %234 = vector.shape_cast %233 : vector<1x4x432xf32> to vector<4x432xf32>
    %235 = arith.addf %234, %232 : vector<4x432xf32>
    %cst_235 = arith.constant 0.000000e+00 : f32
    %236 = vector.shape_cast %2 : vector<1x432xi1> to vector<1x432xi1>
    %237 = vector.broadcast %236 : vector<1x432xi1> to vector<4x432xi1>
    %238 = vector.broadcast %cst_235 : f32 to vector<4x432xf32>
    %239 = arith.select %237, %235, %238 : vector<4x432xi1>, vector<4x432xf32>
    %c0_236 = arith.constant 0 : index
    %c0_237 = arith.constant 0 : index
    %c0_238 = arith.constant 0 : index
    %240 = vector.load %arg9[%c0_236, %c0_237, %c0_238] : memref<1x4x432xf32, #tpu.memory_space<vmem>>, vector<1x4x432xf32>
    %241 = vector.shape_cast %240 : vector<1x4x432xf32> to vector<4x432xf32>
    %242 = vector.shape_cast %239 : vector<4x432xf32> to vector<1x4x432xf32>
    tpu.vector_store %arg9[%c0_236, %c0_237, %c0_238], %242 {strides = array<i32>} : memref<1x4x432xf32, #tpu.memory_space<vmem>>, vector<1x4x432xf32>,
    return
  }
  func.func @transform_0(%arg0: i32) -> (i32, i32) {
    %c0_i32 = arith.constant 0 : i32
    %c0_i32_0 = arith.constant 0 : i32
    %c0_i32_1 = arith.constant 0 : i32
    return %c0_i32, %c0_i32_0 : i32, i32
  }
  func.func @transform_1(%arg0: i32) -> (i32, i32, i32) {
    %c0_i32 = arith.constant 0 : i32
    %c0_i32_0 = arith.constant 0 : i32
    %c0_i32_1 = arith.constant 0 : i32
    return %arg0, %c0_i32, %c0_i32_0 : i32, i32, i32
  }
  func.func @transform_2(%arg0: i32) -> (i32, i32, i32) {
    %c0_i32 = arith.constant 0 : i32
    %c0_i32_0 = arith.constant 0 : i32
    %c0_i32_1 = arith.constant 0 : i32
    %c0_i32_2 = arith.constant 0 : i32
    return %c0_i32, %c0_i32_0, %c0_i32_1 : i32, i32, i32
  }
  func.func @transform_3(%arg0: i32) -> (i32, i32) {
    %c0_i32 = arith.constant 0 : i32
    %c0_i32_0 = arith.constant 0 : i32
    %c0_i32_1 = arith.constant 0 : i32
    return %c0_i32, %c0_i32_0 : i32, i32
  }
  func.func @transform_4(%arg0: i32) -> (i32, i32, i32, i32) {
    %c0_i32 = arith.constant 0 : i32
    %c0_i32_0 = arith.constant 0 : i32
    %c0_i32_1 = arith.constant 0 : i32
    %c0_i32_2 = arith.constant 0 : i32
    %c0_i32_3 = arith.constant 0 : i32
    return %c0_i32, %c0_i32_0, %c0_i32_1, %c0_i32_2 : i32, i32, i32, i32
  }
  func.func @transform_5(%arg0: i32) -> (i32, i32, i32) {
    %c0_i32 = arith.constant 0 : i32
    %c0_i32_0 = arith.constant 0 : i32
    %c0_i32_1 = arith.constant 0 : i32
    %c0_i32_2 = arith.constant 0 : i32
    return %c0_i32, %c0_i32_0, %c0_i32_1 : i32, i32, i32
  }
  func.func @transform_6(%arg0: i32) -> (i32, i32, i32) {
    %c0_i32 = arith.constant 0 : i32
    %c0_i32_0 = arith.constant 0 : i32
    %c0_i32_1 = arith.constant 0 : i32
    %c0_i32_2 = arith.constant 0 : i32
    return %c0_i32, %c0_i32_0, %c0_i32_1 : i32, i32, i32
  }
  func.func @transform_7(%arg0: i32) -> (i32, i32) {
    %c0_i32 = arith.constant 0 : i32
    %c0_i32_0 = arith.constant 0 : i32
    %c0_i32_1 = arith.constant 0 : i32
    return %c0_i32, %c0_i32_0 : i32, i32
  }
  func.func @transform_8(%arg0: i32) -> (i32, i32, i32) {
    %c0_i32 = arith.constant 0 : i32
    %c0_i32_0 = arith.constant 0 : i32
    %c0_i32_1 = arith.constant 0 : i32
    return %arg0, %c0_i32, %c0_i32_0 : i32, i32, i32
  }
}

</mosaic_0001>

<llo_original>
// kernel: edsr_forward.1
$region0: #{edsr_forward.1}
  #allocation0 [shape = 'u32[]', space=smem, size = 0x4, offset = 0x4, fixed_abs, tag = 'smem constant byte address 0x4 - core index']
  #allocation1 [shape = 'u32[144,128]{1,0:T(1,128)}', space=vmem, size = 0x12000, scoped, tag = 'internal scratch']
  #allocation2 [shape = 'f32[32,688]{1,0:T(8,128)}', space=vmem, size = 0x18000, scoped, tag = 'scratch operand']
  #allocation3 [shape = 'f32[32,688]{1,0:T(8,128)}', space=vmem, size = 0x18000, scoped, tag = 'scratch operand']
  %s0 = inlined_call_operand.vmem [shape: f32[1,432], index: 0, kind: input, shape index: {}]
  %s1 = inlined_call_operand.vmem [shape: f32[2,8,432], index: 1, kind: input, shape index: {}]
  %s2 = inlined_call_operand.vmem [shape: bf16[3,32,24], index: 2, kind: input, shape index: {}]
  %s3 = inlined_call_operand.vmem [shape: f32[32,1], index: 3, kind: input, shape index: {}]
  %s4 = inlined_call_operand.vmem [shape: bf16[4,3,32,96], index: 4, kind: input, shape index: {}]
  %s5 = inlined_call_operand.vmem [shape: f32[4,32,1], index: 5, kind: input, shape index: {}]
  %s6 = inlined_call_operand.vmem [shape: bf16[3,4,96], index: 6, kind: input, shape index: {}]
  %s7 = inlined_call_operand.vmem [shape: f32[4,1], index: 7, kind: input, shape index: {}]
  %s8 = inlined_call_operand.vmem [shape: f32[2,4,432], index: 8, kind: output, shape index: {}]
  %s9 = sld [smem:[#allocation0]]
  $region65: #{edsr_forward.1} parent=0
    _
  %s11 = ssub.s32 1, %s9
  %s12 = scalar_select 0, %s11, %s9
  loop: start=0, step=1, limit=4
  $region2: #{edsr_forward.1} parent=0 // loop_pre_header
    _
  $region3: #{edsr_forward.1} parent=0 // loop_header
    %s14 = sphi 0, %s18
    %p15 = scmp.ge.s32.totalorder %s14, 4
    %s22 = sphi 0, %s22
    %s24 = sphi 0, %s22
    %s25 = sphi 0, %s24
    %s39 = sphi 0, %s25
    %s45 = sphi 0, %s47
    %s48 = sphi 0, %s45
    %s49 = sphi 0, %s48
    %s65 = sphi 0, %s49
    %s69 = sphi 0, %s69
    %s71 = sphi 0, %s69
    %s72 = sphi 0, %s71
    %s86 = sphi 0, %s72
    %s90 = sphi 0, %s90
    %s92 = sphi 0, %s90
    %s93 = sphi 0, %s92
    %s107 = sphi 0, %s93
    %s111 = sphi 0, %s111
    %s113 = sphi 0, %s111
    %s114 = sphi 0, %s113
    %s128 = sphi 0, %s114
    %s132 = sphi 0, %s132
    %s134 = sphi 0, %s132
    %s135 = sphi 0, %s134
    %s149 = sphi 0, %s135
    %s153 = sphi 0, %s153
    %s155 = sphi 0, %s153
    %s156 = sphi 0, %s155
    %s170 = sphi 0, %s156
    %s174 = sphi 0, %s174
    %s176 = sphi 0, %s174
    %s177 = sphi 0, %s176
    %s191 = sphi 0, %s177
    %s197 = sphi 0, %s199
    %s200 = sphi 0, %s197
    %s201 = sphi 0, %s200
    %s217 = sphi 0, %s201
  $region4: #{edsr_forward.1} parent=0 // loop_header_branch
    %17 = sbr.rel (%p15) target = $region8
  $region5: #{edsr_forward.1} parent=0 // loop_body
    %s19 = ssub.s32 %s14, 1
    %s20 = ssub.s32 %s14, 2
    %s21 = sadd.s32 %s14, 1
    %s23 = sadd.s32 %s22, 1
    %p26 = scmp.eq.s32.totalorder %s14, 1
    %p27 = scmp.ne.s32.totalorder %s22, %s24
    %p28 = scmp.eq.s32.totalorder %s14, 0
    %p29 = por %p27, %p28
    %p30 = scmp.ne.s32.totalorder %s22, %s24
    %p31 = scmp.eq.s32.totalorder %s19, 1
    %p32 = por %p30, %p31
    %p33 = scmp.ne.s32.totalorder %s24, %s25
    %p34 = scmp.eq.s32.totalorder %s19, 0
    %p35 = por %p33, %p34
    %p36 = scmp.ne.s32.totalorder %s24, %s25
    %p37 = scmp.eq.s32.totalorder %s20, 1
    %p38 = por %p36, %p37
    %p40 = scmp.ne.s32.totalorder %s25, %s39
    %p41 = scmp.eq.s32.totalorder %s20, 0
    %p42 = por %p40, %p41
    %s43 = ssub.s32 %s14, %s21
    %p44 = scmp.eq.s32.totalorder %s43, 0
    %s46 = sadd.s32 %s45, 1
    %s47 = scalar_select %p44, %s45, %s46
    %p50 = pneg %p44
    %p51 = scmp.eq.s32.totalorder %s14, 1
    %p52 = por %p50, %p51
    %p53 = scmp.ne.s32.totalorder %s45, %s48
    %p54 = scmp.eq.s32.totalorder %s14, 0
    %p55 = por %p53, %p54
    %p56 = scmp.ne.s32.totalorder %s45, %s48
    %p57 = scmp.eq.s32.totalorder %s19, 1
    %p58 = por %p56, %p57
    %p59 = scmp.ne.s32.totalorder %s48, %s49
    %p60 = scmp.eq.s32.totalorder %s19, 0
    %p61 = por %p59, %p60
    %p62 = scmp.ne.s32.totalorder %s48, %s49
    %p63 = scmp.eq.s32.totalorder %s20, 1
    %p64 = por %p62, %p63
    %p66 = scmp.ne.s32.totalorder %s49, %s65
    %p67 = scmp.eq.s32.totalorder %s20, 0
    %p68 = por %p66, %p67
    %s70 = sadd.s32 %s69, 1
    %p73 = scmp.eq.s32.totalorder %s14, 1
    %p74 = scmp.ne.s32.totalorder %s69, %s71
    %p75 = scmp.eq.s32.totalorder %s14, 0
    %p76 = por %p74, %p75
    %p77 = scmp.ne.s32.totalorder %s69, %s71
    %p78 = scmp.eq.s32.totalorder %s19, 1
    %p79 = por %p77, %p78
    %p80 = scmp.ne.s32.totalorder %s71, %s72
    %p81 = scmp.eq.s32.totalorder %s19, 0
    %p82 = por %p80, %p81
    %p83 = scmp.ne.s32.totalorder %s71, %s72
    %p84 = scmp.eq.s32.totalorder %s20, 1
    %p85 = por %p83, %p84
    %p87 = scmp.ne.s32.totalorder %s72, %s86
    %p88 = scmp.eq.s32.totalorder %s20, 0
    %p89 = por %p87, %p88
    %s91 = sadd.s32 %s90, 1
    %p94 = scmp.eq.s32.totalorder %s14, 1
    %p95 = scmp.ne.s32.totalorder %s90, %s92
    %p96 = scmp.eq.s32.totalorder %s14, 0
    %p97 = por %p95, %p96
    %p98 = scmp.ne.s32.totalorder %s90, %s92
    %p99 = scmp.eq.s32.totalorder %s19, 1
    %p100 = por %p98, %p99
    %p101 = scmp.ne.s32.totalorder %s92, %s93
    %p102 = scmp.eq.s32.totalorder %s19, 0
    %p103 = por %p101, %p102
    %p104 = scmp.ne.s32.totalorder %s92, %s93
    %p105 = scmp.eq.s32.totalorder %s20, 1
    %p106 = por %p104, %p105
    %p108 = scmp.ne.s32.totalorder %s93, %s107
    %p109 = scmp.eq.s32.totalorder %s20, 0
    %p110 = por %p108, %p109
    %s112 = sadd.s32 %s111, 1
    %p115 = scmp.eq.s32.totalorder %s14, 1
    %p116 = scmp.ne.s32.totalorder %s111, %s113
    %p117 = scmp.eq.s32.totalorder %s14, 0
    %p118 = por %p116, %p117
    %p119 = scmp.ne.s32.totalorder %s111, %s113
    %p120 = scmp.eq.s32.totalorder %s19, 1
    %p121 = por %p119, %p120
    %p122 = scmp.ne.s32.totalorder %s113, %s114
    %p123 = scmp.eq.s32.totalorder %s19, 0
    %p124 = por %p122, %p123
    %p125 = scmp.ne.s32.totalorder %s113, %s114
    %p126 = scmp.eq.s32.totalorder %s20, 1
    %p127 = por %p125, %p126
    %p129 = scmp.ne.s32.totalorder %s114, %s128
    %p130 = scmp.eq.s32.totalorder %s20, 0
    %p131 = por %p129, %p130
    %s133 = sadd.s32 %s132, 1
    %p136 = scmp.eq.s32.totalorder %s14, 1
    %p137 = scmp.ne.s32.totalorder %s132, %s134
    %p138 = scmp.eq.s32.totalorder %s14, 0
    %p139 = por %p137, %p138
    %p140 = scmp.ne.s32.totalorder %s132, %s134
    %p141 = scmp.eq.s32.totalorder %s19, 1
    %p142 = por %p140, %p141
    %p143 = scmp.ne.s32.totalorder %s134, %s135
    %p144 = scmp.eq.s32.totalorder %s19, 0
    %p145 = por %p143, %p144
    %p146 = scmp.ne.s32.totalorder %s134, %s135
    %p147 = scmp.eq.s32.totalorder %s20, 1
    %p148 = por %p146, %p147
    %p150 = scmp.ne.s32.totalorder %s135, %s149
    %p151 = scmp.eq.s32.totalorder %s20, 0
    %p152 = por %p150, %p151
    %s154 = sadd.s32 %s153, 1
    %p157 = scmp.eq.s32.totalorder %s14, 1
    %p158 = scmp.ne.s32.totalorder %s153, %s155
    %p159 = scmp.eq.s32.totalorder %s14, 0
    %p160 = por %p158, %p159
    %p161 = scmp.ne.s32.totalorder %s153, %s155
    %p162 = scmp.eq.s32.totalorder %s19, 1
    %p163 = por %p161, %p162
    %p164 = scmp.ne.s32.totalorder %s155, %s156
    %p165 = scmp.eq.s32.totalorder %s19, 0
    %p166 = por %p164, %p165
    %p167 = scmp.ne.s32.totalorder %s155, %s156
    %p168 = scmp.eq.s32.totalorder %s20, 1
    %p169 = por %p167, %p168
    %p171 = scmp.ne.s32.totalorder %s156, %s170
    %p172 = scmp.eq.s32.totalorder %s20, 0
    %p173 = por %p171, %p172
    %s175 = sadd.s32 %s174, 1
    %p178 = scmp.eq.s32.totalorder %s14, 1
    %p179 = scmp.ne.s32.totalorder %s174, %s176
    %p180 = scmp.eq.s32.totalorder %s14, 0
    %p181 = por %p179, %p180
    %p182 = scmp.ne.s32.totalorder %s174, %s176
    %p183 = scmp.eq.s32.totalorder %s19, 1
    %p184 = por %p182, %p183
    %p185 = scmp.ne.s32.totalorder %s176, %s177
    %p186 = scmp.eq.s32.totalorder %s19, 0
    %p187 = por %p185, %p186
    %p188 = scmp.ne.s32.totalorder %s176, %s177
    %p189 = scmp.eq.s32.totalorder %s20, 1
    %p190 = por %p188, %p189
    %p192 = scmp.ne.s32.totalorder %s177, %s191
    %p193 = scmp.eq.s32.totalorder %s20, 0
    %p194 = por %p192, %p193
    %s195 = ssub.s32 %s14, %s21
    %p196 = scmp.eq.s32.totalorder %s195, 0
    %s198 = sadd.s32 %s197, 1
    %s199 = scalar_select %p196, %s197, %s198
    %p202 = pneg %p196
    %p203 = scmp.eq.s32.totalorder %s14, 1
    %p204 = por %p202, %p203
    %p205 = scmp.ne.s32.totalorder %s197, %s200
    %p206 = scmp.eq.s32.totalorder %s14, 0
    %p207 = por %p205, %p206
    %p208 = scmp.ne.s32.totalorder %s197, %s200
    %p209 = scmp.eq.s32.totalorder %s19, 1
    %p210 = por %p208, %p209
    %p211 = scmp.ne.s32.totalorder %s200, %s201
    %p212 = scmp.eq.s32.totalorder %s19, 0
    %p213 = por %p211, %p212
    %p214 = scmp.ne.s32.totalorder %s200, %s201
    %p215 = scmp.eq.s32.totalorder %s20, 1
    %p216 = por %p214, %p215
    %p218 = scmp.ne.s32.totalorder %s201, %s217
    %p219 = scmp.eq.s32.totalorder %s20, 0
    %p220 = por %p218, %p219
    %p221 = scmp.le.s32.totalorder 1, %s14
    %p222 = scmp.lt.s32.totalorder %s14, 3
    %p223 = pnand %p221, %p222
    %p224 = pneg %p223
    // Predicated region
    $region9: #{edsr_forward.1} parent=5 // pred_check
      _
    $region10: #{edsr_forward.1} parent=5 // pred_check_branch
      %226 = sbr.rel (%p223) target = $region12
    $region11: #{edsr_forward.1} parent=5 // pred_region
      %s227 = ssub.s32 %s14, 1
      // Predicated region
      $region13: #{edsr_forward.1} parent=11 // pred_check
        %p228 = pneg %p35
      $region14: #{edsr_forward.1} parent=11 // pred_check_branch
        %230 = sbr.rel (%p228) target = $region16
      $region15: #{edsr_forward.1} parent=11 // pred_region
        _
      $region16: #{edsr_forward.1} parent=11 // pred_fallthru
        _
      // Predicated region
      $region17: #{edsr_forward.1} parent=11 // pred_check
        %p231 = pneg %p82
      $region18: #{edsr_forward.1} parent=11 // pred_check_branch
        %233 = sbr.rel (%p231) target = $region20
      $region19: #{edsr_forward.1} parent=11 // pred_region
        _
      $region20: #{edsr_forward.1} parent=11 // pred_fallthru
        _
      // Predicated region
      $region21: #{edsr_forward.1} parent=11 // pred_check
        %p234 = pneg %p103
      $region22: #{edsr_forward.1} parent=11 // pred_check_branch
        %236 = sbr.rel (%p234) target = $region24
      $region23: #{edsr_forward.1} parent=11 // pred_region
        _
      $region24: #{edsr_forward.1} parent=11 // pred_fallthru
        _
      // Predicated region
      $region25: #{edsr_forward.1} parent=11 // pred_check
        %p237 = pneg %p124
      $region26: #{edsr_forward.1} parent=11 // pred_check_branch
        %239 = sbr.rel (%p237) target = $region28
      $region27: #{edsr_forward.1} parent=11 // pred_region
        _
      $region28: #{edsr_forward.1} parent=11 // pred_fallthru
        _
      // Predicated region
      $region29: #{edsr_forward.1} parent=11 // pred_check
        %p240 = pneg %p145
      $region30: #{edsr_forward.1} parent=11 // pred_check_branch
        %242 = sbr.rel (%p240) target = $region32
      $region31: #{edsr_forward.1} parent=11 // pred_region
        _
      $region32: #{edsr_forward.1} parent=11 // pred_fallthru
        _
      // Predicated region
      $region33: #{edsr_forward.1} parent=11 // pred_check
        %p243 = pneg %p166
      $region34: #{edsr_forward.1} parent=11 // pred_check_branch
        %245 = sbr.rel (%p243) target = $region36
      $region35: #{edsr_forward.1} parent=11 // pred_region
        _
      $region36: #{edsr_forward.1} parent=11 // pred_fallthru
        _
      // Predicated region
      $region37: #{edsr_forward.1} parent=11 // pred_check
        %p246 = pneg %p187
      $region38: #{edsr_forward.1} parent=11 // pred_check_branch
        %248 = sbr.rel (%p246) target = $region40
      $region39: #{edsr_forward.1} parent=11 // pred_region
        _
      $region40: #{edsr_forward.1} parent=11 // pred_fallthru
        _
    $region12: #{edsr_forward.1} parent=5 // pred_fallthru
      _
    %p249 = scmp.lt.s32.totalorder %s14, 2
    // Predicated region
    $region41: #{edsr_forward.1} parent=5 // pred_check
      %p250 = pneg %p249
    $region42: #{edsr_forward.1} parent=5 // pred_check_branch
      %252 = sbr.rel (%p250) target = $region44
    $region43: #{edsr_forward.1} parent=5 // pred_region
      // Predicated region
      $region45: #{edsr_forward.1} parent=43 // pred_check
        %p253 = pneg %p55
      $region46: #{edsr_forward.1} parent=43 // pred_check_branch
        %255 = sbr.rel (%p253) target = $region48
      $region47: #{edsr_forward.1} parent=43 // pred_region
        %p256 = scmp.lt.s32.totalorder %s14, 1
        %s257 = scalar_select %p256, %s14, 1
        %s258 = smul.addr %s257, 4
        %s259 = smul.addr %s258, 8
        %s260 = scalar_lea.vmem %s1, %s259
      $region48: #{edsr_forward.1} parent=43 // pred_fallthru
        _
    $region44: #{edsr_forward.1} parent=5 // pred_fallthru
      _
    %p261 = scmp.le.s32.totalorder 1, %s14
    %p262 = scmp.lt.s32.totalorder %s14, 3
    %p263 = pnand %p261, %p262
    %p264 = pneg %p263
    // Predicated region
    $region49: #{edsr_forward.1} parent=5 // pred_check
      _
    $region50: #{edsr_forward.1} parent=5 // pred_check_branch
      %266 = sbr.rel (%p263) target = $region52
    $region51: #{edsr_forward.1} parent=5 // pred_region
      %s267 = ssub.s32 %s14, 1
      %p268 = pneg %p35
      %p269 = pneg %p32
      %p270 = scmp.lt.s32.totalorder %s19, 1
      %s271 = scalar_select %p270, %s19, 1
      %s272 = smul.addr %s271, 4
      %s273 = smul.addr %s272, 8
      %s274 = scalar_lea.vmem %s1, %s273
      %p275 = pneg %p61
      %p276 = pneg %p58
      %p277 = pneg %p82
      %p278 = pneg %p79
      %p279 = pneg %p103
      %p280 = pneg %p100
      %p281 = pneg %p124
      %p282 = pneg %p121
      %p283 = pneg %p145
      %p284 = pneg %p142
      %p285 = pneg %p166
      %p286 = pneg %p163
      %p287 = pneg %p187
      %p288 = pneg %p184
      %p289 = pneg %p213
      %p290 = pneg %p210
      %p291 = scmp.lt.s32.totalorder %s19, 1
      %s292 = scalar_select %p291, %s19, 1
      %s293 = smul.addr %s292, 4
      %s294 = smul.addr %s293, 4
      %s295 = scalar_lea.vmem %s8, %s294
      %p296 = scmp.lt.s32.totalorder %s19, 1
      %s297 = scalar_select %p296, %s19, 1
      %s298 = smul.addr %s297, 4
      %s299 = smul.addr %s298, 8
      %s300 = scalar_lea.vmem %s1, %s299
      %p301 = scmp.lt.s32.totalorder %s19, 1
      %s302 = scalar_select %p301, %s19, 1
      %s303 = smul.addr %s302, 4
      %s304 = smul.addr %s303, 4
      %s305 = scalar_lea.vmem %s8, %s304
      %v307 = vld [vmem:[%s0] sm:$0xf]
      %vm308 = vcmp.gt.f32.partialorder %v307, 0.5
      %309 = vst [vmem:[#allocation2] sm:$0xff] 0.0
      %310 = vst [vmem:[#allocation2 + $0x8] sm:$0xff] 0.0
      %311 = vst [vmem:[#allocation2 + $0x10] sm:$0xff] 0.0
      %312 = vst [vmem:[#allocation2 + $0x18] sm:$0xff] 0.0
      %313 = vst [vmem:[#allocation2 + $0x20] sm:$0xff] 0.0
      %vm314 = vcmask 392192
      %315 = vst.msk [vmem:[#allocation2 + $0x28] sm:$0xff] %vm314, 0.0
      %316 = vst [vmem:[#allocation2 + $0x30] sm:$0xff] 0.0
      %317 = vst [vmem:[#allocation2 + $0x38] sm:$0xff] 0.0
      %318 = vst [vmem:[#allocation2 + $0x40] sm:$0xff] 0.0
      %319 = vst [vmem:[#allocation2 + $0x48] sm:$0xff] 0.0
      %320 = vst [vmem:[#allocation2 + $0x50] sm:$0xff] 0.0
      %321 = vst.msk [vmem:[#allocation2 + $0x58] sm:$0xff] %vm314, 0.0
      %322 = vst [vmem:[#allocation2 + $0x60] sm:$0xff] 0.0
      %323 = vst [vmem:[#allocation2 + $0x68] sm:$0xff] 0.0
      %324 = vst [vmem:[#allocation2 + $0x70] sm:$0xff] 0.0
      %325 = vst [vmem:[#allocation2 + $0x78] sm:$0xff] 0.0
      %326 = vst [vmem:[#allocation2 + $0x80] sm:$0xff] 0.0
      %327 = vst.msk [vmem:[#allocation2 + $0x88] sm:$0xff] %vm314, 0.0
      %328 = vst [vmem:[#allocation2 + $0x90] sm:$0xff] 0.0
      %329 = vst [vmem:[#allocation2 + $0x98] sm:$0xff] 0.0
      %330 = vst [vmem:[#allocation2 + $0xa0] sm:$0xff] 0.0
      %331 = vst [vmem:[#allocation2 + $0xa8] sm:$0xff] 0.0
      %332 = vst [vmem:[#allocation2 + $0xb0] sm:$0xff] 0.0
      %333 = vst.msk [vmem:[#allocation2 + $0xb8] sm:$0xff] %vm314, 0.0
      %334 = vst [vmem:[#allocation3] sm:$0xff] 0.0
      %335 = vst [vmem:[#allocation3 + $0x8] sm:$0xff] 0.0
      %336 = vst [vmem:[#allocation3 + $0x10] sm:$0xff] 0.0
      %337 = vst [vmem:[#allocation3 + $0x18] sm:$0xff] 0.0
      %338 = vst [vmem:[#allocation3 + $0x20] sm:$0xff] 0.0
      %339 = vst.msk [vmem:[#allocation3 + $0x28] sm:$0xff] %vm314, 0.0
      %340 = vst [vmem:[#allocation3 + $0x30] sm:$0xff] 0.0
      %341 = vst [vmem:[#allocation3 + $0x38] sm:$0xff] 0.0
      %342 = vst [vmem:[#allocation3 + $0x40] sm:$0xff] 0.0
      %343 = vst [vmem:[#allocation3 + $0x48] sm:$0xff] 0.0
      %344 = vst [vmem:[#allocation3 + $0x50] sm:$0xff] 0.0
      %345 = vst.msk [vmem:[#allocation3 + $0x58] sm:$0xff] %vm314, 0.0
      %346 = vst [vmem:[#allocation3 + $0x60] sm:$0xff] 0.0
      %347 = vst [vmem:[#allocation3 + $0x68] sm:$0xff] 0.0
      %348 = vst [vmem:[#allocation3 + $0x70] sm:$0xff] 0.0
      %349 = vst [vmem:[#allocation3 + $0x78] sm:$0xff] 0.0
      %350 = vst [vmem:[#allocation3 + $0x80] sm:$0xff] 0.0
      %351 = vst.msk [vmem:[#allocation3 + $0x88] sm:$0xff] %vm314, 0.0
      %352 = vst [vmem:[#allocation3 + $0x90] sm:$0xff] 0.0
      %353 = vst [vmem:[#allocation3 + $0x98] sm:$0xff] 0.0
      %354 = vst [vmem:[#allocation3 + $0xa0] sm:$0xff] 0.0
      %355 = vst [vmem:[#allocation3 + $0xa8] sm:$0xff] 0.0
      %356 = vst [vmem:[#allocation3 + $0xb0] sm:$0xff] 0.0
      %357 = vst.msk [vmem:[#allocation3 + $0xb8] sm:$0xff] %vm314, 0.0
      %v358 = vld [vmem:[%s300] sm:$0xff]
      %v359 = vld [vmem:[%s300 + $0x8] sm:$0xff]
      %v360 = vld [vmem:[%s300 + $0x10] sm:$0xff]
      %v361 = vld [vmem:[%s300 + $0x18] sm:$0xff]
      %362 = vst [vmem:[#allocation3 + $0x8] sm:$0xff] %v358
      %363 = vst [vmem:[#allocation3 + $0x10] sm:$0xff] %v359
      %364 = vst [vmem:[#allocation3 + $0x18] sm:$0xff] %v360
      %365 = vst.msk [vmem:[#allocation3 + $0x20] sm:$0xff] %vm314, %v361
      %v366 = vld [vmem:[%s3] sm:$0xff]
      %v367 = vld [vmem:[%s3 + $0x8] sm:$0xff]
      %v368 = vld [vmem:[%s3 + $0x10] sm:$0xff]
      %v369 = vld [vmem:[%s3 + $0x18] sm:$0xff]
      %371 = vset.pattern.permute.xlu0 0
      %372 = vperm.xlu0 %371, %v366
      %v373 = vpop.permute.xlu0 %372
      %376 = vset.pattern.permute.xlu0 0
      %377 = vperm.xlu0 %376, %v367
      %v378 = vpop.permute.xlu0 %377
      %381 = vset.pattern.permute.xlu0 0
      %382 = vperm.xlu0 %381, %v368
      %v383 = vpop.permute.xlu0 %382
      %386 = vset.pattern.permute.xlu0 0
      %387 = vperm.xlu0 %386, %v369
      %v388 = vpop.permute.xlu0 %387
      %v390 = vld [vmem:[#allocation3] sm:$0xff]
      %v391 = vld [vmem:[#allocation3 + $0x8] sm:$0xff]
      %v392 = vld [vmem:[#allocation3 + $0x10] sm:$0xff]
      %v393 = vld [vmem:[#allocation3 + $0x18] sm:$0xff]
      %v394 = vld [vmem:[#allocation3 + $0x20] sm:$0xff]
      %400 = vrot.lane.b32.xlu0 %v390, 127
      %v401 = vpop.permute.xlu0 %400
      %402 = vrot.lane.b32.xlu0 %v391, 127
      %v403 = vpop.permute.xlu0 %402
      %404 = vrot.lane.b32.xlu0 %v392, 127
      %v405 = vpop.permute.xlu0 %404
      %406 = vrot.lane.b32.xlu0 %v393, 127
      %v407 = vpop.permute.xlu0 %406
      %408 = vrot.lane.b32.xlu0 %v394, 127
      %v409 = vpop.permute.xlu0 %408
      %vm410 = vcmask 1039360
      %v411 = vsel %vm410, %v401, %v403
      %v412 = vsel %vm410, %v403, %v405
      %v413 = vsel %vm410, %v405, %v407
      %v414 = vsel %vm410, %v407, %v409
      %420 = vrot.lane.b32.xlu0 %v390, 126
      %v421 = vpop.permute.xlu0 %420
      %422 = vrot.lane.b32.xlu0 %v391, 126
      %v423 = vpop.permute.xlu0 %422
      %424 = vrot.lane.b32.xlu0 %v392, 126
      %v425 = vpop.permute.xlu0 %424
      %426 = vrot.lane.b32.xlu0 %v393, 126
      %v427 = vpop.permute.xlu0 %426
      %428 = vrot.lane.b32.xlu0 %v394, 126
      %v429 = vpop.permute.xlu0 %428
      %vm430 = vcmask 1031168
      %v431 = vsel %vm430, %v421, %v423
      %v432 = vsel %vm430, %v423, %v425
      %v433 = vsel %vm430, %v425, %v427
      %v434 = vsel %vm430, %v427, %v429
      %v440 = vld [vmem:[%s2] sm:$0xf]
      %v441 = vld [vmem:[%s2 + $0x4] sm:$0xf]
      %v442 = vld [vmem:[%s2 + $0x8] sm:$0xf]
      %v443 = vld [vmem:[%s2 + $0xc] sm:$0xf]
      %v444 = vpack.c.bf16 %v411, %v390
      %v445 = vpack.c.bf16 %v412, %v391
      %v446 = vpack.c.bf16 %v413, %v392
      %v447 = vpack.c.bf16 %v414, %v393
      %v448 = vpack.c.bf16 %v409, %v394
      %v449 = vpack.c.bf16 %v431, %v431
      %v450 = vpack.c.bf16 %v432, %v432
      %v451 = vpack.c.bf16 %v433, %v433
      %v452 = vpack.c.bf16 %v434, %v434
      %v453 = vpack.c.bf16 %v429, %v429
      %v458 = vunpack.c.l.b16 %v440
      %v459 = vunpack.c.l.b16 %v441
      %v460 = vunpack.c.l.b16 %v442
      %v461 = vunpack.c.l.b16 %v443
      %v462 = vpack.c.b16 %v459, %v458
      %v463 = vpack.c.b16 %v461, %v460
      %474 = vrot.lane.b32.xlu0 %v444, 25
      %v475 = vpop.permute.xlu0 %474
      %476 = vrot.lane.b32.xlu0 %v445, 25
      %v477 = vpop.permute.xlu0 %476
      %478 = vrot.lane.b32.xlu0 %v446, 25
      %v479 = vpop.permute.xlu0 %478
      %480 = vrot.lane.b32.xlu0 %v447, 25
      %v481 = vpop.permute.xlu0 %480
      %482 = vrot.lane.b32.xlu0 %v448, 25
      %v483 = vpop.permute.xlu0 %482
      %484 = vrot.lane.b32.xlu0 %v449, 25
      %v485 = vpop.permute.xlu0 %484
      %486 = vrot.lane.b32.xlu0 %v450, 25
      %v487 = vpop.permute.xlu0 %486
      %488 = vrot.lane.b32.xlu0 %v451, 25
      %v489 = vpop.permute.xlu0 %488
      %490 = vrot.lane.b32.xlu0 %v452, 25
      %v491 = vpop.permute.xlu0 %490
      %492 = vrot.lane.b32.xlu0 %v453, 25
      %v493 = vpop.permute.xlu0 %492
      %vm494 = vcmask 203776
      %v495 = vsel %vm494, %v475, %v477
      %v496 = vsel %vm494, %v477, %v479
      %v497 = vsel %vm494, %v479, %v481
      %v498 = vsel %vm494, %v481, %v483
      %v499 = vsel %vm494, %v485, %v487
      %v500 = vsel %vm494, %v487, %v489
      %v501 = vsel %vm494, %v489, %v491
      %v502 = vsel %vm494, %v491, %v493
      %vm507 = vcmask 195584
      %v509 = vsel %vm507, %v462, 0
      %v512 = vsel %vm507, %v463, 0
      %vm514 = vcmask 1043456
      %v516 = vsel %vm514, %v499, 0
      %v519 = vsel %vm514, %v500, 0
      %v522 = vsel %vm514, %v501, 0
      %v525 = vsel %vm514, %v502, 0
      %527 = vmatprep.subr.bf16.mxu0 %v496
      %528 = vmatpush1.bf16.msra.mxu0 %v495
      %529 = vmatprep.subr.bf16.mxu0 %v519
      %530 = vmatpush1.bf16.msra.mxu0 %v516
      %531 = vmatprep.subr.bf16.mxu0 0
      %532 = vmatpush1.bf16.msra.mxu0 0
      %533 = vmatprep.subr.bf16.mxu0 0
      %534 = vmatpush1.bf16.msra.mxu0 0
      %535 = vmatprep.subr.bf16.mxu0 0
      %536 = vmatpush1.bf16.msra.mxu0 0
      %537 = vmatprep.subr.bf16.mxu0 0
      %538 = vmatpush1.bf16.msra.mxu0 0
      %539 = vmatprep.subr.bf16.mxu0 0
      %540 = vmatpush1.bf16.msra.mxu0 0
      %541 = vmatprep.subr.bf16.mxu0 0
      %542 = vmatpush1.bf16.msra.mxu0 0
      %543 = vmatprep.subr.bf16.mxu0 0
      %544 = vmatpush1.bf16.msra.mxu0 0
      %545 = vmatprep.subr.bf16.mxu0 0
      %546 = vmatpush1.bf16.msra.mxu0 0
      %547 = vmatprep.subr.bf16.mxu0 0
      %548 = vmatpush1.bf16.msra.mxu0 0
      %549 = vmatprep.subr.bf16.mxu0 0
      %550 = vmatpush1.bf16.msra.mxu0 0
      %551 = vmatprep.subr.bf16.mxu0 0
      %552 = vmatpush1.bf16.msra.mxu0 0
      %553 = vmatprep.subr.bf16.mxu0 0
      %554 = vmatpush1.bf16.msra.mxu0 0
      %555 = vmatprep.subr.bf16.mxu0 0
      %556 = vmatpush1.bf16.msra.mxu0 0
      %557 = vmatprep.subr.bf16.mxu0 0
      %558 = vmatpush1.bf16.msra.mxu0 0
      %559 = vmatprep.mubr.bf16.mxu0 0
      %560 = vmatmul.mubr.bf16.gmra.mrb[0].mxu0 %v509
      %v561 = vpop.f32.mrb[0].mxu0
      %v562 = vadd.f32 0.0, %v561
      %v563 = vpop.f32.mrb[0].mxu0
      %v564 = vadd.f32 0.0, %v563
      %v565 = vpop.f32.mrb[0].mxu0
      %v566 = vadd.f32 0.0, %v565
      %v567 = vpop.f32.mrb[0].mxu0
      %v568 = vadd.f32 0.0, %v567
      %569 = vmatprep.mubr.bf16.mxu0 0
      %570 = vmatmul.mubr.bf16.gmra.mrb[0].mxu0 %v512
      %v571 = vpop.f32.mrb[0].mxu0
      %v572 = vadd.f32 0.0, %v571
      %v573 = vpop.f32.mrb[0].mxu0
      %v574 = vadd.f32 0.0, %v573
      %v575 = vpop.f32.mrb[0].mxu0
      %v576 = vadd.f32 0.0, %v575
      %v577 = vpop.f32.mrb[0].mxu0
      %v578 = vadd.f32 0.0, %v577
      %579 = vdwg.mxu0
      %580 = vmatprep.subr.bf16.mxu0 %v498
      %581 = vmatpush1.bf16.msra.mxu0 %v497
      %582 = vmatprep.subr.bf16.mxu0 %v525
      %583 = vmatpush1.bf16.msra.mxu0 %v522
      %584 = vmatprep.subr.bf16.mxu0 0
      %585 = vmatpush1.bf16.msra.mxu0 0
      %586 = vmatprep.subr.bf16.mxu0 0
      %587 = vmatpush1.bf16.msra.mxu0 0
      %588 = vmatprep.subr.bf16.mxu0 0
      %589 = vmatpush1.bf16.msra.mxu0 0
      %590 = vmatprep.subr.bf16.mxu0 0
      %591 = vmatpush1.bf16.msra.mxu0 0
      %592 = vmatprep.subr.bf16.mxu0 0
      %593 = vmatpush1.bf16.msra.mxu0 0
      %594 = vmatprep.subr.bf16.mxu0 0
      %595 = vmatpush1.bf16.msra.mxu0 0
      %596 = vmatprep.subr.bf16.mxu0 0
      %597 = vmatpush1.bf16.msra.mxu0 0
      %598 = vmatprep.subr.bf16.mxu0 0
      %599 = vmatpush1.bf16.msra.mxu0 0
      %600 = vmatprep.subr.bf16.mxu0 0
      %601 = vmatpush1.bf16.msra.mxu0 0
      %602 = vmatprep.subr.bf16.mxu0 0
      %603 = vmatpush1.bf16.msra.mxu0 0
      %604 = vmatprep.subr.bf16.mxu0 0
      %605 = vmatpush1.bf16.msra.mxu0 0
      %606 = vmatprep.subr.bf16.mxu0 0
      %607 = vmatpush1.bf16.msra.mxu0 0
      %608 = vmatprep.subr.bf16.mxu0 0
      %609 = vmatpush1.bf16.msra.mxu0 0
      %610 = vmatprep.subr.bf16.mxu0 0
      %611 = vmatpush1.bf16.msra.mxu0 0
      %612 = vmatprep.mubr.bf16.mxu0 0
      %613 = vmatmul.mubr.bf16.gmra.mrb[0].mxu0 %v509
      %v614 = vpop.f32.mrb[0].mxu0
      %v615 = vadd.f32 0.0, %v614
      %v616 = vpop.f32.mrb[0].mxu0
      %v617 = vadd.f32 0.0, %v616
      %v618 = vpop.f32.mrb[0].mxu0
      %v619 = vadd.f32 0.0, %v618
      %v620 = vpop.f32.mrb[0].mxu0
      %v621 = vadd.f32 0.0, %v620
      %622 = vmatprep.mubr.bf16.mxu0 0
      %623 = vmatmul.mubr.bf16.gmra.mrb[0].mxu0 %v512
      %v624 = vpop.f32.mrb[0].mxu0
      %v625 = vadd.f32 0.0, %v624
      %v626 = vpop.f32.mrb[0].mxu0
      %v627 = vadd.f32 0.0, %v626
      %v628 = vpop.f32.mrb[0].mxu0
      %v629 = vadd.f32 0.0, %v628
      %v630 = vpop.f32.mrb[0].mxu0
      %v631 = vadd.f32 0.0, %v630
      %632 = vdwg.mxu0
      %v633 = vadd.f32 %v373, %v562
      %v634 = vadd.f32 %v373, %v564
      %v635 = vadd.f32 %v373, %v615
      %v636 = vadd.f32 %v373, %v617
      %v637 = vadd.f32 %v378, %v566
      %v638 = vadd.f32 %v378, %v568
      %v639 = vadd.f32 %v378, %v619
      %v640 = vadd.f32 %v378, %v621
      %v641 = vadd.f32 %v383, %v572
      %v642 = vadd.f32 %v383, %v574
      %v643 = vadd.f32 %v383, %v625
      %v644 = vadd.f32 %v383, %v627
      %v645 = vadd.f32 %v388, %v576
      %v646 = vadd.f32 %v388, %v578
      %v647 = vadd.f32 %v388, %v629
      %v648 = vadd.f32 %v388, %v631
      %s651 = scalar_lea.vmem %s2, 16
      %v652 = vld [vmem:[%s651] sm:$0xf]
      %v653 = vld [vmem:[%s651 + $0x4] sm:$0xf]
      %v654 = vld [vmem:[%s651 + $0x8] sm:$0xf]
      %v655 = vld [vmem:[%s651 + $0xc] sm:$0xf]
      %v656 = vpack.c.bf16 %v403, %v390
      %v657 = vpack.c.bf16 %v423, %v423
      %v662 = vunpack.c.l.b16 %v652
      %v663 = vunpack.c.l.b16 %v653
      %v664 = vunpack.c.l.b16 %v654
      %v665 = vunpack.c.l.b16 %v655
      %v666 = vpack.c.b16 %v663, %v662
      %v667 = vpack.c.b16 %v665, %v664
      %670 = vrot.lane.b32.xlu0 %v656, 1
      %v671 = vpop.permute.xlu0 %670
      %672 = vrot.lane.b32.xlu0 %v445, 1
      %v673 = vpop.permute.xlu0 %672
      %674 = vrot.lane.b32.xlu0 %v446, 1
      %v675 = vpop.permute.xlu0 %674
      %676 = vrot.lane.b32.xlu0 %v447, 1
      %v677 = vpop.permute.xlu0 %676
      %678 = vrot.lane.b32.xlu0 %v448, 1
      %v679 = vpop.permute.xlu0 %678
      %680 = vrot.lane.b32.xlu0 %v657, 1
      %v681 = vpop.permute.xlu0 %680
      %682 = vrot.lane.b32.xlu0 %v450, 1
      %v683 = vpop.permute.xlu0 %682
      %684 = vrot.lane.b32.xlu0 %v451, 1
      %v685 = vpop.permute.xlu0 %684
      %686 = vrot.lane.b32.xlu0 %v452, 1
      %v687 = vpop.permute.xlu0 %686
      %688 = vrot.lane.b32.xlu0 %v453, 1
      %v689 = vpop.permute.xlu0 %688
      %vm690 = vcmask 7168
      %v691 = vsel %vm690, %v671, %v673
      %v692 = vsel %vm690, %v673, %v675
      %v693 = vsel %vm690, %v675, %v677
      %v694 = vsel %vm690, %v677, %v679
      %v695 = vsel %vm690, %v681, %v683
      %v696 = vsel %vm690, %v683, %v685
      %v697 = vsel %vm690, %v685, %v687
      %v698 = vsel %vm690, %v687, %v689
      %v704 = vsel %vm507, %v666, 0
      %v707 = vsel %vm507, %v667, 0
      %v710 = vsel %vm514, %v695, 0
      %v713 = vsel %vm514, %v696, 0
      %v716 = vsel %vm514, %v697, 0
      %v719 = vsel %vm514, %v698, 0
      %721 = vmatprep.subr.bf16.mxu0 %v692
      %722 = vmatpush1.bf16.msra.mxu0 %v691
      %723 = vmatprep.subr.bf16.mxu0 %v713
      %724 = vmatpush1.bf16.msra.mxu0 %v710
      %725 = vmatprep.subr.bf16.mxu0 0
      %726 = vmatpush1.bf16.msra.mxu0 0
      %727 = vmatprep.subr.bf16.mxu0 0
      %728 = vmatpush1.bf16.msra.mxu0 0
      %729 = vmatprep.subr.bf16.mxu0 0
      %730 = vmatpush1.bf16.msra.mxu0 0
      %731 = vmatprep.subr.bf16.mxu0 0
      %732 = vmatpush1.bf16.msra.mxu0 0
      %733 = vmatprep.subr.bf16.mxu0 0
      %734 = vmatpush1.bf16.msra.mxu0 0
      %735 = vmatprep.subr.bf16.mxu0 0
      %736 = vmatpush1.bf16.msra.mxu0 0
      %737 = vmatprep.subr.bf16.mxu0 0
      %738 = vmatpush1.bf16.msra.mxu0 0
      %739 = vmatprep.subr.bf16.mxu0 0
      %740 = vmatpush1.bf16.msra.mxu0 0
      %741 = vmatprep.subr.bf16.mxu0 0
      %742 = vmatpush1.bf16.msra.mxu0 0
      %743 = vmatprep.subr.bf16.mxu0 0
      %744 = vmatpush1.bf16.msra.mxu0 0
      %745 = vmatprep.subr.bf16.mxu0 0
      %746 = vmatpush1.bf16.msra.mxu0 0
      %747 = vmatprep.subr.bf16.mxu0 0
      %748 = vmatpush1.bf16.msra.mxu0 0
      %749 = vmatprep.subr.bf16.mxu0 0
      %750 = vmatpush1.bf16.msra.mxu0 0
      %751 = vmatprep.subr.bf16.mxu0 0
      %752 = vmatpush1.bf16.msra.mxu0 0
      %753 = vmatprep.mubr.bf16.mxu0 0
      %754 = vmatmul.mubr.bf16.gmra.mrb[0].mxu0 %v704
      %v755 = vpop.f32.mrb[0].mxu0
      %v756 = vadd.f32 0.0, %v755
      %v757 = vpop.f32.mrb[0].mxu0
      %v758 = vadd.f32 0.0, %v757
      %v759 = vpop.f32.mrb[0].mxu0
      %v760 = vadd.f32 0.0, %v759
      %v761 = vpop.f32.mrb[0].mxu0
      %v762 = vadd.f32 0.0, %v761
      %763 = vmatprep.mubr.bf16.mxu0 0
      %764 = vmatmul.mubr.bf16.gmra.mrb[0].mxu0 %v707
      %v765 = vpop.f32.mrb[0].mxu0
      %v766 = vadd.f32 0.0, %v765
      %v767 = vpop.f32.mrb[0].mxu0
      %v768 = vadd.f32 0.0, %v767
      %v769 = vpop.f32.mrb[0].mxu0
      %v770 = vadd.f32 0.0, %v769
      %v771 = vpop.f32.mrb[0].mxu0
      %v772 = vadd.f32 0.0, %v771
      %773 = vdwg.mxu0
      %774 = vmatprep.subr.bf16.mxu0 %v694
      %775 = vmatpush1.bf16.msra.mxu0 %v693
      %776 = vmatprep.subr.bf16.mxu0 %v719
      %777 = vmatpush1.bf16.msra.mxu0 %v716
      %778 = vmatprep.subr.bf16.mxu0 0
      %779 = vmatpush1.bf16.msra.mxu0 0
      %780 = vmatprep.subr.bf16.mxu0 0
      %781 = vmatpush1.bf16.msra.mxu0 0
      %782 = vmatprep.subr.bf16.mxu0 0
      %783 = vmatpush1.bf16.msra.mxu0 0
      %784 = vmatprep.subr.bf16.mxu0 0
      %785 = vmatpush1.bf16.msra.mxu0 0
      %786 = vmatprep.subr.bf16.mxu0 0
      %787 = vmatpush1.bf16.msra.mxu0 0
      %788 = vmatprep.subr.bf16.mxu0 0
      %789 = vmatpush1.bf16.msra.mxu0 0
      %790 = vmatprep.subr.bf16.mxu0 0
      %791 = vmatpush1.bf16.msra.mxu0 0
      %792 = vmatprep.subr.bf16.mxu0 0
      %793 = vmatpush1.bf16.msra.mxu0 0
      %794 = vmatprep.subr.bf16.mxu0 0
      %795 = vmatpush1.bf16.msra.mxu0 0
      %796 = vmatprep.subr.bf16.mxu0 0
      %797 = vmatpush1.bf16.msra.mxu0 0
      %798 = vmatprep.subr.bf16.mxu0 0
      %799 = vmatpush1.bf16.msra.mxu0 0
      %800 = vmatprep.subr.bf16.mxu0 0
      %801 = vmatpush1.bf16.msra.mxu0 0
      %802 = vmatprep.subr.bf16.mxu0 0
      %803 = vmatpush1.bf16.msra.mxu0 0
      %804 = vmatprep.subr.bf16.mxu0 0
      %805 = vmatpush1.bf16.msra.mxu0 0
      %806 = vmatprep.mubr.bf16.mxu0 0
      %807 = vmatmul.mubr.bf16.gmra.mrb[0].mxu0 %v704
      %v808 = vpop.f32.mrb[0].mxu0
      %v809 = vadd.f32 0.0, %v808
      %v810 = vpop.f32.mrb[0].mxu0
      %v811 = vadd.f32 0.0, %v810
      %v812 = vpop.f32.mrb[0].mxu0
      %v813 = vadd.f32 0.0, %v812
      %v814 = vpop.f32.mrb[0].mxu0
      %v815 = vadd.f32 0.0, %v814
      %816 = vmatprep.mubr.bf16.mxu0 0
      %817 = vmatmul.mubr.bf16.gmra.mrb[0].mxu0 %v707
      %v818 = vpop.f32.mrb[0].mxu0
      %v819 = vadd.f32 0.0, %v818
      %v820 = vpop.f32.mrb[0].mxu0
      %v821 = vadd.f32 0.0, %v820
      %v822 = vpop.f32.mrb[0].mxu0
      %v823 = vadd.f32 0.0, %v822
      %v824 = vpop.f32.mrb[0].mxu0
      %v825 = vadd.f32 0.0, %v824
      %826 = vdwg.mxu0
      %v827 = vadd.f32 %v633, %v756
      %v828 = vadd.f32 %v634, %v758
      %v829 = vadd.f32 %v635, %v809
      %v830 = vadd.f32 %v636, %v811
      %v831 = vadd.f32 %v637, %v760
      %v832 = vadd.f32 %v638, %v762
      %v833 = vadd.f32 %v639, %v813
      %v834 = vadd.f32 %v640, %v815
      %v835 = vadd.f32 %v641, %v766
      %v836 = vadd.f32 %v642, %v768
      %v837 = vadd.f32 %v643, %v819
      %v838 = vadd.f32 %v644, %v821
      %v839 = vadd.f32 %v645, %v770
      %v840 = vadd.f32 %v646, %v772
      %v841 = vadd.f32 %v647, %v823
      %v842 = vadd.f32 %v648, %v825
      %s843 = scalar_lea.vmem %s2, 32
      %v844 = vld [vmem:[%s843] sm:$0xf]
      %v845 = vld [vmem:[%s843 + $0x4] sm:$0xf]
      %v846 = vld [vmem:[%s843 + $0x8] sm:$0xf]
      %v847 = vld [vmem:[%s843 + $0xc] sm:$0xf]
      %v852 = vunpack.c.l.b16 %v844
      %v853 = vunpack.c.l.b16 %v845
      %v854 = vunpack.c.l.b16 %v846
      %v855 = vunpack.c.l.b16 %v847
      %v856 = vpack.c.b16 %v853, %v852
      %v857 = vpack.c.b16 %v855, %v854
      %858 = vrot.lane.b32.xlu0 %v445, 105
      %v859 = vpop.permute.xlu0 %858
      %860 = vrot.lane.b32.xlu0 %v446, 105
      %v861 = vpop.permute.xlu0 %860
      %862 = vrot.lane.b32.xlu0 %v447, 105
      %v863 = vpop.permute.xlu0 %862
      %864 = vrot.lane.b32.xlu0 %v448, 105
      %v865 = vpop.permute.xlu0 %864
      %866 = vrot.lane.b32.xlu0 %v450, 105
      %v867 = vpop.permute.xlu0 %866
      %868 = vrot.lane.b32.xlu0 %v451, 105
      %v869 = vpop.permute.xlu0 %868
      %870 = vrot.lane.b32.xlu0 %v452, 105
      %v871 = vpop.permute.xlu0 %870
      %872 = vrot.lane.b32.xlu0 %v453, 105
      %v873 = vpop.permute.xlu0 %872
      %vm874 = vcmask 859136
      %v875 = vsel %vm874, %v859, %v861
      %v876 = vsel %vm874, %v861, %v863
      %v877 = vsel %vm874, %v863, %v865
      %v878 = vsel %vm874, %v867, %v869
      %v879 = vsel %vm874, %v869, %v871
      %v880 = vsel %vm874, %v871, %v873
      %v886 = vsel %vm507, %v856, 0
      %v889 = vsel %vm507, %v857, 0
      %v892 = vsel %vm514, %v878, 0
      %v895 = vsel %vm514, %v879, 0
      %v898 = vsel %vm514, %v880, 0
      %v901 = vsel %vm514, %v873, 0
      %903 = vmatprep.subr.bf16.mxu0 %v876
      %904 = vmatpush1.bf16.msra.mxu0 %v875
      %905 = vmatprep.subr.bf16.mxu0 %v895
      %906 = vmatpush1.bf16.msra.mxu0 %v892
      %907 = vmatprep.subr.bf16.mxu0 0
      %908 = vmatpush1.bf16.msra.mxu0 0
      %909 = vmatprep.subr.bf16.mxu0 0
      %910 = vmatpush1.bf16.msra.mxu0 0
      %911 = vmatprep.subr.bf16.mxu0 0
      %912 = vmatpush1.bf16.msra.mxu0 0
      %913 = vmatprep.subr.bf16.mxu0 0
      %914 = vmatpush1.bf16.msra.mxu0 0
      %915 = vmatprep.subr.bf16.mxu0 0
      %916 = vmatpush1.bf16.msra.mxu0 0
      %917 = vmatprep.subr.bf16.mxu0 0
      %918 = vmatpush1.bf16.msra.mxu0 0
      %919 = vmatprep.subr.bf16.mxu0 0
      %920 = vmatpush1.bf16.msra.mxu0 0
      %921 = vmatprep.subr.bf16.mxu0 0
      %922 = vmatpush1.bf16.msra.mxu0 0
      %923 = vmatprep.subr.bf16.mxu0 0
      %924 = vmatpush1.bf16.msra.mxu0 0
      %925 = vmatprep.subr.bf16.mxu0 0
      %926 = vmatpush1.bf16.msra.mxu0 0
      %927 = vmatprep.subr.bf16.mxu0 0
      %928 = vmatpush1.bf16.msra.mxu0 0
      %929 = vmatprep.subr.bf16.mxu0 0
      %930 = vmatpush1.bf16.msra.mxu0 0
      %931 = vmatprep.subr.bf16.mxu0 0
      %932 = vmatpush1.bf16.msra.mxu0 0
      %933 = vmatprep.subr.bf16.mxu0 0
      %934 = vmatpush1.bf16.msra.mxu0 0
      %935 = vmatprep.mubr.bf16.mxu0 0
      %936 = vmatmul.mubr.bf16.gmra.mrb[0].mxu0 %v886
      %v937 = vpop.f32.mrb[0].mxu0
      %v938 = vadd.f32 0.0, %v937
      %v939 = vpop.f32.mrb[0].mxu0
      %v940 = vadd.f32 0.0, %v939
      %v941 = vpop.f32.mrb[0].mxu0
      %v942 = vadd.f32 0.0, %v941
      %v943 = vpop.f32.mrb[0].mxu0
      %v944 = vadd.f32 0.0, %v943
      %945 = vmatprep.mubr.bf16.mxu0 0
      %946 = vmatmul.mubr.bf16.gmra.mrb[0].mxu0 %v889
      %v947 = vpop.f32.mrb[0].mxu0
      %v948 = vadd.f32 0.0, %v947
      %v949 = vpop.f32.mrb[0].mxu0
      %v950 = vadd.f32 0.0, %v949
      %v951 = vpop.f32.mrb[0].mxu0
      %v952 = vadd.f32 0.0, %v951
      %v953 = vpop.f32.mrb[0].mxu0
      %v954 = vadd.f32 0.0, %v953
      %955 = vdwg.mxu0
      %956 = vmatprep.subr.bf16.mxu0 %v865
      %957 = vmatpush1.bf16.msra.mxu0 %v877
      %958 = vmatprep.subr.bf16.mxu0 %v901
      %959 = vmatpush1.bf16.msra.mxu0 %v898
      %960 = vmatprep.subr.bf16.mxu0 0
      %961 = vmatpush1.bf16.msra.mxu0 0
      %962 = vmatprep.subr.bf16.mxu0 0
      %963 = vmatpush1.bf16.msra.mxu0 0
      %964 = vmatprep.subr.bf16.mxu0 0
      %965 = vmatpush1.bf16.msra.mxu0 0
      %966 = vmatprep.subr.bf16.mxu0 0
      %967 = vmatpush1.bf16.msra.mxu0 0
      %968 = vmatprep.subr.bf16.mxu0 0
      %969 = vmatpush1.bf16.msra.mxu0 0
      %970 = vmatprep.subr.bf16.mxu0 0
      %971 = vmatpush1.bf16.msra.mxu0 0
      %972 = vmatprep.subr.bf16.mxu0 0
      %973 = vmatpush1.bf16.msra.mxu0 0
      %974 = vmatprep.subr.bf16.mxu0 0
      %975 = vmatpush1.bf16.msra.mxu0 0
      %976 = vmatprep.subr.bf16.mxu0 0
      %977 = vmatpush1.bf16.msra.mxu0 0
      %978 = vmatprep.subr.bf16.mxu0 0
      %979 = vmatpush1.bf16.msra.mxu0 0
      %980 = vmatprep.subr.bf16.mxu0 0
      %981 = vmatpush1.bf16.msra.mxu0 0
      %982 = vmatprep.subr.bf16.mxu0 0
      %983 = vmatpush1.bf16.msra.mxu0 0
      %984 = vmatprep.subr.bf16.mxu0 0
      %985 = vmatpush1.bf16.msra.mxu0 0
      %986 = vmatprep.subr.bf16.mxu0 0
      %987 = vmatpush1.bf16.msra.mxu0 0
      %988 = vmatprep.mubr.bf16.mxu0 0
      %989 = vmatmul.mubr.bf16.gmra.mrb[0].mxu0 %v886
      %v990 = vpop.f32.mrb[0].mxu0
      %v991 = vadd.f32 0.0, %v990
      %v992 = vpop.f32.mrb[0].mxu0
      %v993 = vadd.f32 0.0, %v992
      %v994 = vpop.f32.mrb[0].mxu0
      %v995 = vadd.f32 0.0, %v994
      %v996 = vpop.f32.mrb[0].mxu0
      %v997 = vadd.f32 0.0, %v996
      %998 = vmatprep.mubr.bf16.mxu0 0
      %999 = vmatmul.mubr.bf16.gmra.mrb[0].mxu0 %v889
      %v1000 = vpop.f32.mrb[0].mxu0
      %v1001 = vadd.f32 0.0, %v1000
      %v1002 = vpop.f32.mrb[0].mxu0
      %v1003 = vadd.f32 0.0, %v1002
      %v1004 = vpop.f32.mrb[0].mxu0
      %v1005 = vadd.f32 0.0, %v1004
      %v1006 = vpop.f32.mrb[0].mxu0
      %v1007 = vadd.f32 0.0, %v1006
      %1008 = vdwg.mxu0
      %v1009 = vadd.f32 %v827, %v938
      %v1010 = vadd.f32 %v828, %v940
      %v1011 = vadd.f32 %v829, %v991
      %v1012 = vadd.f32 %v830, %v993
      %v1013 = vadd.f32 %v831, %v942
      %v1014 = vadd.f32 %v832, %v944
      %v1015 = vadd.f32 %v833, %v995
      %v1016 = vadd.f32 %v834, %v997
      %v1017 = vadd.f32 %v835, %v948
      %v1018 = vadd.f32 %v836, %v950
      %v1019 = vadd.f32 %v837, %v1001
      %v1020 = vadd.f32 %v838, %v1003
      %v1021 = vadd.f32 %v839, %v952
      %v1022 = vadd.f32 %v840, %v954
      %v1023 = vadd.f32 %v841, %v1005
      %v1024 = vadd.f32 %v842, %v1007
      %v1025 = vmax.f32 %v1009, 0.0
      %v1026 = vmax.f32 %v1010, 0.0
      %v1027 = vmax.f32 %v1011, 0.0
      %v1028 = vmax.f32 %v1012, 0.0
      %v1029 = vmax.f32 %v1013, 0.0
      %v1030 = vmax.f32 %v1014, 0.0
      %v1031 = vmax.f32 %v1015, 0.0
      %v1032 = vmax.f32 %v1016, 0.0
      %v1033 = vmax.f32 %v1017, 0.0
      %v1034 = vmax.f32 %v1018, 0.0
      %v1035 = vmax.f32 %v1019, 0.0
      %v1036 = vmax.f32 %v1020, 0.0
      %v1037 = vmax.f32 %v1021, 0.0
      %v1038 = vmax.f32 %v1022, 0.0
      %v1039 = vmax.f32 %v1023, 0.0
      %v1040 = vmax.f32 %v1024, 0.0
      %v1041 = vsel %vm308, 1, 0
      %v1042 = vlaneseq
      %v1043 = vshrl.u32 %v1042, 7
      %v1044 = vsub.s32 0, %v1043
      %v1045 = vrot.slane %v1041, %v1044
      %v1046 = vlaneseq
      %v1047 = vshrl.u32 %v1046, 7
      %v1048 = vsub.s32 1, %v1047
      %v1049 = vrot.slane %v1041, %v1048
      %v1050 = vlaneseq
      %v1051 = vshrl.u32 %v1050, 7
      %v1052 = vsub.s32 2, %v1051
      %v1053 = vrot.slane %v1041, %v1052
      %v1054 = vlaneseq
      %v1055 = vshrl.u32 %v1054, 7
      %v1056 = vsub.s32 3, %v1055
      %v1057 = vrot.slane %v1041, %v1056
      %vm1058 = vcmp.eq.s32.totalorder %v1045, 1
      %vm1059 = vcmp.eq.s32.totalorder %v1049, 1
      %vm1060 = vcmp.eq.s32.totalorder %v1053, 1
      %vm1061 = vcmp.eq.s32.totalorder %v1057, 1
      %v1062 = vsel %vm1058, %v1025, 0.0
      %v1063 = vsel %vm1059, %v1026, 0.0
      %v1064 = vsel %vm1060, %v1027, 0.0
      %v1065 = vsel %vm1061, %v1028, 0.0
      %v1066 = vsel %vm1058, %v1029, 0.0
      %v1067 = vsel %vm1059, %v1030, 0.0
      %v1068 = vsel %vm1060, %v1031, 0.0
      %v1069 = vsel %vm1061, %v1032, 0.0
      %v1070 = vsel %vm1058, %v1033, 0.0
      %v1071 = vsel %vm1059, %v1034, 0.0
      %v1072 = vsel %vm1060, %v1035, 0.0
      %v1073 = vsel %vm1061, %v1036, 0.0
      %v1074 = vsel %vm1058, %v1037, 0.0
      %v1075 = vsel %vm1059, %v1038, 0.0
      %v1076 = vsel %vm1060, %v1039, 0.0
      %v1077 = vsel %vm1061, %v1040, 0.0
      %1078 = vst [vmem:[#allocation2 + $0x8] sm:$0xff] %v1062
      %1079 = vst [vmem:[#allocation2 + $0x10] sm:$0xff] %v1063
      %1080 = vst [vmem:[#allocation2 + $0x18] sm:$0xff] %v1064
      %1081 = vst.msk [vmem:[#allocation2 + $0x20] sm:$0xff] %vm314, %v1065
      %1082 = vst [vmem:[#allocation2 + $0x38] sm:$0xff] %v1066
      %1083 = vst [vmem:[#allocation2 + $0x40] sm:$0xff] %v1067
      %1084 = vst [vmem:[#allocation2 + $0x48] sm:$0xff] %v1068
      %1085 = vst.msk [vmem:[#allocation2 + $0x50] sm:$0xff] %vm314, %v1069
      %1086 = vst [vmem:[#allocation2 + $0x68] sm:$0xff] %v1070
      %1087 = vst [vmem:[#allocation2 + $0x70] sm:$0xff] %v1071
      %1088 = vst [vmem:[#allocation2 + $0x78] sm:$0xff] %v1072
      %1089 = vst.msk [vmem:[#allocation2 + $0x80] sm:$0xff] %vm314, %v1073
      %1090 = vst [vmem:[#allocation2 + $0x98] sm:$0xff] %v1074
      %1091 = vst [vmem:[#allocation2 + $0xa0] sm:$0xff] %v1075
      %1092 = vst [vmem:[#allocation2 + $0xa8] sm:$0xff] %v1076
      %1093 = vst.msk [vmem:[#allocation2 + $0xb0] sm:$0xff] %vm314, %v1077
      %v1094 = vld [vmem:[%s5] sm:$0xff]
      %v1095 = vld [vmem:[%s5 + $0x8] sm:$0xff]
      %v1096 = vld [vmem:[%s5 + $0x10] sm:$0xff]
      %v1097 = vld [vmem:[%s5 + $0x18] sm:$0xff]
      %1099 = vset.pattern.permute.xlu0 0
      %1100 = vperm.xlu0 %1099, %v1094
      %v1101 = vpop.permute.xlu0 %1100
      %1104 = vset.pattern.permute.xlu0 0
      %1105 = vperm.xlu0 %1104, %v1095
      %v1106 = vpop.permute.xlu0 %1105
      %1109 = vset.pattern.permute.xlu0 0
      %1110 = vperm.xlu0 %1109, %v1096
      %v1111 = vpop.permute.xlu0 %1110
      %1114 = vset.pattern.permute.xlu0 0
      %1115 = vperm.xlu0 %1114, %v1097
      %v1116 = vpop.permute.xlu0 %1115
      %v1118 = vld [vmem:[#allocation2] sm:$0xff]
      %v1119 = vld [vmem:[#allocation2 + $0x8] sm:$0xff]
      %v1120 = vld [vmem:[#allocation2 + $0x10] sm:$0xff]
      %v1121 = vld [vmem:[#allocation2 + $0x18] sm:$0xff]
      %v1122 = vld [vmem:[#allocation2 + $0x20] sm:$0xff]
      %v1123 = vld [vmem:[#allocation2 + $0x30] sm:$0xff]
      %v1124 = vld [vmem:[#allocation2 + $0x38] sm:$0xff]
      %v1125 = vld [vmem:[#allocation2 + $0x40] sm:$0xff]
      %v1126 = vld [vmem:[#allocation2 + $0x48] sm:$0xff]
      %v1127 = vld [vmem:[#allocation2 + $0x50] sm:$0xff]
      %v1128 = vld [vmem:[#allocation2 + $0x60] sm:$0xff]
      %v1129 = vld [vmem:[#allocation2 + $0x68] sm:$0xff]
      %v1130 = vld [vmem:[#allocation2 + $0x70] sm:$0xff]
      %v1131 = vld [vmem:[#allocation2 + $0x78] sm:$0xff]
      %v1132 = vld [vmem:[#allocation2 + $0x80] sm:$0xff]
      %v1133 = vld [vmem:[#allocation2 + $0x90] sm:$0xff]
      %v1134 = vld [vmem:[#allocation2 + $0x98] sm:$0xff]
      %v1135 = vld [vmem:[#allocation2 + $0xa0] sm:$0xff]
      %v1136 = vld [vmem:[#allocation2 + $0xa8] sm:$0xff]
      %v1137 = vld [vmem:[#allocation2 + $0xb0] sm:$0xff]
      %1158 = vrot.lane.b32.xlu0 %v1118, 127
      %v1159 = vpop.permute.xlu0 %1158
      %1160 = vrot.lane.b32.xlu0 %v1119, 127
      %v1161 = vpop.permute.xlu0 %1160
      %1162 = vrot.lane.b32.xlu0 %v1120, 127
      %v1163 = vpop.permute.xlu0 %1162
      %1164 = vrot.lane.b32.xlu0 %v1121, 127
      %v1165 = vpop.permute.xlu0 %1164
      %1166 = vrot.lane.b32.xlu0 %v1122, 127
      %v1167 = vpop.permute.xlu0 %1166
      %1168 = vrot.lane.b32.xlu0 %v1123, 127
      %v1169 = vpop.permute.xlu0 %1168
      %1170 = vrot.lane.b32.xlu0 %v1124, 127
      %v1171 = vpop.permute.xlu0 %1170
      %1172 = vrot.lane.b32.xlu0 %v1125, 127
      %v1173 = vpop.permute.xlu0 %1172
      %1174 = vrot.lane.b32.xlu0 %v1126, 127
      %v1175 = vpop.permute.xlu0 %1174
      %1176 = vrot.lane.b32.xlu0 %v1127, 127
      %v1177 = vpop.permute.xlu0 %1176
      %1178 = vrot.lane.b32.xlu0 %v1128, 127
      %v1179 = vpop.permute.xlu0 %1178
      %1180 = vrot.lane.b32.xlu0 %v1129, 127
      %v1181 = vpop.permute.xlu0 %1180
      %1182 = vrot.lane.b32.xlu0 %v1130, 127
      %v1183 = vpop.permute.xlu0 %1182
      %1184 = vrot.lane.b32.xlu0 %v1131, 127
      %v1185 = vpop.permute.xlu0 %1184
      %1186 = vrot.lane.b32.xlu0 %v1132, 127
      %v1187 = vpop.permute.xlu0 %1186
      %1188 = vrot.lane.b32.xlu0 %v1133, 127
      %v1189 = vpop.permute.xlu0 %1188
      %1190 = vrot.lane.b32.xlu0 %v1134, 127
      %v1191 = vpop.permute.xlu0 %1190
      %1192 = vrot.lane.b32.xlu0 %v1135, 127
      %v1193 = vpop.permute.xlu0 %1192
      %1194 = vrot.lane.b32.xlu0 %v1136, 127
      %v1195 = vpop.permute.xlu0 %1194
      %1196 = vrot.lane.b32.xlu0 %v1137, 127
      %v1197 = vpop.permute.xlu0 %1196
      %v1198 = vsel %vm410, %v1159, %v1161
      %v1199 = vsel %vm410, %v1161, %v1163
      %v1200 = vsel %vm410, %v1163, %v1165
      %v1201 = vsel %vm410, %v1165, %v1167
      %v1202 = vsel %vm410, %v1169, %v1171
      %v1203 = vsel %vm410, %v1171, %v1173
      %v1204 = vsel %vm410, %v1173, %v1175
      %v1205 = vsel %vm410, %v1175, %v1177
      %v1206 = vsel %vm410, %v1179, %v1181
      %v1207 = vsel %vm410, %v1181, %v1183
      %v1208 = vsel %vm410, %v1183, %v1185
      %v1209 = vsel %vm410, %v1185, %v1187
      %v1210 = vsel %vm410, %v1189, %v1191
      %v1211 = vsel %vm410, %v1191, %v1193
      %v1212 = vsel %vm410, %v1193, %v1195
      %v1213 = vsel %vm410, %v1195, %v1197
      %1234 = vrot.lane.b32.xlu0 %v1118, 126
      %v1235 = vpop.permute.xlu0 %1234
      %1236 = vrot.lane.b32.xlu0 %v1119, 126
      %v1237 = vpop.permute.xlu0 %1236
      %1238 = vrot.lane.b32.xlu0 %v1120, 126
      %v1239 = vpop.permute.xlu0 %1238
      %1240 = vrot.lane.b32.xlu0 %v1121, 126
      %v1241 = vpop.permute.xlu0 %1240
      %1242 = vrot.lane.b32.xlu0 %v1122, 126
      %v1243 = vpop.permute.xlu0 %1242
      %1244 = vrot.lane.b32.xlu0 %v1123, 126
      %v1245 = vpop.permute.xlu0 %1244
      %1246 = vrot.lane.b32.xlu0 %v1124, 126
      %v1247 = vpop.permute.xlu0 %1246
      %1248 = vrot.lane.b32.xlu0 %v1125, 126
      %v1249 = vpop.permute.xlu0 %1248
      %1250 = vrot.lane.b32.xlu0 %v1126, 126
      %v1251 = vpop.permute.xlu0 %1250
      %1252 = vrot.lane.b32.xlu0 %v1127, 126
      %v1253 = vpop.permute.xlu0 %1252
      %1254 = vrot.lane.b32.xlu0 %v1128, 126
      %v1255 = vpop.permute.xlu0 %1254
      %1256 = vrot.lane.b32.xlu0 %v1129, 126
      %v1257 = vpop.permute.xlu0 %1256
      %1258 = vrot.lane.b32.xlu0 %v1130, 126
      %v1259 = vpop.permute.xlu0 %1258
      %1260 = vrot.lane.b32.xlu0 %v1131, 126
      %v1261 = vpop.permute.xlu0 %1260
      %1262 = vrot.lane.b32.xlu0 %v1132, 126
      %v1263 = vpop.permute.xlu0 %1262
      %1264 = vrot.lane.b32.xlu0 %v1133, 126
      %v1265 = vpop.permute.xlu0 %1264
      %1266 = vrot.lane.b32.xlu0 %v1134, 126
      %v1267 = vpop.permute.xlu0 %1266
      %1268 = vrot.lane.b32.xlu0 %v1135, 126
      %v1269 = vpop.permute.xlu0 %1268
      %1270 = vrot.lane.b32.xlu0 %v1136, 126
      %v1271 = vpop.permute.xlu0 %1270
      %1272 = vrot.lane.b32.xlu0 %v1137, 126
      %v1273 = vpop.permute.xlu0 %1272
      %v1274 = vsel %vm430, %v1235, %v1237
      %v1275 = vsel %vm430, %v1237, %v1239
      %v1276 = vsel %vm430, %v1239, %v1241
      %v1277 = vsel %vm430, %v1241, %v1243
      %v1278 = vsel %vm430, %v1245, %v1247
      %v1279 = vsel %vm430, %v1247, %v1249
      %v1280 = vsel %vm430, %v1249, %v1251
      %v1281 = vsel %vm430, %v1251, %v1253
      %v1282 = vsel %vm430, %v1255, %v1257
      %v1283 = vsel %vm430, %v1257, %v1259
      %v1284 = vsel %vm430, %v1259, %v1261
      %v1285 = vsel %vm430, %v1261, %v1263
      %v1286 = vsel %vm430, %v1265, %v1267
      %v1287 = vsel %vm430, %v1267, %v1269
      %v1288 = vsel %vm430, %v1269, %v1271
      %v1289 = vsel %vm430, %v1271, %v1273
      %v1310 = vld [vmem:[%s4] sm:$0xf]
      %v1311 = vld [vmem:[%s4 + $0x4] sm:$0xf]
      %v1312 = vld [vmem:[%s4 + $0x8] sm:$0xf]
      %v1313 = vld [vmem:[%s4 + $0xc] sm:$0xf]
      %v1314 = vpack.c.bf16 %v1123, %v1118
      %v1315 = vpack.c.bf16 %v1124, %v1119
      %v1316 = vpack.c.bf16 %v1125, %v1120
      %v1317 = vpack.c.bf16 %v1126, %v1121
      %v1318 = vpack.c.bf16 %v1127, %v1122
      %v1319 = vpack.c.bf16 %v1133, %v1128
      %v1320 = vpack.c.bf16 %v1134, %v1129
      %v1321 = vpack.c.bf16 %v1135, %v1130
      %v1322 = vpack.c.bf16 %v1136, %v1131
      %v1323 = vpack.c.bf16 %v1137, %v1132
      %v1324 = vpack.c.bf16 %v1202, %v1198
      %v1325 = vpack.c.bf16 %v1203, %v1199
      %v1326 = vpack.c.bf16 %v1204, %v1200
      %v1327 = vpack.c.bf16 %v1205, %v1201
      %v1328 = vpack.c.bf16 %v1177, %v1167
      %v1329 = vpack.c.bf16 %v1210, %v1206
      %v1330 = vpack.c.bf16 %v1211, %v1207
      %v1331 = vpack.c.bf16 %v1212, %v1208
      %v1332 = vpack.c.bf16 %v1213, %v1209
      %v1333 = vpack.c.bf16 %v1197, %v1187
      %v1334 = vpack.c.bf16 %v1278, %v1274
      %v1335 = vpack.c.bf16 %v1279, %v1275
      %v1336 = vpack.c.bf16 %v1280, %v1276
      %v1337 = vpack.c.bf16 %v1281, %v1277
      %v1338 = vpack.c.bf16 %v1253, %v1243
      %v1339 = vpack.c.bf16 %v1286, %v1282
      %v1340 = vpack.c.bf16 %v1287, %v1283
      %v1341 = vpack.c.bf16 %v1288, %v1284
      %v1342 = vpack.c.bf16 %v1289, %v1285
      %v1343 = vpack.c.bf16 %v1273, %v1263
      %v1348 = vunpack.c.l.b16 %v1310
      %v1349 = vunpack.c.l.b16 %v1311
      %v1350 = vunpack.c.l.b16 %v1312
      %v1351 = vunpack.c.l.b16 %v1313
      %v1352 = vpack.c.b16 %v1349, %v1348
      %v1353 = vpack.c.b16 %v1351, %v1350
      %1384 = vrot.lane.b32.xlu0 %v1314, 25
      %v1385 = vpop.permute.xlu0 %1384
      %1386 = vrot.lane.b32.xlu0 %v1315, 25
      %v1387 = vpop.permute.xlu0 %1386
      %1388 = vrot.lane.b32.xlu0 %v1316, 25
      %v1389 = vpop.permute.xlu0 %1388
      %1390 = vrot.lane.b32.xlu0 %v1317, 25
      %v1391 = vpop.permute.xlu0 %1390
      %1392 = vrot.lane.b32.xlu0 %v1318, 25
      %v1393 = vpop.permute.xlu0 %1392
      %1394 = vrot.lane.b32.xlu0 %v1319, 25
      %v1395 = vpop.permute.xlu0 %1394
      %1396 = vrot.lane.b32.xlu0 %v1320, 25
      %v1397 = vpop.permute.xlu0 %1396
      %1398 = vrot.lane.b32.xlu0 %v1321, 25
      %v1399 = vpop.permute.xlu0 %1398
      %1400 = vrot.lane.b32.xlu0 %v1322, 25
      %v1401 = vpop.permute.xlu0 %1400
      %1402 = vrot.lane.b32.xlu0 %v1323, 25
      %v1403 = vpop.permute.xlu0 %1402
      %1404 = vrot.lane.b32.xlu0 %v1324, 25
      %v1405 = vpop.permute.xlu0 %1404
      %1406 = vrot.lane.b32.xlu0 %v1325, 25
      %v1407 = vpop.permute.xlu0 %1406
      %1408 = vrot.lane.b32.xlu0 %v1326, 25
      %v1409 = vpop.permute.xlu0 %1408
      %1410 = vrot.lane.b32.xlu0 %v1327, 25
      %v1411 = vpop.permute.xlu0 %1410
      %1412 = vrot.lane.b32.xlu0 %v1328, 25
      %v1413 = vpop.permute.xlu0 %1412
      %1414 = vrot.lane.b32.xlu0 %v1329, 25
      %v1415 = vpop.permute.xlu0 %1414
      %1416 = vrot.lane.b32.xlu0 %v1330, 25
      %v1417 = vpop.permute.xlu0 %1416
      %1418 = vrot.lane.b32.xlu0 %v1331, 25
      %v1419 = vpop.permute.xlu0 %1418
      %1420 = vrot.lane.b32.xlu0 %v1332, 25
      %v1421 = vpop.permute.xlu0 %1420
      %1422 = vrot.lane.b32.xlu0 %v1333, 25
      %v1423 = vpop.permute.xlu0 %1422
      %1424 = vrot.lane.b32.xlu0 %v1334, 25
      %v1425 = vpop.permute.xlu0 %1424
      %1426 = vrot.lane.b32.xlu0 %v1335, 25
      %v1427 = vpop.permute.xlu0 %1426
      %1428 = vrot.lane.b32.xlu0 %v1336, 25
      %v1429 = vpop.permute.xlu0 %1428
      %1430 = vrot.lane.b32.xlu0 %v1337, 25
      %v1431 = vpop.permute.xlu0 %1430
      %1432 = vrot.lane.b32.xlu0 %v1338, 25
      %v1433 = vpop.permute.xlu0 %1432
      %1434 = vrot.lane.b32.xlu0 %v1339, 25
      %v1435 = vpop.permute.xlu0 %1434
      %1436 = vrot.lane.b32.xlu0 %v1340, 25
      %v1437 = vpop.permute.xlu0 %1436
      %1438 = vrot.lane.b32.xlu0 %v1341, 25
      %v1439 = vpop.permute.xlu0 %1438
      %1440 = vrot.lane.b32.xlu0 %v1342, 25
      %v1441 = vpop.permute.xlu0 %1440
      %1442 = vrot.lane.b32.xlu0 %v1343, 25
      %v1443 = vpop.permute.xlu0 %1442
      %v1444 = vsel %vm494, %v1385, %v1387
      %v1445 = vsel %vm494, %v1387, %v1389
      %v1446 = vsel %vm494, %v1389, %v1391
      %v1447 = vsel %vm494, %v1391, %v1393
      %v1448 = vsel %vm494, %v1395, %v1397
      %v1449 = vsel %vm494, %v1397, %v1399
      %v1450 = vsel %vm494, %v1399, %v1401
      %v1451 = vsel %vm494, %v1401, %v1403
      %v1452 = vsel %vm494, %v1405, %v1407
      %v1453 = vsel %vm494, %v1407, %v1409
      %v1454 = vsel %vm494, %v1409, %v1411
      %v1455 = vsel %vm494, %v1411, %v1413
      %v1456 = vsel %vm494, %v1415, %v1417
      %v1457 = vsel %vm494, %v1417, %v1419
      %v1458 = vsel %vm494, %v1419, %v1421
      %v1459 = vsel %vm494, %v1421, %v1423
      %v1460 = vsel %vm494, %v1425, %v1427
      %v1461 = vsel %vm494, %v1427, %v1429
      %v1462 = vsel %vm494, %v1429, %v1431
      %v1463 = vsel %vm494, %v1431, %v1433
      %v1464 = vsel %vm494, %v1435, %v1437
      %v1465 = vsel %vm494, %v1437, %v1439
      %v1466 = vsel %vm494, %v1439, %v1441
      %v1467 = vsel %vm494, %v1441, %v1443
      %vm1492 = vcmask 785408
      %v1494 = vsel %vm1492, %v1352, 0
      %v1497 = vsel %vm1492, %v1353, 0
      %1499 = vmatprep.subr.bf16.mxu0 %v1445
      %1500 = vmatpush1.bf16.msra.mxu0 %v1444
      %1501 = vmatprep.subr.bf16.mxu0 %v1449
      %1502 = vmatpush1.bf16.msra.mxu0 %v1448
      %1503 = vmatprep.subr.bf16.mxu0 %v1453
      %1504 = vmatpush1.bf16.msra.mxu0 %v1452
      %1505 = vmatprep.subr.bf16.mxu0 %v1457
      %1506 = vmatpush1.bf16.msra.mxu0 %v1456
      %1507 = vmatprep.subr.bf16.mxu0 %v1461
      %1508 = vmatpush1.bf16.msra.mxu0 %v1460
      %1509 = vmatprep.subr.bf16.mxu0 %v1465
      %1510 = vmatpush1.bf16.msra.mxu0 %v1464
      %1511 = vmatprep.subr.bf16.mxu0 0
      %1512 = vmatpush1.bf16.msra.mxu0 0
      %1513 = vmatprep.subr.bf16.mxu0 0
      %1514 = vmatpush1.bf16.msra.mxu0 0
      %1515 = vmatprep.subr.bf16.mxu0 0
      %1516 = vmatpush1.bf16.msra.mxu0 0
      %1517 = vmatprep.subr.bf16.mxu0 0
      %1518 = vmatpush1.bf16.msra.mxu0 0
      %1519 = vmatprep.subr.bf16.mxu0 0
      %1520 = vmatpush1.bf16.msra.mxu0 0
      %1521 = vmatprep.subr.bf16.mxu0 0
      %1522 = vmatpush1.bf16.msra.mxu0 0
      %1523 = vmatprep.subr.bf16.mxu0 0
      %1524 = vmatpush1.bf16.msra.mxu0 0
      %1525 = vmatprep.subr.bf16.mxu0 0
      %1526 = vmatpush1.bf16.msra.mxu0 0
      %1527 = vmatprep.subr.bf16.mxu0 0
      %1528 = vmatpush1.bf16.msra.mxu0 0
      %1529 = vmatprep.subr.bf16.mxu0 0
      %1530 = vmatpush1.bf16.msra.mxu0 0
      %1531 = vmatprep.mubr.bf16.mxu0 0
      %1532 = vmatmul.mubr.bf16.gmra.mrb[0].mxu0 %v1494
      %v1533 = vpop.f32.mrb[0].mxu0
      %v1534 = vadd.f32 0.0, %v1533
      %v1535 = vpop.f32.mrb[0].mxu0
      %v1536 = vadd.f32 0.0, %v1535
      %v1537 = vpop.f32.mrb[0].mxu0
      %v1538 = vadd.f32 0.0, %v1537
      %v1539 = vpop.f32.mrb[0].mxu0
      %v1540 = vadd.f32 0.0, %v1539
      %1541 = vmatprep.mubr.bf16.mxu0 0
      %1542 = vmatmul.mubr.bf16.gmra.mrb[0].mxu0 %v1497
      %v1543 = vpop.f32.mrb[0].mxu0
      %v1544 = vadd.f32 0.0, %v1543
      %v1545 = vpop.f32.mrb[0].mxu0
      %v1546 = vadd.f32 0.0, %v1545
      %v1547 = vpop.f32.mrb[0].mxu0
      %v1548 = vadd.f32 0.0, %v1547
      %v1549 = vpop.f32.mrb[0].mxu0
      %v1550 = vadd.f32 0.0, %v1549
      %1551 = vdwg.mxu0
      %1552 = vmatprep.subr.bf16.mxu0 %v1447
      %1553 = vmatpush1.bf16.msra.mxu0 %v1446
      %1554 = vmatprep.subr.bf16.mxu0 %v1451
      %1555 = vmatpush1.bf16.msra.mxu0 %v1450
      %1556 = vmatprep.subr.bf16.mxu0 %v1455
      %1557 = vmatpush1.bf16.msra.mxu0 %v1454
      %1558 = vmatprep.subr.bf16.mxu0 %v1459
      %1559 = vmatpush1.bf16.msra.mxu0 %v1458
      %1560 = vmatprep.subr.bf16.mxu0 %v1463
      %1561 = vmatpush1.bf16.msra.mxu0 %v1462
      %1562 = vmatprep.subr.bf16.mxu0 %v1467
      %1563 = vmatpush1.bf16.msra.mxu0 %v1466
      %1564 = vmatprep.subr.bf16.mxu0 0
      %1565 = vmatpush1.bf16.msra.mxu0 0
      %1566 = vmatprep.subr.bf16.mxu0 0
      %1567 = vmatpush1.bf16.msra.mxu0 0
      %1568 = vmatprep.subr.bf16.mxu0 0
      %1569 = vmatpush1.bf16.msra.mxu0 0
      %1570 = vmatprep.subr.bf16.mxu0 0
      %1571 = vmatpush1.bf16.msra.mxu0 0
      %1572 = vmatprep.subr.bf16.mxu0 0
      %1573 = vmatpush1.bf16.msra.mxu0 0
      %1574 = vmatprep.subr.bf16.mxu0 0
      %1575 = vmatpush1.bf16.msra.mxu0 0
      %1576 = vmatprep.subr.bf16.mxu0 0
      %1577 = vmatpush1.bf16.msra.mxu0 0
      %1578 = vmatprep.subr.bf16.mxu0 0
      %1579 = vmatpush1.bf16.msra.mxu0 0
      %1580 = vmatprep.subr.bf16.mxu0 0
      %1581 = vmatpush1.bf16.msra.mxu0 0
      %1582 = vmatprep.subr.bf16.mxu0 0
      %1583 = vmatpush1.bf16.msra.mxu0 0
      %1584 = vmatprep.mubr.bf16.mxu0 0
      %1585 = vmatmul.mubr.bf16.gmra.mrb[0].mxu0 %v1494
      %v1586 = vpop.f32.mrb[0].mxu0
      %v1587 = vadd.f32 0.0, %v1586
      %v1588 = vpop.f32.mrb[0].mxu0
      %v1589 = vadd.f32 0.0, %v1588
      %v1590 = vpop.f32.mrb[0].mxu0
      %v1591 = vadd.f32 0.0, %v1590
      %v1592 = vpop.f32.mrb[0].mxu0
      %v1593 = vadd.f32 0.0, %v1592
      %1594 = vmatprep.mubr.bf16.mxu0 0
      %1595 = vmatmul.mubr.bf16.gmra.mrb[0].mxu0 %v1497
      %v1596 = vpop.f32.mrb[0].mxu0
      %v1597 = vadd.f32 0.0, %v1596
      %v1598 = vpop.f32.mrb[0].mxu0
      %v1599 = vadd.f32 0.0, %v1598
      %v1600 = vpop.f32.mrb[0].mxu0
      %v1601 = vadd.f32 0.0, %v1600
      %v1602 = vpop.f32.mrb[0].mxu0
      %v1603 = vadd.f32 0.0, %v1602
      %1604 = vdwg.mxu0
      %v1605 = vadd.f32 %v1101, %v1534
      %v1606 = vadd.f32 %v1101, %v1536
      %v1607 = vadd.f32 %v1101, %v1587
      %v1608 = vadd.f32 %v1101, %v1589
      %v1609 = vadd.f32 %v1106, %v1538
      %v1610 = vadd.f32 %v1106, %v1540
      %v1611 = vadd.f32 %v1106, %v1591
      %v1612 = vadd.f32 %v1106, %v1593
      %v1613 = vadd.f32 %v1111, %v1544
      %v1614 = vadd.f32 %v1111, %v1546
      %v1615 = vadd.f32 %v1111, %v1597
      %v1616 = vadd.f32 %v1111, %v1599
      %v1617 = vadd.f32 %v1116, %v1548
      %v1618 = vadd.f32 %v1116, %v1550
      %v1619 = vadd.f32 %v1116, %v1601
      %v1620 = vadd.f32 %v1116, %v1603
      %s1629 = scalar_lea.vmem %s4, 16
      %v1630 = vld [vmem:[%s1629] sm:$0xf]
      %v1631 = vld [vmem:[%s1629 + $0x4] sm:$0xf]
      %v1632 = vld [vmem:[%s1629 + $0x8] sm:$0xf]
      %v1633 = vld [vmem:[%s1629 + $0xc] sm:$0xf]
      %v1634 = vpack.c.bf16 %v1171, %v1161
      %v1635 = vpack.c.bf16 %v1191, %v1181
      %v1636 = vpack.c.bf16 %v1247, %v1237
      %v1637 = vpack.c.bf16 %v1267, %v1257
      %v1642 = vunpack.c.l.b16 %v1630
      %v1643 = vunpack.c.l.b16 %v1631
      %v1644 = vunpack.c.l.b16 %v1632
      %v1645 = vunpack.c.l.b16 %v1633
      %v1646 = vpack.c.b16 %v1643, %v1642
      %v1647 = vpack.c.b16 %v1645, %v1644
      %1652 = vrot.lane.b32.xlu0 %v1314, 1
      %v1653 = vpop.permute.xlu0 %1652
      %1654 = vrot.lane.b32.xlu0 %v1315, 1
      %v1655 = vpop.permute.xlu0 %1654
      %1656 = vrot.lane.b32.xlu0 %v1316, 1
      %v1657 = vpop.permute.xlu0 %1656
      %1658 = vrot.lane.b32.xlu0 %v1317, 1
      %v1659 = vpop.permute.xlu0 %1658
      %1660 = vrot.lane.b32.xlu0 %v1318, 1
      %v1661 = vpop.permute.xlu0 %1660
      %1662 = vrot.lane.b32.xlu0 %v1319, 1
      %v1663 = vpop.permute.xlu0 %1662
      %1664 = vrot.lane.b32.xlu0 %v1320, 1
      %v1665 = vpop.permute.xlu0 %1664
      %1666 = vrot.lane.b32.xlu0 %v1321, 1
      %v1667 = vpop.permute.xlu0 %1666
      %1668 = vrot.lane.b32.xlu0 %v1322, 1
      %v1669 = vpop.permute.xlu0 %1668
      %1670 = vrot.lane.b32.xlu0 %v1323, 1
      %v1671 = vpop.permute.xlu0 %1670
      %1672 = vrot.lane.b32.xlu0 %v1634, 1
      %v1673 = vpop.permute.xlu0 %1672
      %1674 = vrot.lane.b32.xlu0 %v1325, 1
      %v1675 = vpop.permute.xlu0 %1674
      %1676 = vrot.lane.b32.xlu0 %v1326, 1
      %v1677 = vpop.permute.xlu0 %1676
      %1678 = vrot.lane.b32.xlu0 %v1327, 1
      %v1679 = vpop.permute.xlu0 %1678
      %1680 = vrot.lane.b32.xlu0 %v1328, 1
      %v1681 = vpop.permute.xlu0 %1680
      %1682 = vrot.lane.b32.xlu0 %v1635, 1
      %v1683 = vpop.permute.xlu0 %1682
      %1684 = vrot.lane.b32.xlu0 %v1330, 1
      %v1685 = vpop.permute.xlu0 %1684
      %1686 = vrot.lane.b32.xlu0 %v1331, 1
      %v1687 = vpop.permute.xlu0 %1686
      %1688 = vrot.lane.b32.xlu0 %v1332, 1
      %v1689 = vpop.permute.xlu0 %1688
      %1690 = vrot.lane.b32.xlu0 %v1333, 1
      %v1691 = vpop.permute.xlu0 %1690
      %1692 = vrot.lane.b32.xlu0 %v1636, 1
      %v1693 = vpop.permute.xlu0 %1692
      %1694 = vrot.lane.b32.xlu0 %v1335, 1
      %v1695 = vpop.permute.xlu0 %1694
      %1696 = vrot.lane.b32.xlu0 %v1336, 1
      %v1697 = vpop.permute.xlu0 %1696
      %1698 = vrot.lane.b32.xlu0 %v1337, 1
      %v1699 = vpop.permute.xlu0 %1698
      %1700 = vrot.lane.b32.xlu0 %v1338, 1
      %v1701 = vpop.permute.xlu0 %1700
      %1702 = vrot.lane.b32.xlu0 %v1637, 1
      %v1703 = vpop.permute.xlu0 %1702
      %1704 = vrot.lane.b32.xlu0 %v1340, 1
      %v1705 = vpop.permute.xlu0 %1704
      %1706 = vrot.lane.b32.xlu0 %v1341, 1
      %v1707 = vpop.permute.xlu0 %1706
      %1708 = vrot.lane.b32.xlu0 %v1342, 1
      %v1709 = vpop.permute.xlu0 %1708
      %1710 = vrot.lane.b32.xlu0 %v1343, 1
      %v1711 = vpop.permute.xlu0 %1710
      %v1712 = vsel %vm690, %v1653, %v1655
      %v1713 = vsel %vm690, %v1655, %v1657
      %v1714 = vsel %vm690, %v1657, %v1659
      %v1715 = vsel %vm690, %v1659, %v1661
      %v1716 = vsel %vm690, %v1663, %v1665
      %v1717 = vsel %vm690, %v1665, %v1667
      %v1718 = vsel %vm690, %v1667, %v1669
      %v1719 = vsel %vm690, %v1669, %v1671
      %v1720 = vsel %vm690, %v1673, %v1675
      %v1721 = vsel %vm690, %v1675, %v1677
      %v1722 = vsel %vm690, %v1677, %v1679
      %v1723 = vsel %vm690, %v1679, %v1681
      %v1724 = vsel %vm690, %v1683, %v1685
      %v1725 = vsel %vm690, %v1685, %v1687
      %v1726 = vsel %vm690, %v1687, %v1689
      %v1727 = vsel %vm690, %v1689, %v1691
      %v1728 = vsel %vm690, %v1693, %v1695
      %v1729 = vsel %vm690, %v1695, %v1697
      %v1730 = vsel %vm690, %v1697, %v1699
      %v1731 = vsel %vm690, %v1699, %v1701
      %v1732 = vsel %vm690, %v1703, %v1705
      %v1733 = vsel %vm690, %v1705, %v1707
      %v1734 = vsel %vm690, %v1707, %v1709
      %v1735 = vsel %vm690, %v1709, %v1711
      %v1761 = vsel %vm1492, %v1646, 0
      %v1764 = vsel %vm1492, %v1647, 0
      %1766 = vmatprep.subr.bf16.mxu0 %v1713
      %1767 = vmatpush1.bf16.msra.mxu0 %v1712
      %1768 = vmatprep.subr.bf16.mxu0 %v1717
      %1769 = vmatpush1.bf16.msra.mxu0 %v1716
      %1770 = vmatprep.subr.bf16.mxu0 %v1721
      %1771 = vmatpush1.bf16.msra.mxu0 %v1720
      %1772 = vmatprep.subr.bf16.mxu0 %v1725
      %1773 = vmatpush1.bf16.msra.mxu0 %v1724
      %1774 = vmatprep.subr.bf16.mxu0 %v1729
      %1775 = vmatpush1.bf16.msra.mxu0 %v1728
      %1776 = vmatprep.subr.bf16.mxu0 %v1733
      %1777 = vmatpush1.bf16.msra.mxu0 %v1732
      %1778 = vmatprep.subr.bf16.mxu0 0
      %1779 = vmatpush1.bf16.msra.mxu0 0
      %1780 = vmatprep.subr.bf16.mxu0 0
      %1781 = vmatpush1.bf16.msra.mxu0 0
      %1782 = vmatprep.subr.bf16.mxu0 0
      %1783 = vmatpush1.bf16.msra.mxu0 0
      %1784 = vmatprep.subr.bf16.mxu0 0
      %1785 = vmatpush1.bf16.msra.mxu0 0
      %1786 = vmatprep.subr.bf16.mxu0 0
      %1787 = vmatpush1.bf16.msra.mxu0 0
      %1788 = vmatprep.subr.bf16.mxu0 0
      %1789 = vmatpush1.bf16.msra.mxu0 0
      %1790 = vmatprep.subr.bf16.mxu0 0
      %1791 = vmatpush1.bf16.msra.mxu0 0
      %1792 = vmatprep.subr.bf16.mxu0 0
      %1793 = vmatpush1.bf16.msra.mxu0 0
      %1794 = vmatprep.subr.bf16.mxu0 0
      %1795 = vmatpush1.bf16.msra.mxu0 0
      %1796 = vmatprep.subr.bf16.mxu0 0
      %1797 = vmatpush1.bf16.msra.mxu0 0
      %1798 = vmatprep.mubr.bf16.mxu0 0
      %1799 = vmatmul.mubr.bf16.gmra.mrb[0].mxu0 %v1761
      %v1800 = vpop.f32.mrb[0].mxu0
      %v1801 = vadd.f32 0.0, %v1800
      %v1802 = vpop.f32.mrb[0].mxu0
      %v1803 = vadd.f32 0.0, %v1802
      %v1804 = vpop.f32.mrb[0].mxu0
      %v1805 = vadd.f32 0.0, %v1804
      %v1806 = vpop.f32.mrb[0].mxu0
      %v1807 = vadd.f32 0.0, %v1806
      %1808 = vmatprep.mubr.bf16.mxu0 0
      %1809 = vmatmul.mubr.bf16.gmra.mrb[0].mxu0 %v1764
      %v1810 = vpop.f32.mrb[0].mxu0
      %v1811 = vadd.f32 0.0, %v1810
      %v1812 = vpop.f32.mrb[0].mxu0
      %v1813 = vadd.f32 0.0, %v1812
      %v1814 = vpop.f32.mrb[0].mxu0
      %v1815 = vadd.f32 0.0, %v1814
      %v1816 = vpop.f32.mrb[0].mxu0
      %v1817 = vadd.f32 0.0, %v1816
      %1818 = vdwg.mxu0
      %1819 = vmatprep.subr.bf16.mxu0 %v1715
      %1820 = vmatpush1.bf16.msra.mxu0 %v1714
      %1821 = vmatprep.subr.bf16.mxu0 %v1719
      %1822 = vmatpush1.bf16.msra.mxu0 %v1718
      %1823 = vmatprep.subr.bf16.mxu0 %v1723
      %1824 = vmatpush1.bf16.msra.mxu0 %v1722
      %1825 = vmatprep.subr.bf16.mxu0 %v1727
      %1826 = vmatpush1.bf16.msra.mxu0 %v1726
      %1827 = vmatprep.subr.bf16.mxu0 %v1731
      %1828 = vmatpush1.bf16.msra.mxu0 %v1730
      %1829 = vmatprep.subr.bf16.mxu0 %v1735
      %1830 = vmatpush1.bf16.msra.mxu0 %v1734
      %1831 = vmatprep.subr.bf16.mxu0 0
      %1832 = vmatpush1.bf16.msra.mxu0 0
      %1833 = vmatprep.subr.bf16.mxu0 0
      %1834 = vmatpush1.bf16.msra.mxu0 0
      %1835 = vmatprep.subr.bf16.mxu0 0
      %1836 = vmatpush1.bf16.msra.mxu0 0
      %1837 = vmatprep.subr.bf16.mxu0 0
      %1838 = vmatpush1.bf16.msra.mxu0 0
      %1839 = vmatprep.subr.bf16.mxu0 0
      %1840 = vmatpush1.bf16.msra.mxu0 0
      %1841 = vmatprep.subr.bf16.mxu0 0
      %1842 = vmatpush1.bf16.msra.mxu0 0
      %1843 = vmatprep.subr.bf16.mxu0 0
      %1844 = vmatpush1.bf16.msra.mxu0 0
      %1845 = vmatprep.subr.bf16.mxu0 0
      %1846 = vmatpush1.bf16.msra.mxu0 0
      %1847 = vmatprep.subr.bf16.mxu0 0
      %1848 = vmatpush1.bf16.msra.mxu0 0
      %1849 = vmatprep.subr.bf16.mxu0 0
      %1850 = vmatpush1.bf16.msra.mxu0 0
      %1851 = vmatprep.mubr.bf16.mxu0 0
      %1852 = vmatmul.mubr.bf16.gmra.mrb[0].mxu0 %v1761
      %v1853 = vpop.f32.mrb[0].mxu0
      %v1854 = vadd.f32 0.0, %v1853
      %v1855 = vpop.f32.mrb[0].mxu0
      %v1856 = vadd.f32 0.0, %v1855
      %v1857 = vpop.f32.mrb[0].mxu0
      %v1858 = vadd.f32 0.0, %v1857
      %v1859 = vpop.f32.mrb[0].mxu0
      %v1860 = vadd.f32 0.0, %v1859
      %1861 = vmatprep.mubr.bf16.mxu0 0
      %1862 = vmatmul.mubr.bf16.gmra.mrb[0].mxu0 %v1764
      %v1863 = vpop.f32.mrb[0].mxu0
      %v1864 = vadd.f32 0.0, %v1863
      %v1865 = vpop.f32.mrb[0].mxu0
      %v1866 = vadd.f32 0.0, %v1865
      %v1867 = vpop.f32.mrb[0].mxu0
      %v1868 = vadd.f32 0.0, %v1867
      %v1869 = vpop.f32.mrb[0].mxu0
      %v1870 = vadd.f32 0.0, %v1869
      %1871 = vdwg.mxu0
      %v1872 = vadd.f32 %v1605, %v1801
      %v1873 = vadd.f32 %v1606, %v1803
      %v1874 = vadd.f32 %v1607, %v1854
      %v1875 = vadd.f32 %v1608, %v1856
      %v1876 = vadd.f32 %v1609, %v1805
      %v1877 = vadd.f32 %v1610, %v1807
      %v1878 = vadd.f32 %v1611, %v1858
      %v1879 = vadd.f32 %v1612, %v1860
      %v1880 = vadd.f32 %v1613, %v1811
      %v1881 = vadd.f32 %v1614, %v1813
      %v1882 = vadd.f32 %v1615, %v1864
      %v1883 = vadd.f32 %v1616, %v1866
      %v1884 = vadd.f32 %v1617, %v1815
      %v1885 = vadd.f32 %v1618, %v1817
      %v1886 = vadd.f32 %v1619, %v1868
      %v1887 = vadd.f32 %v1620, %v1870
      %s1888 = scalar_lea.vmem %s4, 32
      %v1889 = vld [vmem:[%s1888] sm:$0xf]
      %v1890 = vld [vmem:[%s1888 + $0x4] sm:$0xf]
      %v1891 = vld [vmem:[%s1888 + $0x8] sm:$0xf]
      %v1892 = vld [vmem:[%s1888 + $0xc] sm:$0xf]
      %v1897 = vunpack.c.l.b16 %v1889
      %v1898 = vunpack.c.l.b16 %v1890
      %v1899 = vunpack.c.l.b16 %v1891
      %v1900 = vunpack.c.l.b16 %v1892
      %v1901 = vpack.c.b16 %v1898, %v1897
      %v1902 = vpack.c.b16 %v1900, %v1899
      %1903 = vrot.lane.b32.xlu0 %v1315, 105
      %v1904 = vpop.permute.xlu0 %1903
      %1905 = vrot.lane.b32.xlu0 %v1316, 105
      %v1906 = vpop.permute.xlu0 %1905
      %1907 = vrot.lane.b32.xlu0 %v1317, 105
      %v1908 = vpop.permute.xlu0 %1907
      %1909 = vrot.lane.b32.xlu0 %v1318, 105
      %v1910 = vpop.permute.xlu0 %1909
      %1911 = vrot.lane.b32.xlu0 %v1320, 105
      %v1912 = vpop.permute.xlu0 %1911
      %1913 = vrot.lane.b32.xlu0 %v1321, 105
      %v1914 = vpop.permute.xlu0 %1913
      %1915 = vrot.lane.b32.xlu0 %v1322, 105
      %v1916 = vpop.permute.xlu0 %1915
      %1917 = vrot.lane.b32.xlu0 %v1323, 105
      %v1918 = vpop.permute.xlu0 %1917
      %1919 = vrot.lane.b32.xlu0 %v1325, 105
      %v1920 = vpop.permute.xlu0 %1919
      %1921 = vrot.lane.b32.xlu0 %v1326, 105
      %v1922 = vpop.permute.xlu0 %1921
      %1923 = vrot.lane.b32.xlu0 %v1327, 105
      %v1924 = vpop.permute.xlu0 %1923
      %1925 = vrot.lane.b32.xlu0 %v1328, 105
      %v1926 = vpop.permute.xlu0 %1925
      %1927 = vrot.lane.b32.xlu0 %v1330, 105
      %v1928 = vpop.permute.xlu0 %1927
      %1929 = vrot.lane.b32.xlu0 %v1331, 105
      %v1930 = vpop.permute.xlu0 %1929
      %1931 = vrot.lane.b32.xlu0 %v1332, 105
      %v1932 = vpop.permute.xlu0 %1931
      %1933 = vrot.lane.b32.xlu0 %v1333, 105
      %v1934 = vpop.permute.xlu0 %1933
      %1935 = vrot.lane.b32.xlu0 %v1335, 105
      %v1936 = vpop.permute.xlu0 %1935
      %1937 = vrot.lane.b32.xlu0 %v1336, 105
      %v1938 = vpop.permute.xlu0 %1937
      %1939 = vrot.lane.b32.xlu0 %v1337, 105
      %v1940 = vpop.permute.xlu0 %1939
      %1941 = vrot.lane.b32.xlu0 %v1338, 105
      %v1942 = vpop.permute.xlu0 %1941
      %1943 = vrot.lane.b32.xlu0 %v1340, 105
      %v1944 = vpop.permute.xlu0 %1943
      %1945 = vrot.lane.b32.xlu0 %v1341, 105
      %v1946 = vpop.permute.xlu0 %1945
      %1947 = vrot.lane.b32.xlu0 %v1342, 105
      %v1948 = vpop.permute.xlu0 %1947
      %1949 = vrot.lane.b32.xlu0 %v1343, 105
      %v1950 = vpop.permute.xlu0 %1949
      %v1951 = vsel %vm874, %v1904, %v1906
      %v1952 = vsel %vm874, %v1906, %v1908
      %v1953 = vsel %vm874, %v1908, %v1910
      %v1954 = vsel %vm874, %v1912, %v1914
      %v1955 = vsel %vm874, %v1914, %v1916
      %v1956 = vsel %vm874, %v1916, %v1918
      %v1957 = vsel %vm874, %v1920, %v1922
      %v1958 = vsel %vm874, %v1922, %v1924
      %v1959 = vsel %vm874, %v1924, %v1926
      %v1960 = vsel %vm874, %v1928, %v1930
      %v1961 = vsel %vm874, %v1930, %v1932
      %v1962 = vsel %vm874, %v1932, %v1934
      %v1963 = vsel %vm874, %v1936, %v1938
      %v1964 = vsel %vm874, %v1938, %v1940
      %v1965 = vsel %vm874, %v1940, %v1942
      %v1966 = vsel %vm874, %v1944, %v1946
      %v1967 = vsel %vm874, %v1946, %v1948
      %v1968 = vsel %vm874, %v1948, %v1950
      %v1994 = vsel %vm1492, %v1901, 0
      %v1997 = vsel %vm1492, %v1902, 0
      %1999 = vmatprep.subr.bf16.mxu0 %v1952
      %2000 = vmatpush1.bf16.msra.mxu0 %v1951
      %2001 = vmatprep.subr.bf16.mxu0 %v1955
      %2002 = vmatpush1.bf16.msra.mxu0 %v1954
      %2003 = vmatprep.subr.bf16.mxu0 %v1958
      %2004 = vmatpush1.bf16.msra.mxu0 %v1957
      %2005 = vmatprep.subr.bf16.mxu0 %v1961
      %2006 = vmatpush1.bf16.msra.mxu0 %v1960
      %2007 = vmatprep.subr.bf16.mxu0 %v1964
      %2008 = vmatpush1.bf16.msra.mxu0 %v1963
      %2009 = vmatprep.subr.bf16.mxu0 %v1967
      %2010 = vmatpush1.bf16.msra.mxu0 %v1966
      %2011 = vmatprep.subr.bf16.mxu0 0
      %2012 = vmatpush1.bf16.msra.mxu0 0
      %2013 = vmatprep.subr.bf16.mxu0 0
      %2014 = vmatpush1.bf16.msra.mxu0 0
      %2015 = vmatprep.subr.bf16.mxu0 0
      %2016 = vmatpush1.bf16.msra.mxu0 0
      %2017 = vmatprep.subr.bf16.mxu0 0
      %2018 = vmatpush1.bf16.msra.mxu0 0
      %2019 = vmatprep.subr.bf16.mxu0 0
      %2020 = vmatpush1.bf16.msra.mxu0 0
      %2021 = vmatprep.subr.bf16.mxu0 0
      %2022 = vmatpush1.bf16.msra.mxu0 0
      %2023 = vmatprep.subr.bf16.mxu0 0
      %2024 = vmatpush1.bf16.msra.mxu0 0
      %2025 = vmatprep.subr.bf16.mxu0 0
      %2026 = vmatpush1.bf16.msra.mxu0 0
      %2027 = vmatprep.subr.bf16.mxu0 0
      %2028 = vmatpush1.bf16.msra.mxu0 0
      %2029 = vmatprep.subr.bf16.mxu0 0
      %2030 = vmatpush1.bf16.msra.mxu0 0
      %2031 = vmatprep.mubr.bf16.mxu0 0
      %2032 = vmatmul.mubr.bf16.gmra.mrb[0].mxu0 %v1994
      %v2033 = vpop.f32.mrb[0].mxu0
      %v2034 = vadd.f32 0.0, %v2033
      %v2035 = vpop.f32.mrb[0].mxu0
      %v2036 = vadd.f32 0.0, %v2035
      %v2037 = vpop.f32.mrb[0].mxu0
      %v2038 = vadd.f32 0.0, %v2037
      %v2039 = vpop.f32.mrb[0].mxu0
      %v2040 = vadd.f32 0.0, %v2039
      %2041 = vmatprep.mubr.bf16.mxu0 0
      %2042 = vmatmul.mubr.bf16.gmra.mrb[0].mxu0 %v1997
      %v2043 = vpop.f32.mrb[0].mxu0
      %v2044 = vadd.f32 0.0, %v2043
      %v2045 = vpop.f32.mrb[0].mxu0
      %v2046 = vadd.f32 0.0, %v2045
      %v2047 = vpop.f32.mrb[0].mxu0
      %v2048 = vadd.f32 0.0, %v2047
      %v2049 = vpop.f32.mrb[0].mxu0
      %v2050 = vadd.f32 0.0, %v2049
      %2051 = vdwg.mxu0
      %2052 = vmatprep.subr.bf16.mxu0 %v1910
      %2053 = vmatpush1.bf16.msra.mxu0 %v1953
      %2054 = vmatprep.subr.bf16.mxu0 %v1918
      %2055 = vmatpush1.bf16.msra.mxu0 %v1956
      %2056 = vmatprep.subr.bf16.mxu0 %v1926
      %2057 = vmatpush1.bf16.msra.mxu0 %v1959
      %2058 = vmatprep.subr.bf16.mxu0 %v1934
      %2059 = vmatpush1.bf16.msra.mxu0 %v1962
      %2060 = vmatprep.subr.bf16.mxu0 %v1942
      %2061 = vmatpush1.bf16.msra.mxu0 %v1965
      %2062 = vmatprep.subr.bf16.mxu0 %v1950
      %2063 = vmatpush1.bf16.msra.mxu0 %v1968
      %2064 = vmatprep.subr.bf16.mxu0 0
      %2065 = vmatpush1.bf16.msra.mxu0 0
      %2066 = vmatprep.subr.bf16.mxu0 0
      %2067 = vmatpush1.bf16.msra.mxu0 0
      %2068 = vmatprep.subr.bf16.mxu0 0
      %2069 = vmatpush1.bf16.msra.mxu0 0
      %2070 = vmatprep.subr.bf16.mxu0 0
      %2071 = vmatpush1.bf16.msra.mxu0 0
      %2072 = vmatprep.subr.bf16.mxu0 0
      %2073 = vmatpush1.bf16.msra.mxu0 0
      %2074 = vmatprep.subr.bf16.mxu0 0
      %2075 = vmatpush1.bf16.msra.mxu0 0
      %2076 = vmatprep.subr.bf16.mxu0 0
      %2077 = vmatpush1.bf16.msra.mxu0 0
      %2078 = vmatprep.subr.bf16.mxu0 0
      %2079 = vmatpush1.bf16.msra.mxu0 0
      %2080 = vmatprep.subr.bf16.mxu0 0
      %2081 = vmatpush1.bf16.msra.mxu0 0
      %2082 = vmatprep.subr.bf16.mxu0 0
      %2083 = vmatpush1.bf16.msra.mxu0 0
      %2084 = vmatprep.mubr.bf16.mxu0 0
      %2085 = vmatmul.mubr.bf16.gmra.mrb[0].mxu0 %v1994
      %v2086 = vpop.f32.mrb[0].mxu0
      %v2087 = vadd.f32 0.0, %v2086
      %v2088 = vpop.f32.mrb[0].mxu0
      %v2089 = vadd.f32 0.0, %v2088
      %v2090 = vpop.f32.mrb[0].mxu0
      %v2091 = vadd.f32 0.0, %v2090
      %v2092 = vpop.f32.mrb[0].mxu0
      %v2093 = vadd.f32 0.0, %v2092
      %2094 = vmatprep.mubr.bf16.mxu0 0
      %2095 = vmatmul.mubr.bf16.gmra.mrb[0].mxu0 %v1997
      %v2096 = vpop.f32.mrb[0].mxu0
      %v2097 = vadd.f32 0.0, %v2096
      %v2098 = vpop.f32.mrb[0].mxu0
      %v2099 = vadd.f32 0.0, %v2098
      %v2100 = vpop.f32.mrb[0].mxu0
      %v2101 = vadd.f32 0.0, %v2100
      %v2102 = vpop.f32.mrb[0].mxu0
      %v2103 = vadd.f32 0.0, %v2102
      %2104 = vdwg.mxu0
      %v2105 = vadd.f32 %v1872, %v2034
      %v2106 = vadd.f32 %v1873, %v2036
      %v2107 = vadd.f32 %v1874, %v2087
      %v2108 = vadd.f32 %v1875, %v2089
      %v2109 = vadd.f32 %v1876, %v2038
      %v2110 = vadd.f32 %v1877, %v2040
      %v2111 = vadd.f32 %v1878, %v2091
      %v2112 = vadd.f32 %v1879, %v2093
      %v2113 = vadd.f32 %v1880, %v2044
      %v2114 = vadd.f32 %v1881, %v2046
      %v2115 = vadd.f32 %v1882, %v2097
      %v2116 = vadd.f32 %v1883, %v2099
      %v2117 = vadd.f32 %v1884, %v2048
      %v2118 = vadd.f32 %v1885, %v2050
      %v2119 = vadd.f32 %v1886, %v2101
      %v2120 = vadd.f32 %v1887, %v2103
      %v2121 = vmax.f32 %v2105, 0.0
      %v2122 = vmax.f32 %v2106, 0.0
      %v2123 = vmax.f32 %v2107, 0.0
      %v2124 = vmax.f32 %v2108, 0.0
      %v2125 = vmax.f32 %v2109, 0.0
      %v2126 = vmax.f32 %v2110, 0.0
      %v2127 = vmax.f32 %v2111, 0.0
      %v2128 = vmax.f32 %v2112, 0.0
      %v2129 = vmax.f32 %v2113, 0.0
      %v2130 = vmax.f32 %v2114, 0.0
      %v2131 = vmax.f32 %v2115, 0.0
      %v2132 = vmax.f32 %v2116, 0.0
      %v2133 = vmax.f32 %v2117, 0.0
      %v2134 = vmax.f32 %v2118, 0.0
      %v2135 = vmax.f32 %v2119, 0.0
      %v2136 = vmax.f32 %v2120, 0.0
      %v2137 = vsel %vm1058, %v2121, 0.0
      %v2138 = vsel %vm1059, %v2122, 0.0
      %v2139 = vsel %vm1060, %v2123, 0.0
      %v2140 = vsel %vm1061, %v2124, 0.0
      %v2141 = vsel %vm1058, %v2125, 0.0
      %v2142 = vsel %vm1059, %v2126, 0.0
      %v2143 = vsel %vm1060, %v2127, 0.0
      %v2144 = vsel %vm1061, %v2128, 0.0
      %v2145 = vsel %vm1058, %v2129, 0.0
      %v2146 = vsel %vm1059, %v2130, 0.0
      %v2147 = vsel %vm1060, %v2131, 0.0
      %v2148 = vsel %vm1061, %v2132, 0.0
      %v2149 = vsel %vm1058, %v2133, 0.0
      %v2150 = vsel %vm1059, %v2134, 0.0
      %v2151 = vsel %vm1060, %v2135, 0.0
      %v2152 = vsel %vm1061, %v2136, 0.0
      %2153 = vst [vmem:[#allocation3 + $0x8] sm:$0xff] %v2137
      %2154 = vst [vmem:[#allocation3 + $0x10] sm:$0xff] %v2138
      %2155 = vst [vmem:[#allocation3 + $0x18] sm:$0xff] %v2139
      %2156 = vst.msk [vmem:[#allocation3 + $0x20] sm:$0xff] %vm314, %v2140
      %2157 = vst [vmem:[#allocation3 + $0x38] sm:$0xff] %v2141
      %2158 = vst [vmem:[#allocation3 + $0x40] sm:$0xff] %v2142
      %2159 = vst [vmem:[#allocation3 + $0x48] sm:$0xff] %v2143
      %2160 = vst.msk [vmem:[#allocation3 + $0x50] sm:$0xff] %vm314, %v2144
      %2161 = vst [vmem:[#allocation3 + $0x68] sm:$0xff] %v2145
      %2162 = vst [vmem:[#allocation3 + $0x70] sm:$0xff] %v2146
      %2163 = vst [vmem:[#allocation3 + $0x78] sm:$0xff] %v2147
      %2164 = vst.msk [vmem:[#allocation3 + $0x80] sm:$0xff] %vm314, %v2148
      %2165 = vst [vmem:[#allocation3 + $0x98] sm:$0xff] %v2149
      %2166 = vst [vmem:[#allocation3 + $0xa0] sm:$0xff] %v2150
      %2167 = vst [vmem:[#allocation3 + $0xa8] sm:$0xff] %v2151
      %2168 = vst.msk [vmem:[#allocation3 + $0xb0] sm:$0xff] %vm314, %v2152
      %s2169 = scalar_lea.vmem %s5, 32
      %v2170 = vld [vmem:[%s2169] sm:$0xff]
      %v2171 = vld [vmem:[%s2169 + $0x8] sm:$0xff]
      %v2172 = vld [vmem:[%s2169 + $0x10] sm:$0xff]
      %v2173 = vld [vmem:[%s2169 + $0x18] sm:$0xff]
      %2175 = vset.pattern.permute.xlu0 0
      %2176 = vperm.xlu0 %2175, %v2170
      %v2177 = vpop.permute.xlu0 %2176
      %2180 = vset.pattern.permute.xlu0 0
      %2181 = vperm.xlu0 %2180, %v2171
      %v2182 = vpop.permute.xlu0 %2181
      %2185 = vset.pattern.permute.xlu0 0
      %2186 = vperm.xlu0 %2185, %v2172
      %v2187 = vpop.permute.xlu0 %2186
      %2190 = vset.pattern.permute.xlu0 0
      %2191 = vperm.xlu0 %2190, %v2173
      %v2192 = vpop.permute.xlu0 %2191
      %v2194 = vld [vmem:[#allocation3] sm:$0xff]
      %v2195 = vld [vmem:[#allocation3 + $0x8] sm:$0xff]
      %v2196 = vld [vmem:[#allocation3 + $0x10] sm:$0xff]
      %v2197 = vld [vmem:[#allocation3 + $0x18] sm:$0xff]
      %v2198 = vld [vmem:[#allocation3 + $0x20] sm:$0xff]
      %v2199 = vld [vmem:[#allocation3 + $0x30] sm:$0xff]
      %v2200 = vld [vmem:[#allocation3 + $0x38] sm:$0xff]
      %v2201 = vld [vmem:[#allocation3 + $0x40] sm:$0xff]
      %v2202 = vld [vmem:[#allocation3 + $0x48] sm:$0xff]
      %v2203 = vld [vmem:[#allocation3 + $0x50] sm:$0xff]
      %v2204 = vld [vmem:[#allocation3 + $0x60] sm:$0xff]
      %v2205 = vld [vmem:[#allocation3 + $0x68] sm:$0xff]
      %v2206 = vld [vmem:[#allocation3 + $0x70] sm:$0xff]
      %v2207 = vld [vmem:[#allocation3 + $0x78] sm:$0xff]
      %v2208 = vld [vmem:[#allocation3 + $0x80] sm:$0xff]
      %v2209 = vld [vmem:[#allocation3 + $0x90] sm:$0xff]
      %v2210 = vld [vmem:[#allocation3 + $0x98] sm:$0xff]
      %v2211 = vld [vmem:[#allocation3 + $0xa0] sm:$0xff]
      %v2212 = vld [vmem:[#allocation3 + $0xa8] sm:$0xff]
      %v2213 = vld [vmem:[#allocation3 + $0xb0] sm:$0xff]
      %2234 = vrot.lane.b32.xlu0 %v2194, 127
      %v2235 = vpop.permute.xlu0 %2234
      %2236 = vrot.lane.b32.xlu0 %v2195, 127
      %v2237 = vpop.permute.xlu0 %2236
      %2238 = vrot.lane.b32.xlu0 %v2196, 127
      %v2239 = vpop.permute.xlu0 %2238
      %2240 = vrot.lane.b32.xlu0 %v2197, 127
      %v2241 = vpop.permute.xlu0 %2240
      %2242 = vrot.lane.b32.xlu0 %v2198, 127
      %v2243 = vpop.permute.xlu0 %2242
      %2244 = vrot.lane.b32.xlu0 %v2199, 127
      %v2245 = vpop.permute.xlu0 %2244
      %2246 = vrot.lane.b32.xlu0 %v2200, 127
      %v2247 = vpop.permute.xlu0 %2246
      %2248 = vrot.lane.b32.xlu0 %v2201, 127
      %v2249 = vpop.permute.xlu0 %2248
      %2250 = vrot.lane.b32.xlu0 %v2202, 127
      %v2251 = vpop.permute.xlu0 %2250
      %2252 = vrot.lane.b32.xlu0 %v2203, 127
      %v2253 = vpop.permute.xlu0 %2252
      %2254 = vrot.lane.b32.xlu0 %v2204, 127
      %v2255 = vpop.permute.xlu0 %2254
      %2256 = vrot.lane.b32.xlu0 %v2205, 127
      %v2257 = vpop.permute.xlu0 %2256
      %2258 = vrot.lane.b32.xlu0 %v2206, 127
      %v2259 = vpop.permute.xlu0 %2258
      %2260 = vrot.lane.b32.xlu0 %v2207, 127
      %v2261 = vpop.permute.xlu0 %2260
      %2262 = vrot.lane.b32.xlu0 %v2208, 127
      %v2263 = vpop.permute.xlu0 %2262
      %2264 = vrot.lane.b32.xlu0 %v2209, 127
      %v2265 = vpop.permute.xlu0 %2264
      %2266 = vrot.lane.b32.xlu0 %v2210, 127
      %v2267 = vpop.permute.xlu0 %2266
      %2268 = vrot.lane.b32.xlu0 %v2211, 127
      %v2269 = vpop.permute.xlu0 %2268
      %2270 = vrot.lane.b32.xlu0 %v2212, 127
      %v2271 = vpop.permute.xlu0 %2270
      %2272 = vrot.lane.b32.xlu0 %v2213, 127
      %v2273 = vpop.permute.xlu0 %2272
      %v2274 = vsel %vm410, %v2235, %v2237
      %v2275 = vsel %vm410, %v2237, %v2239
      %v2276 = vsel %vm410, %v2239, %v2241
      %v2277 = vsel %vm410, %v2241, %v2243
      %v2278 = vsel %vm410, %v2245, %v2247
      %v2279 = vsel %vm410, %v2247, %v2249
      %v2280 = vsel %vm410, %v2249, %v2251
      %v2281 = vsel %vm410, %v2251, %v2253
      %v2282 = vsel %vm410, %v2255, %v2257
      %v2283 = vsel %vm410, %v2257, %v2259
      %v2284 = vsel %vm410, %v2259, %v2261
      %v2285 = vsel %vm410, %v2261, %v2263
      %v2286 = vsel %vm410, %v2265, %v2267
      %v2287 = vsel %vm410, %v2267, %v2269
      %v2288 = vsel %vm410, %v2269, %v2271
      %v2289 = vsel %vm410, %v2271, %v2273
      %2310 = vrot.lane.b32.xlu0 %v2194, 126
      %v2311 = vpop.permute.xlu0 %2310
      %2312 = vrot.lane.b32.xlu0 %v2195, 126
      %v2313 = vpop.permute.xlu0 %2312
      %2314 = vrot.lane.b32.xlu0 %v2196, 126
      %v2315 = vpop.permute.xlu0 %2314
      %2316 = vrot.lane.b32.xlu0 %v2197, 126
      %v2317 = vpop.permute.xlu0 %2316
      %2318 = vrot.lane.b32.xlu0 %v2198, 126
      %v2319 = vpop.permute.xlu0 %2318
      %2320 = vrot.lane.b32.xlu0 %v2199, 126
      %v2321 = vpop.permute.xlu0 %2320
      %2322 = vrot.lane.b32.xlu0 %v2200, 126
      %v2323 = vpop.permute.xlu0 %2322
      %2324 = vrot.lane.b32.xlu0 %v2201, 126
      %v2325 = vpop.permute.xlu0 %2324
      %2326 = vrot.lane.b32.xlu0 %v2202, 126
      %v2327 = vpop.permute.xlu0 %2326
      %2328 = vrot.lane.b32.xlu0 %v2203, 126
      %v2329 = vpop.permute.xlu0 %2328
      %2330 = vrot.lane.b32.xlu0 %v2204, 126
      %v2331 = vpop.permute.xlu0 %2330
      %2332 = vrot.lane.b32.xlu0 %v2205, 126
      %v2333 = vpop.permute.xlu0 %2332
      %2334 = vrot.lane.b32.xlu0 %v2206, 126
      %v2335 = vpop.permute.xlu0 %2334
      %2336 = vrot.lane.b32.xlu0 %v2207, 126
      %v2337 = vpop.permute.xlu0 %2336
      %2338 = vrot.lane.b32.xlu0 %v2208, 126
      %v2339 = vpop.permute.xlu0 %2338
      %2340 = vrot.lane.b32.xlu0 %v2209, 126
      %v2341 = vpop.permute.xlu0 %2340
      %2342 = vrot.lane.b32.xlu0 %v2210, 126
      %v2343 = vpop.permute.xlu0 %2342
      %2344 = vrot.lane.b32.xlu0 %v2211, 126
      %v2345 = vpop.permute.xlu0 %2344
      %2346 = vrot.lane.b32.xlu0 %v2212, 126
      %v2347 = vpop.permute.xlu0 %2346
      %2348 = vrot.lane.b32.xlu0 %v2213, 126
      %v2349 = vpop.permute.xlu0 %2348
      %v2350 = vsel %vm430, %v2311, %v2313
      %v2351 = vsel %vm430, %v2313, %v2315
      %v2352 = vsel %vm430, %v2315, %v2317
      %v2353 = vsel %vm430, %v2317, %v2319
      %v2354 = vsel %vm430, %v2321, %v2323
      %v2355 = vsel %vm430, %v2323, %v2325
      %v2356 = vsel %vm430, %v2325, %v2327
      %v2357 = vsel %vm430, %v2327, %v2329
      %v2358 = vsel %vm430, %v2331, %v2333
      %v2359 = vsel %vm430, %v2333, %v2335
      %v2360 = vsel %vm430, %v2335, %v2337
      %v2361 = vsel %vm430, %v2337, %v2339
      %v2362 = vsel %vm430, %v2341, %v2343
      %v2363 = vsel %vm430, %v2343, %v2345
      %v2364 = vsel %vm430, %v2345, %v2347
      %v2365 = vsel %vm430, %v2347, %v2349
      %s2386 = scalar_lea.vmem %s4, 48
      %v2387 = vld [vmem:[%s2386] sm:$0xf]
      %v2388 = vld [vmem:[%s2386 + $0x4] sm:$0xf]
      %v2389 = vld [vmem:[%s2386 + $0x8] sm:$0xf]
      %v2390 = vld [vmem:[%s2386 + $0xc] sm:$0xf]
      %v2391 = vpack.c.bf16 %v2199, %v2194
      %v2392 = vpack.c.bf16 %v2200, %v2195
      %v2393 = vpack.c.bf16 %v2201, %v2196
      %v2394 = vpack.c.bf16 %v2202, %v2197
      %v2395 = vpack.c.bf16 %v2203, %v2198
      %v2396 = vpack.c.bf16 %v2209, %v2204
      %v2397 = vpack.c.bf16 %v2210, %v2205
      %v2398 = vpack.c.bf16 %v2211, %v2206
      %v2399 = vpack.c.bf16 %v2212, %v2207
      %v2400 = vpack.c.bf16 %v2213, %v2208
      %v2401 = vpack.c.bf16 %v2278, %v2274
      %v2402 = vpack.c.bf16 %v2279, %v2275
      %v2403 = vpack.c.bf16 %v2280, %v2276
      %v2404 = vpack.c.bf16 %v2281, %v2277
      %v2405 = vpack.c.bf16 %v2253, %v2243
      %v2406 = vpack.c.bf16 %v2286, %v2282
      %v2407 = vpack.c.bf16 %v2287, %v2283
      %v2408 = vpack.c.bf16 %v2288, %v2284
      %v2409 = vpack.c.bf16 %v2289, %v2285
      %v2410 = vpack.c.bf16 %v2273, %v2263
      %v2411 = vpack.c.bf16 %v2354, %v2350
      %v2412 = vpack.c.bf16 %v2355, %v2351
      %v2413 = vpack.c.bf16 %v2356, %v2352
      %v2414 = vpack.c.bf16 %v2357, %v2353
      %v2415 = vpack.c.bf16 %v2329, %v2319
      %v2416 = vpack.c.bf16 %v2362, %v2358
      %v2417 = vpack.c.bf16 %v2363, %v2359
      %v2418 = vpack.c.bf16 %v2364, %v2360
      %v2419 = vpack.c.bf16 %v2365, %v2361
      %v2420 = vpack.c.bf16 %v2349, %v2339
      %v2425 = vunpack.c.l.b16 %v2387
      %v2426 = vunpack.c.l.b16 %v2388
      %v2427 = vunpack.c.l.b16 %v2389
      %v2428 = vunpack.c.l.b16 %v2390
      %v2429 = vpack.c.b16 %v2426, %v2425
      %v2430 = vpack.c.b16 %v2428, %v2427
      %2461 = vrot.lane.b32.xlu0 %v2391, 25
      %v2462 = vpop.permute.xlu0 %2461
      %2463 = vrot.lane.b32.xlu0 %v2392, 25
      %v2464 = vpop.permute.xlu0 %2463
      %2465 = vrot.lane.b32.xlu0 %v2393, 25
      %v2466 = vpop.permute.xlu0 %2465
      %2467 = vrot.lane.b32.xlu0 %v2394, 25
      %v2468 = vpop.permute.xlu0 %2467
      %2469 = vrot.lane.b32.xlu0 %v2395, 25
      %v2470 = vpop.permute.xlu0 %2469
      %2471 = vrot.lane.b32.xlu0 %v2396, 25
      %v2472 = vpop.permute.xlu0 %2471
      %2473 = vrot.lane.b32.xlu0 %v2397, 25
      %v2474 = vpop.permute.xlu0 %2473
      %2475 = vrot.lane.b32.xlu0 %v2398, 25
      %v2476 = vpop.permute.xlu0 %2475
      %2477 = vrot.lane.b32.xlu0 %v2399, 25
      %v2478 = vpop.permute.xlu0 %2477
      %2479 = vrot.lane.b32.xlu0 %v2400, 25
      %v2480 = vpop.permute.xlu0 %2479
      %2481 = vrot.lane.b32.xlu0 %v2401, 25
      %v2482 = vpop.permute.xlu0 %2481
      %2483 = vrot.lane.b32.xlu0 %v2402, 25
      %v2484 = vpop.permute.xlu0 %2483
      %2485 = vrot.lane.b32.xlu0 %v2403, 25
      %v2486 = vpop.permute.xlu0 %2485
      %2487 = vrot.lane.b32.xlu0 %v2404, 25
      %v2488 = vpop.permute.xlu0 %2487
      %2489 = vrot.lane.b32.xlu0 %v2405, 25
      %v2490 = vpop.permute.xlu0 %2489
      %2491 = vrot.lane.b32.xlu0 %v2406, 25
      %v2492 = vpop.permute.xlu0 %2491
      %2493 = vrot.lane.b32.xlu0 %v2407, 25
      %v2494 = vpop.permute.xlu0 %2493
      %2495 = vrot.lane.b32.xlu0 %v2408, 25
      %v2496 = vpop.permute.xlu0 %2495
      %2497 = vrot.lane.b32.xlu0 %v2409, 25
      %v2498 = vpop.permute.xlu0 %2497
      %2499 = vrot.lane.b32.xlu0 %v2410, 25
      %v2500 = vpop.permute.xlu0 %2499
      %2501 = vrot.lane.b32.xlu0 %v2411, 25
      %v2502 = vpop.permute.xlu0 %2501
      %2503 = vrot.lane.b32.xlu0 %v2412, 25
      %v2504 = vpop.permute.xlu0 %2503
      %2505 = vrot.lane.b32.xlu0 %v2413, 25
      %v2506 = vpop.permute.xlu0 %2505
      %2507 = vrot.lane.b32.xlu0 %v2414, 25
      %v2508 = vpop.permute.xlu0 %2507
      %2509 = vrot.lane.b32.xlu0 %v2415, 25
      %v2510 = vpop.permute.xlu0 %2509
      %2511 = vrot.lane.b32.xlu0 %v2416, 25
      %v2512 = vpop.permute.xlu0 %2511
      %2513 = vrot.lane.b32.xlu0 %v2417, 25
      %v2514 = vpop.permute.xlu0 %2513
      %2515 = vrot.lane.b32.xlu0 %v2418, 25
      %v2516 = vpop.permute.xlu0 %2515
      %2517 = vrot.lane.b32.xlu0 %v2419, 25
      %v2518 = vpop.permute.xlu0 %2517
      %2519 = vrot.lane.b32.xlu0 %v2420, 25
      %v2520 = vpop.permute.xlu0 %2519
      %v2521 = vsel %vm494, %v2462, %v2464
      %v2522 = vsel %vm494, %v2464, %v2466
      %v2523 = vsel %vm494, %v2466, %v2468
      %v2524 = vsel %vm494, %v2468, %v2470
      %v2525 = vsel %vm494, %v2472, %v2474
      %v2526 = vsel %vm494, %v2474, %v2476
      %v2527 = vsel %vm494, %v2476, %v2478
      %v2528 = vsel %vm494, %v2478, %v2480
      %v2529 = vsel %vm494, %v2482, %v2484
      %v2530 = vsel %vm494, %v2484, %v2486
      %v2531 = vsel %vm494, %v2486, %v2488
      %v2532 = vsel %vm494, %v2488, %v2490
      %v2533 = vsel %vm494, %v2492, %v2494
      %v2534 = vsel %vm494, %v2494, %v2496
      %v2535 = vsel %vm494, %v2496, %v2498
      %v2536 = vsel %vm494, %v2498, %v2500
      %v2537 = vsel %vm494, %v2502, %v2504
      %v2538 = vsel %vm494, %v2504, %v2506
      %v2539 = vsel %vm494, %v2506, %v2508
      %v2540 = vsel %vm494, %v2508, %v2510
      %v2541 = vsel %vm494, %v2512, %v2514
      %v2542 = vsel %vm494, %v2514, %v2516
      %v2543 = vsel %vm494, %v2516, %v2518
      %v2544 = vsel %vm494, %v2518, %v2520
      %v2570 = vsel %vm1492, %v2429, 0
      %v2573 = vsel %vm1492, %v2430, 0
      %2575 = vmatprep.subr.bf16.mxu0 %v2522
      %2576 = vmatpush1.bf16.msra.mxu0 %v2521
      %2577 = vmatprep.subr.bf16.mxu0 %v2526
      %2578 = vmatpush1.bf16.msra.mxu0 %v2525
      %2579 = vmatprep.subr.bf16.mxu0 %v2530
      %2580 = vmatpush1.bf16.msra.mxu0 %v2529
      %2581 = vmatprep.subr.bf16.mxu0 %v2534
      %2582 = vmatpush1.bf16.msra.mxu0 %v2533
      %2583 = vmatprep.subr.bf16.mxu0 %v2538
      %2584 = vmatpush1.bf16.msra.mxu0 %v2537
      %2585 = vmatprep.subr.bf16.mxu0 %v2542
      %2586 = vmatpush1.bf16.msra.mxu0 %v2541
      %2587 = vmatprep.subr.bf16.mxu0 0
      %2588 = vmatpush1.bf16.msra.mxu0 0
      %2589 = vmatprep.subr.bf16.mxu0 0
      %2590 = vmatpush1.bf16.msra.mxu0 0
      %2591 = vmatprep.subr.bf16.mxu0 0
      %2592 = vmatpush1.bf16.msra.mxu0 0
      %2593 = vmatprep.subr.bf16.mxu0 0
      %2594 = vmatpush1.bf16.msra.mxu0 0
      %2595 = vmatprep.subr.bf16.mxu0 0
      %2596 = vmatpush1.bf16.msra.mxu0 0
      %2597 = vmatprep.subr.bf16.mxu0 0
      %2598 = vmatpush1.bf16.msra.mxu0 0
      %2599 = vmatprep.subr.bf16.mxu0 0
      %2600 = vmatpush1.bf16.msra.mxu0 0
      %2601 = vmatprep.subr.bf16.mxu0 0
      %2602 = vmatpush1.bf16.msra.mxu0 0
      %2603 = vmatprep.subr.bf16.mxu0 0
      %2604 = vmatpush1.bf16.msra.mxu0 0
      %2605 = vmatprep.subr.bf16.mxu0 0
      %2606 = vmatpush1.bf16.msra.mxu0 0
      %2607 = vmatprep.mubr.bf16.mxu0 0
      %2608 = vmatmul.mubr.bf16.gmra.mrb[0].mxu0 %v2570
      %v2609 = vpop.f32.mrb[0].mxu0
      %v2610 = vadd.f32 0.0, %v2609
      %v2611 = vpop.f32.mrb[0].mxu0
      %v2612 = vadd.f32 0.0, %v2611
      %v2613 = vpop.f32.mrb[0].mxu0
      %v2614 = vadd.f32 0.0, %v2613
      %v2615 = vpop.f32.mrb[0].mxu0
      %v2616 = vadd.f32 0.0, %v2615
      %2617 = vmatprep.mubr.bf16.mxu0 0
      %2618 = vmatmul.mubr.bf16.gmra.mrb[0].mxu0 %v2573
      %v2619 = vpop.f32.mrb[0].mxu0
      %v2620 = vadd.f32 0.0, %v2619
      %v2621 = vpop.f32.mrb[0].mxu0
      %v2622 = vadd.f32 0.0, %v2621
      %v2623 = vpop.f32.mrb[0].mxu0
      %v2624 = vadd.f32 0.0, %v2623
      %v2625 = vpop.f32.mrb[0].mxu0
      %v2626 = vadd.f32 0.0, %v2625
      %2627 = vdwg.mxu0
      %2628 = vmatprep.subr.bf16.mxu0 %v2524
      %2629 = vmatpush1.bf16.msra.mxu0 %v2523
      %2630 = vmatprep.subr.bf16.mxu0 %v2528
      %2631 = vmatpush1.bf16.msra.mxu0 %v2527
      %2632 = vmatprep.subr.bf16.mxu0 %v2532
      %2633 = vmatpush1.bf16.msra.mxu0 %v2531
      %2634 = vmatprep.subr.bf16.mxu0 %v2536
      %2635 = vmatpush1.bf16.msra.mxu0 %v2535
      %2636 = vmatprep.subr.bf16.mxu0 %v2540
      %2637 = vmatpush1.bf16.msra.mxu0 %v2539
      %2638 = vmatprep.subr.bf16.mxu0 %v2544
      %2639 = vmatpush1.bf16.msra.mxu0 %v2543
      %2640 = vmatprep.subr.bf16.mxu0 0
      %2641 = vmatpush1.bf16.msra.mxu0 0
      %2642 = vmatprep.subr.bf16.mxu0 0
      %2643 = vmatpush1.bf16.msra.mxu0 0
      %2644 = vmatprep.subr.bf16.mxu0 0
      %2645 = vmatpush1.bf16.msra.mxu0 0
      %2646 = vmatprep.subr.bf16.mxu0 0
      %2647 = vmatpush1.bf16.msra.mxu0 0
      %2648 = vmatprep.subr.bf16.mxu0 0
      %2649 = vmatpush1.bf16.msra.mxu0 0
      %2650 = vmatprep.subr.bf16.mxu0 0
      %2651 = vmatpush1.bf16.msra.mxu0 0
      %2652 = vmatprep.subr.bf16.mxu0 0
      %2653 = vmatpush1.bf16.msra.mxu0 0
      %2654 = vmatprep.subr.bf16.mxu0 0
      %2655 = vmatpush1.bf16.msra.mxu0 0
      %2656 = vmatprep.subr.bf16.mxu0 0
      %2657 = vmatpush1.bf16.msra.mxu0 0
      %2658 = vmatprep.subr.bf16.mxu0 0
      %2659 = vmatpush1.bf16.msra.mxu0 0
      %2660 = vmatprep.mubr.bf16.mxu0 0
      %2661 = vmatmul.mubr.bf16.gmra.mrb[0].mxu0 %v2570
      %v2662 = vpop.f32.mrb[0].mxu0
      %v2663 = vadd.f32 0.0, %v2662
      %v2664 = vpop.f32.mrb[0].mxu0
      %v2665 = vadd.f32 0.0, %v2664
      %v2666 = vpop.f32.mrb[0].mxu0
      %v2667 = vadd.f32 0.0, %v2666
      %v2668 = vpop.f32.mrb[0].mxu0
      %v2669 = vadd.f32 0.0, %v2668
      %2670 = vmatprep.mubr.bf16.mxu0 0
      %2671 = vmatmul.mubr.bf16.gmra.mrb[0].mxu0 %v2573
      %v2672 = vpop.f32.mrb[0].mxu0
      %v2673 = vadd.f32 0.0, %v2672
      %v2674 = vpop.f32.mrb[0].mxu0
      %v2675 = vadd.f32 0.0, %v2674
      %v2676 = vpop.f32.mrb[0].mxu0
      %v2677 = vadd.f32 0.0, %v2676
      %v2678 = vpop.f32.mrb[0].mxu0
      %v2679 = vadd.f32 0.0, %v2678
      %2680 = vdwg.mxu0
      %v2681 = vadd.f32 %v2177, %v2610
      %v2682 = vadd.f32 %v2177, %v2612
      %v2683 = vadd.f32 %v2177, %v2663
      %v2684 = vadd.f32 %v2177, %v2665
      %v2685 = vadd.f32 %v2182, %v2614
      %v2686 = vadd.f32 %v2182, %v2616
      %v2687 = vadd.f32 %v2182, %v2667
      %v2688 = vadd.f32 %v2182, %v2669
      %v2689 = vadd.f32 %v2187, %v2620
      %v2690 = vadd.f32 %v2187, %v2622
      %v2691 = vadd.f32 %v2187, %v2673
      %v2692 = vadd.f32 %v2187, %v2675
      %v2693 = vadd.f32 %v2192, %v2624
      %v2694 = vadd.f32 %v2192, %v2626
      %v2695 = vadd.f32 %v2192, %v2677
      %v2696 = vadd.f32 %v2192, %v2679
      %s2705 = scalar_lea.vmem %s4, 64
      %v2706 = vld [vmem:[%s2705] sm:$0xf]
      %v2707 = vld [vmem:[%s2705 + $0x4] sm:$0xf]
      %v2708 = vld [vmem:[%s2705 + $0x8] sm:$0xf]
      %v2709 = vld [vmem:[%s2705 + $0xc] sm:$0xf]
      %v2710 = vpack.c.bf16 %v2247, %v2237
      %v2711 = vpack.c.bf16 %v2267, %v2257
      %v2712 = vpack.c.bf16 %v2323, %v2313
      %v2713 = vpack.c.bf16 %v2343, %v2333
      %v2718 = vunpack.c.l.b16 %v2706
      %v2719 = vunpack.c.l.b16 %v2707
      %v2720 = vunpack.c.l.b16 %v2708
      %v2721 = vunpack.c.l.b16 %v2709
      %v2722 = vpack.c.b16 %v2719, %v2718
      %v2723 = vpack.c.b16 %v2721, %v2720
      %2728 = vrot.lane.b32.xlu0 %v2391, 1
      %v2729 = vpop.permute.xlu0 %2728
      %2730 = vrot.lane.b32.xlu0 %v2392, 1
      %v2731 = vpop.permute.xlu0 %2730
      %2732 = vrot.lane.b32.xlu0 %v2393, 1
      %v2733 = vpop.permute.xlu0 %2732
      %2734 = vrot.lane.b32.xlu0 %v2394, 1
      %v2735 = vpop.permute.xlu0 %2734
      %2736 = vrot.lane.b32.xlu0 %v2395, 1
      %v2737 = vpop.permute.xlu0 %2736
      %2738 = vrot.lane.b32.xlu0 %v2396, 1
      %v2739 = vpop.permute.xlu0 %2738
      %2740 = vrot.lane.b32.xlu0 %v2397, 1
      %v2741 = vpop.permute.xlu0 %2740
      %2742 = vrot.lane.b32.xlu0 %v2398, 1
      %v2743 = vpop.permute.xlu0 %2742
      %2744 = vrot.lane.b32.xlu0 %v2399, 1
      %v2745 = vpop.permute.xlu0 %2744
      %2746 = vrot.lane.b32.xlu0 %v2400, 1
      %v2747 = vpop.permute.xlu0 %2746
      %2748 = vrot.lane.b32.xlu0 %v2710, 1
      %v2749 = vpop.permute.xlu0 %2748
      %2750 = vrot.lane.b32.xlu0 %v2402, 1
      %v2751 = vpop.permute.xlu0 %2750
      %2752 = vrot.lane.b32.xlu0 %v2403, 1
      %v2753 = vpop.permute.xlu0 %2752
      %2754 = vrot.lane.b32.xlu0 %v2404, 1
      %v2755 = vpop.permute.xlu0 %2754
      %2756 = vrot.lane.b32.xlu0 %v2405, 1
      %v2757 = vpop.permute.xlu0 %2756
      %2758 = vrot.lane.b32.xlu0 %v2711, 1
      %v2759 = vpop.permute.xlu0 %2758
      %2760 = vrot.lane.b32.xlu0 %v2407, 1
      %v2761 = vpop.permute.xlu0 %2760
      %2762 = vrot.lane.b32.xlu0 %v2408, 1
      %v2763 = vpop.permute.xlu0 %2762
      %2764 = vrot.lane.b32.xlu0 %v2409, 1
      %v2765 = vpop.permute.xlu0 %2764
      %2766 = vrot.lane.b32.xlu0 %v2410, 1
      %v2767 = vpop.permute.xlu0 %2766
      %2768 = vrot.lane.b32.xlu0 %v2712, 1
      %v2769 = vpop.permute.xlu0 %2768
      %2770 = vrot.lane.b32.xlu0 %v2412, 1
      %v2771 = vpop.permute.xlu0 %2770
      %2772 = vrot.lane.b32.xlu0 %v2413, 1
      %v2773 = vpop.permute.xlu0 %2772
      %2774 = vrot.lane.b32.xlu0 %v2414, 1
      %v2775 = vpop.permute.xlu0 %2774
      %2776 = vrot.lane.b32.xlu0 %v2415, 1
      %v2777 = vpop.permute.xlu0 %2776
      %2778 = vrot.lane.b32.xlu0 %v2713, 1
      %v2779 = vpop.permute.xlu0 %2778
      %2780 = vrot.lane.b32.xlu0 %v2417, 1
      %v2781 = vpop.permute.xlu0 %2780
      %2782 = vrot.lane.b32.xlu0 %v2418, 1
      %v2783 = vpop.permute.xlu0 %2782
      %2784 = vrot.lane.b32.xlu0 %v2419, 1
      %v2785 = vpop.permute.xlu0 %2784
      %2786 = vrot.lane.b32.xlu0 %v2420, 1
      %v2787 = vpop.permute.xlu0 %2786
      %v2788 = vsel %vm690, %v2729, %v2731
      %v2789 = vsel %vm690, %v2731, %v2733
      %v2790 = vsel %vm690, %v2733, %v2735
      %v2791 = vsel %vm690, %v2735, %v2737
      %v2792 = vsel %vm690, %v2739, %v2741
      %v2793 = vsel %vm690, %v2741, %v2743
      %v2794 = vsel %vm690, %v2743, %v2745
      %v2795 = vsel %vm690, %v2745, %v2747
      %v2796 = vsel %vm690, %v2749, %v2751
      %v2797 = vsel %vm690, %v2751, %v2753
      %v2798 = vsel %vm690, %v2753, %v2755
      %v2799 = vsel %vm690, %v2755, %v2757
      %v2800 = vsel %vm690, %v2759, %v2761
      %v2801 = vsel %vm690, %v2761, %v2763
      %v2802 = vsel %vm690, %v2763, %v2765
      %v2803 = vsel %vm690, %v2765, %v2767
      %v2804 = vsel %vm690, %v2769, %v2771
      %v2805 = vsel %vm690, %v2771, %v2773
      %v2806 = vsel %vm690, %v2773, %v2775
      %v2807 = vsel %vm690, %v2775, %v2777
      %v2808 = vsel %vm690, %v2779, %v2781
      %v2809 = vsel %vm690, %v2781, %v2783
      %v2810 = vsel %vm690, %v2783, %v2785
      %v2811 = vsel %vm690, %v2785, %v2787
      %v2837 = vsel %vm1492, %v2722, 0
      %v2840 = vsel %vm1492, %v2723, 0
      %2842 = vmatprep.subr.bf16.mxu0 %v2789
      %2843 = vmatpush1.bf16.msra.mxu0 %v2788
      %2844 = vmatprep.subr.bf16.mxu0 %v2793
      %2845 = vmatpush1.bf16.msra.mxu0 %v2792
      %2846 = vmatprep.subr.bf16.mxu0 %v2797
      %2847 = vmatpush1.bf16.msra.mxu0 %v2796
      %2848 = vmatprep.subr.bf16.mxu0 %v2801
      %2849 = vmatpush1.bf16.msra.mxu0 %v2800
      %2850 = vmatprep.subr.bf16.mxu0 %v2805
      %2851 = vmatpush1.bf16.msra.mxu0 %v2804
      %2852 = vmatprep.subr.bf16.mxu0 %v2809
      %2853 = vmatpush1.bf16.msra.mxu0 %v2808
      %2854 = vmatprep.subr.bf16.mxu0 0
      %2855 = vmatpush1.bf16.msra.mxu0 0
      %2856 = vmatprep.subr.bf16.mxu0 0
      %2857 = vmatpush1.bf16.msra.mxu0 0
      %2858 = vmatprep.subr.bf16.mxu0 0
      %2859 = vmatpush1.bf16.msra.mxu0 0
      %2860 = vmatprep.subr.bf16.mxu0 0
      %2861 = vmatpush1.bf16.msra.mxu0 0
      %2862 = vmatprep.subr.bf16.mxu0 0
      %2863 = vmatpush1.bf16.msra.mxu0 0
      %2864 = vmatprep.subr.bf16.mxu0 0
      %2865 = vmatpush1.bf16.msra.mxu0 0
      %2866 = vmatprep.subr.bf16.mxu0 0
      %2867 = vmatpush1.bf16.msra.mxu0 0
      %2868 = vmatprep.subr.bf16.mxu0 0
      %2869 = vmatpush1.bf16.msra.mxu0 0
      %2870 = vmatprep.subr.bf16.mxu0 0
      %2871 = vmatpush1.bf16.msra.mxu0 0
      %2872 = vmatprep.subr.bf16.mxu0 0
      %2873 = vmatpush1.bf16.msra.mxu0 0
      %2874 = vmatprep.mubr.bf16.mxu0 0
      %2875 = vmatmul.mubr.bf16.gmra.mrb[0].mxu0 %v2837
      %v2876 = vpop.f32.mrb[0].mxu0
      %v2877 = vadd.f32 0.0, %v2876
      %v2878 = vpop.f32.mrb[0].mxu0
      %v2879 = vadd.f32 0.0, %v2878
      %v2880 = vpop.f32.mrb[0].mxu0
      %v2881 = vadd.f32 0.0, %v2880
      %v2882 = vpop.f32.mrb[0].mxu0
      %v2883 = vadd.f32 0.0, %v2882
      %2884 = vmatprep.mubr.bf16.mxu0 0
      %2885 = vmatmul.mubr.bf16.gmra.mrb[0].mxu0 %v2840
      %v2886 = vpop.f32.mrb[0].mxu0
      %v2887 = vadd.f32 0.0, %v2886
      %v2888 = vpop.f32.mrb[0].mxu0
      %v2889 = vadd.f32 0.0, %v2888
      %v2890 = vpop.f32.mrb[0].mxu0
      %v2891 = vadd.f32 0.0, %v2890
      %v2892 = vpop.f32.mrb[0].mxu0
      %v2893 = vadd.f32 0.0, %v2892
      %2894 = vdwg.mxu0
      %2895 = vmatprep.subr.bf16.mxu0 %v2791
      %2896 = vmatpush1.bf16.msra.mxu0 %v2790
      %2897 = vmatprep.subr.bf16.mxu0 %v2795
      %2898 = vmatpush1.bf16.msra.mxu0 %v2794
      %2899 = vmatprep.subr.bf16.mxu0 %v2799
      %2900 = vmatpush1.bf16.msra.mxu0 %v2798
      %2901 = vmatprep.subr.bf16.mxu0 %v2803
      %2902 = vmatpush1.bf16.msra.mxu0 %v2802
      %2903 = vmatprep.subr.bf16.mxu0 %v2807
      %2904 = vmatpush1.bf16.msra.mxu0 %v2806
      %2905 = vmatprep.subr.bf16.mxu0 %v2811
      %2906 = vmatpush1.bf16.msra.mxu0 %v2810
      %2907 = vmatprep.subr.bf16.mxu0 0
      %2908 = vmatpush1.bf16.msra.mxu0 0
      %2909 = vmatprep.subr.bf16.mxu0 0
      %2910 = vmatpush1.bf16.msra.mxu0 0
      %2911 = vmatprep.subr.bf16.mxu0 0
      %2912 = vmatpush1.bf16.msra.mxu0 0
      %2913 = vmatprep.subr.bf16.mxu0 0
      %2914 = vmatpush1.bf16.msra.mxu0 0
      %2915 = vmatprep.subr.bf16.mxu0 0
      %2916 = vmatpush1.bf16.msra.mxu0 0
      %2917 = vmatprep.subr.bf16.mxu0 0
      %2918 = vmatpush1.bf16.msra.mxu0 0
      %2919 = vmatprep.subr.bf16.mxu0 0
      %2920 = vmatpush1.bf16.msra.mxu0 0
      %2921 = vmatprep.subr.bf16.mxu0 0
      %2922 = vmatpush1.bf16.msra.mxu0 0
      %2923 = vmatprep.subr.bf16.mxu0 0
      %2924 = vmatpush1.bf16.msra.mxu0 0
      %2925 = vmatprep.subr.bf16.mxu0 0
      %2926 = vmatpush1.bf16.msra.mxu0 0
      %2927 = vmatprep.mubr.bf16.mxu0 0
      %2928 = vmatmul.mubr.bf16.gmra.mrb[0].mxu0 %v2837
      %v2929 = vpop.f32.mrb[0].mxu0
      %v2930 = vadd.f32 0.0, %v2929
      %v2931 = vpop.f32.mrb[0].mxu0
      %v2932 = vadd.f32 0.0, %v2931
      %v2933 = vpop.f32.mrb[0].mxu0
      %v2934 = vadd.f32 0.0, %v2933
      %v2935 = vpop.f32.mrb[0].mxu0
      %v2936 = vadd.f32 0.0, %v2935
      %2937 = vmatprep.mubr.bf16.mxu0 0
      %2938 = vmatmul.mubr.bf16.gmra.mrb[0].mxu0 %v2840
      %v2939 = vpop.f32.mrb[0].mxu0
      %v2940 = vadd.f32 0.0, %v2939
      %v2941 = vpop.f32.mrb[0].mxu0
      %v2942 = vadd.f32 0.0, %v2941
      %v2943 = vpop.f32.mrb[0].mxu0
      %v2944 = vadd.f32 0.0, %v2943
      %v2945 = vpop.f32.mrb[0].mxu0
      %v2946 = vadd.f32 0.0, %v2945
      %2947 = vdwg.mxu0
      %v2948 = vadd.f32 %v2681, %v2877
      %v2949 = vadd.f32 %v2682, %v2879
      %v2950 = vadd.f32 %v2683, %v2930
      %v2951 = vadd.f32 %v2684, %v2932
      %v2952 = vadd.f32 %v2685, %v2881
      %v2953 = vadd.f32 %v2686, %v2883
      %v2954 = vadd.f32 %v2687, %v2934
      %v2955 = vadd.f32 %v2688, %v2936
      %v2956 = vadd.f32 %v2689, %v2887
      %v2957 = vadd.f32 %v2690, %v2889
      %v2958 = vadd.f32 %v2691, %v2940
      %v2959 = vadd.f32 %v2692, %v2942
      %v2960 = vadd.f32 %v2693, %v2891
      %v2961 = vadd.f32 %v2694, %v2893
      %v2962 = vadd.f32 %v2695, %v2944
      %v2963 = vadd.f32 %v2696, %v2946
      %s2964 = scalar_lea.vmem %s4, 80
      %v2965 = vld [vmem:[%s2964] sm:$0xf]
      %v2966 = vld [vmem:[%s2964 + $0x4] sm:$0xf]
      %v2967 = vld [vmem:[%s2964 + $0x8] sm:$0xf]
      %v2968 = vld [vmem:[%s2964 + $0xc] sm:$0xf]
      %v2973 = vunpack.c.l.b16 %v2965
      %v2974 = vunpack.c.l.b16 %v2966
      %v2975 = vunpack.c.l.b16 %v2967
      %v2976 = vunpack.c.l.b16 %v2968
      %v2977 = vpack.c.b16 %v2974, %v2973
      %v2978 = vpack.c.b16 %v2976, %v2975
      %2979 = vrot.lane.b32.xlu0 %v2392, 105
      %v2980 = vpop.permute.xlu0 %2979
      %2981 = vrot.lane.b32.xlu0 %v2393, 105
      %v2982 = vpop.permute.xlu0 %2981
      %2983 = vrot.lane.b32.xlu0 %v2394, 105
      %v2984 = vpop.permute.xlu0 %2983
      %2985 = vrot.lane.b32.xlu0 %v2395, 105
      %v2986 = vpop.permute.xlu0 %2985
      %2987 = vrot.lane.b32.xlu0 %v2397, 105
      %v2988 = vpop.permute.xlu0 %2987
      %2989 = vrot.lane.b32.xlu0 %v2398, 105
      %v2990 = vpop.permute.xlu0 %2989
      %2991 = vrot.lane.b32.xlu0 %v2399, 105
      %v2992 = vpop.permute.xlu0 %2991
      %2993 = vrot.lane.b32.xlu0 %v2400, 105
      %v2994 = vpop.permute.xlu0 %2993
      %2995 = vrot.lane.b32.xlu0 %v2402, 105
      %v2996 = vpop.permute.xlu0 %2995
      %2997 = vrot.lane.b32.xlu0 %v2403, 105
      %v2998 = vpop.permute.xlu0 %2997
      %2999 = vrot.lane.b32.xlu0 %v2404, 105
      %v3000 = vpop.permute.xlu0 %2999
      %3001 = vrot.lane.b32.xlu0 %v2405, 105
      %v3002 = vpop.permute.xlu0 %3001
      %3003 = vrot.lane.b32.xlu0 %v2407, 105
      %v3004 = vpop.permute.xlu0 %3003
      %3005 = vrot.lane.b32.xlu0 %v2408, 105
      %v3006 = vpop.permute.xlu0 %3005
      %3007 = vrot.lane.b32.xlu0 %v2409, 105
      %v3008 = vpop.permute.xlu0 %3007
      %3009 = vrot.lane.b32.xlu0 %v2410, 105
      %v3010 = vpop.permute.xlu0 %3009
      %3011 = vrot.lane.b32.xlu0 %v2412, 105
      %v3012 = vpop.permute.xlu0 %3011
      %3013 = vrot.lane.b32.xlu0 %v2413, 105
      %v3014 = vpop.permute.xlu0 %3013
      %3015 = vrot.lane.b32.xlu0 %v2414, 105
      %v3016 = vpop.permute.xlu0 %3015
      %3017 = vrot.lane.b32.xlu0 %v2415, 105
      %v3018 = vpop.permute.xlu0 %3017
      %3019 = vrot.lane.b32.xlu0 %v2417, 105
      %v3020 = vpop.permute.xlu0 %3019
      %3021 = vrot.lane.b32.xlu0 %v2418, 105
      %v3022 = vpop.permute.xlu0 %3021
      %3023 = vrot.lane.b32.xlu0 %v2419, 105
      %v3024 = vpop.permute.xlu0 %3023
      %3025 = vrot.lane.b32.xlu0 %v2420, 105
      %v3026 = vpop.permute.xlu0 %3025
      %v3027 = vsel %vm874, %v2980, %v2982
      %v3028 = vsel %vm874, %v2982, %v2984
      %v3029 = vsel %vm874, %v2984, %v2986
      %v3030 = vsel %vm874, %v2988, %v2990
      %v3031 = vsel %vm874, %v2990, %v2992
      %v3032 = vsel %vm874, %v2992, %v2994
      %v3033 = vsel %vm874, %v2996, %v2998
      %v3034 = vsel %vm874, %v2998, %v3000
      %v3035 = vsel %vm874, %v3000, %v3002
      %v3036 = vsel %vm874, %v3004, %v3006
      %v3037 = vsel %vm874, %v3006, %v3008
      %v3038 = vsel %vm874, %v3008, %v3010
      %v3039 = vsel %vm874, %v3012, %v3014
      %v3040 = vsel %vm874, %v3014, %v3016
      %v3041 = vsel %vm874, %v3016, %v3018
      %v3042 = vsel %vm874, %v3020, %v3022
      %v3043 = vsel %vm874, %v3022, %v3024
      %v3044 = vsel %vm874, %v3024, %v3026
      %v3070 = vsel %vm1492, %v2977, 0
      %v3073 = vsel %vm1492, %v2978, 0
      %3075 = vmatprep.subr.bf16.mxu0 %v3028
      %3076 = vmatpush1.bf16.msra.mxu0 %v3027
      %3077 = vmatprep.subr.bf16.mxu0 %v3031
      %3078 = vmatpush1.bf16.msra.mxu0 %v3030
      %3079 = vmatprep.subr.bf16.mxu0 %v3034
      %3080 = vmatpush1.bf16.msra.mxu0 %v3033
      %3081 = vmatprep.subr.bf16.mxu0 %v3037
      %3082 = vmatpush1.bf16.msra.mxu0 %v3036
      %3083 = vmatprep.subr.bf16.mxu0 %v3040
      %3084 = vmatpush1.bf16.msra.mxu0 %v3039
      %3085 = vmatprep.subr.bf16.mxu0 %v3043
      %3086 = vmatpush1.bf16.msra.mxu0 %v3042
      %3087 = vmatprep.subr.bf16.mxu0 0
      %3088 = vmatpush1.bf16.msra.mxu0 0
      %3089 = vmatprep.subr.bf16.mxu0 0
      %3090 = vmatpush1.bf16.msra.mxu0 0
      %3091 = vmatprep.subr.bf16.mxu0 0
      %3092 = vmatpush1.bf16.msra.mxu0 0
      %3093 = vmatprep.subr.bf16.mxu0 0
      %3094 = vmatpush1.bf16.msra.mxu0 0
      %3095 = vmatprep.subr.bf16.mxu0 0
      %3096 = vmatpush1.bf16.msra.mxu0 0
      %3097 = vmatprep.subr.bf16.mxu0 0
      %3098 = vmatpush1.bf16.msra.mxu0 0
      %3099 = vmatprep.subr.bf16.mxu0 0
      %3100 = vmatpush1.bf16.msra.mxu0 0
      %3101 = vmatprep.subr.bf16.mxu0 0
      %3102 = vmatpush1.bf16.msra.mxu0 0
      %3103 = vmatprep.subr.bf16.mxu0 0
      %3104 = vmatpush1.bf16.msra.mxu0 0
      %3105 = vmatprep.subr.bf16.mxu0 0
      %3106 = vmatpush1.bf16.msra.mxu0 0
      %3107 = vmatprep.mubr.bf16.mxu0 0
      %3108 = vmatmul.mubr.bf16.gmra.mrb[0].mxu0 %v3070
      %v3109 = vpop.f32.mrb[0].mxu0
      %v3110 = vadd.f32 0.0, %v3109
      %v3111 = vpop.f32.mrb[0].mxu0
      %v3112 = vadd.f32 0.0, %v3111
      %v3113 = vpop.f32.mrb[0].mxu0
      %v3114 = vadd.f32 0.0, %v3113
      %v3115 = vpop.f32.mrb[0].mxu0
      %v3116 = vadd.f32 0.0, %v3115
      %3117 = vmatprep.mubr.bf16.mxu0 0
      %3118 = vmatmul.mubr.bf16.gmra.mrb[0].mxu0 %v3073
      %v3119 = vpop.f32.mrb[0].mxu0
      %v3120 = vadd.f32 0.0, %v3119
      %v3121 = vpop.f32.mrb[0].mxu0
      %v3122 = vadd.f32 0.0, %v3121
      %v3123 = vpop.f32.mrb[0].mxu0
      %v3124 = vadd.f32 0.0, %v3123
      %v3125 = vpop.f32.mrb[0].mxu0
      %v3126 = vadd.f32 0.0, %v3125
      %3127 = vdwg.mxu0
      %3128 = vmatprep.subr.bf16.mxu0 %v2986
      %3129 = vmatpush1.bf16.msra.mxu0 %v3029
      %3130 = vmatprep.subr.bf16.mxu0 %v2994
      %3131 = vmatpush1.bf16.msra.mxu0 %v3032
      %3132 = vmatprep.subr.bf16.mxu0 %v3002
      %3133 = vmatpush1.bf16.msra.mxu0 %v3035
      %3134 = vmatprep.subr.bf16.mxu0 %v3010
      %3135 = vmatpush1.bf16.msra.mxu0 %v3038
      %3136 = vmatprep.subr.bf16.mxu0 %v3018
      %3137 = vmatpush1.bf16.msra.mxu0 %v3041
      %3138 = vmatprep.subr.bf16.mxu0 %v3026
      %3139 = vmatpush1.bf16.msra.mxu0 %v3044
      %3140 = vmatprep.subr.bf16.mxu0 0
      %3141 = vmatpush1.bf16.msra.mxu0 0
      %3142 = vmatprep.subr.bf16.mxu0 0
      %3143 = vmatpush1.bf16.msra.mxu0 0
      %3144 = vmatprep.subr.bf16.mxu0 0
      %3145 = vmatpush1.bf16.msra.mxu0 0
      %3146 = vmatprep.subr.bf16.mxu0 0
      %3147 = vmatpush1.bf16.msra.mxu0 0
      %3148 = vmatprep.subr.bf16.mxu0 0
      %3149 = vmatpush1.bf16.msra.mxu0 0
      %3150 = vmatprep.subr.bf16.mxu0 0
      %3151 = vmatpush1.bf16.msra.mxu0 0
      %3152 = vmatprep.subr.bf16.mxu0 0
      %3153 = vmatpush1.bf16.msra.mxu0 0
      %3154 = vmatprep.subr.bf16.mxu0 0
      %3155 = vmatpush1.bf16.msra.mxu0 0
      %3156 = vmatprep.subr.bf16.mxu0 0
      %3157 = vmatpush1.bf16.msra.mxu0 0
      %3158 = vmatprep.subr.bf16.mxu0 0
      %3159 = vmatpush1.bf16.msra.mxu0 0
      %3160 = vmatprep.mubr.bf16.mxu0 0
      %3161 = vmatmul.mubr.bf16.gmra.mrb[0].mxu0 %v3070
      %v3162 = vpop.f32.mrb[0].mxu0
      %v3163 = vadd.f32 0.0, %v3162
      %v3164 = vpop.f32.mrb[0].mxu0
      %v3165 = vadd.f32 0.0, %v3164
      %v3166 = vpop.f32.mrb[0].mxu0
      %v3167 = vadd.f32 0.0, %v3166
      %v3168 = vpop.f32.mrb[0].mxu0
      %v3169 = vadd.f32 0.0, %v3168
      %3170 = vmatprep.mubr.bf16.mxu0 0
      %3171 = vmatmul.mubr.bf16.gmra.mrb[0].mxu0 %v3073
      %v3172 = vpop.f32.mrb[0].mxu0
      %v3173 = vadd.f32 0.0, %v3172
      %v3174 = vpop.f32.mrb[0].mxu0
      %v3175 = vadd.f32 0.0, %v3174
      %v3176 = vpop.f32.mrb[0].mxu0
      %v3177 = vadd.f32 0.0, %v3176
      %v3178 = vpop.f32.mrb[0].mxu0
      %v3179 = vadd.f32 0.0, %v3178
      %3180 = vdwg.mxu0
      %v3181 = vadd.f32 %v2948, %v3110
      %v3182 = vadd.f32 %v2949, %v3112
      %v3183 = vadd.f32 %v2950, %v3163
      %v3184 = vadd.f32 %v2951, %v3165
      %v3185 = vadd.f32 %v2952, %v3114
      %v3186 = vadd.f32 %v2953, %v3116
      %v3187 = vadd.f32 %v2954, %v3167
      %v3188 = vadd.f32 %v2955, %v3169
      %v3189 = vadd.f32 %v2956, %v3120
      %v3190 = vadd.f32 %v2957, %v3122
      %v3191 = vadd.f32 %v2958, %v3173
      %v3192 = vadd.f32 %v2959, %v3175
      %v3193 = vadd.f32 %v2960, %v3124
      %v3194 = vadd.f32 %v2961, %v3126
      %v3195 = vadd.f32 %v2962, %v3177
      %v3196 = vadd.f32 %v2963, %v3179
      %v3197 = vld [vmem:[#allocation2 + $0x8] sm:$0xff]
      %v3198 = vld [vmem:[#allocation2 + $0x10] sm:$0xff]
      %v3199 = vld [vmem:[#allocation2 + $0x18] sm:$0xff]
      %v3200 = vld [vmem:[#allocation2 + $0x20] sm:$0xff]
      %v3201 = vld [vmem:[#allocation2 + $0x38] sm:$0xff]
      %v3202 = vld [vmem:[#allocation2 + $0x40] sm:$0xff]
      %v3203 = vld [vmem:[#allocation2 + $0x48] sm:$0xff]
      %v3204 = vld [vmem:[#allocation2 + $0x50] sm:$0xff]
      %v3205 = vld [vmem:[#allocation2 + $0x68] sm:$0xff]
      %v3206 = vld [vmem:[#allocation2 + $0x70] sm:$0xff]
      %v3207 = vld [vmem:[#allocation2 + $0x78] sm:$0xff]
      %v3208 = vld [vmem:[#allocation2 + $0x80] sm:$0xff]
      %v3209 = vld [vmem:[#allocation2 + $0x98] sm:$0xff]
      %v3210 = vld [vmem:[#allocation2 + $0xa0] sm:$0xff]
      %v3211 = vld [vmem:[#allocation2 + $0xa8] sm:$0xff]
      %v3212 = vld [vmem:[#allocation2 + $0xb0] sm:$0xff]
      %v3213 = vmul.f32 %v3181, 0.1
      %v3214 = vmul.f32 %v3182, 0.1
      %v3215 = vmul.f32 %v3183, 0.1
      %v3216 = vmul.f32 %v3184, 0.1
      %v3217 = vmul.f32 %v3185, 0.1
      %v3218 = vmul.f32 %v3186, 0.1
      %v3219 = vmul.f32 %v3187, 0.1
      %v3220 = vmul.f32 %v3188, 0.1
      %v3221 = vmul.f32 %v3189, 0.1
      %v3222 = vmul.f32 %v3190, 0.1
      %v3223 = vmul.f32 %v3191, 0.1
      %v3224 = vmul.f32 %v3192, 0.1
      %v3225 = vmul.f32 %v3193, 0.1
      %v3226 = vmul.f32 %v3194, 0.1
      %v3227 = vmul.f32 %v3195, 0.1
      %v3228 = vmul.f32 %v3196, 0.1
      %v3229 = vadd.f32 %v3197, %v3213
      %v3230 = vadd.f32 %v3198, %v3214
      %v3231 = vadd.f32 %v3199, %v3215
      %v3232 = vadd.f32 %v3200, %v3216
      %v3233 = vadd.f32 %v3201, %v3217
      %v3234 = vadd.f32 %v3202, %v3218
      %v3235 = vadd.f32 %v3203, %v3219
      %v3236 = vadd.f32 %v3204, %v3220
      %v3237 = vadd.f32 %v3205, %v3221
      %v3238 = vadd.f32 %v3206, %v3222
      %v3239 = vadd.f32 %v3207, %v3223
      %v3240 = vadd.f32 %v3208, %v3224
      %v3241 = vadd.f32 %v3209, %v3225
      %v3242 = vadd.f32 %v3210, %v3226
      %v3243 = vadd.f32 %v3211, %v3227
      %v3244 = vadd.f32 %v3212, %v3228
      %v3245 = vsel %vm1058, %v3229, 0.0
      %v3246 = vsel %vm1059, %v3230, 0.0
      %v3247 = vsel %vm1060, %v3231, 0.0
      %v3248 = vsel %vm1061, %v3232, 0.0
      %v3249 = vsel %vm1058, %v3233, 0.0
      %v3250 = vsel %vm1059, %v3234, 0.0
      %v3251 = vsel %vm1060, %v3235, 0.0
      %v3252 = vsel %vm1061, %v3236, 0.0
      %v3253 = vsel %vm1058, %v3237, 0.0
      %v3254 = vsel %vm1059, %v3238, 0.0
      %v3255 = vsel %vm1060, %v3239, 0.0
      %v3256 = vsel %vm1061, %v3240, 0.0
      %v3257 = vsel %vm1058, %v3241, 0.0
      %v3258 = vsel %vm1059, %v3242, 0.0
      %v3259 = vsel %vm1060, %v3243, 0.0
      %v3260 = vsel %vm1061, %v3244, 0.0
      %3261 = vst [vmem:[#allocation2 + $0x8] sm:$0xff] %v3245
      %3262 = vst [vmem:[#allocation2 + $0x10] sm:$0xff] %v3246
      %3263 = vst [vmem:[#allocation2 + $0x18] sm:$0xff] %v3247
      %3264 = vst.msk [vmem:[#allocation2 + $0x20] sm:$0xff] %vm314, %v3248
      %3265 = vst [vmem:[#allocation2 + $0x38] sm:$0xff] %v3249
      %3266 = vst [vmem:[#allocation2 + $0x40] sm:$0xff] %v3250
      %3267 = vst [vmem:[#allocation2 + $0x48] sm:$0xff] %v3251
      %3268 = vst.msk [vmem:[#allocation2 + $0x50] sm:$0xff] %vm314, %v3252
      %3269 = vst [vmem:[#allocation2 + $0x68] sm:$0xff] %v3253
      %3270 = vst [vmem:[#allocation2 + $0x70] sm:$0xff] %v3254
      %3271 = vst [vmem:[#allocation2 + $0x78] sm:$0xff] %v3255
      %3272 = vst.msk [vmem:[#allocation2 + $0x80] sm:$0xff] %vm314, %v3256
      %3273 = vst [vmem:[#allocation2 + $0x98] sm:$0xff] %v3257
      %3274 = vst [vmem:[#allocation2 + $0xa0] sm:$0xff] %v3258
      %3275 = vst [vmem:[#allocation2 + $0xa8] sm:$0xff] %v3259
      %3276 = vst.msk [vmem:[#allocation2 + $0xb0] sm:$0xff] %vm314, %v3260
      %s3277 = scalar_lea.vmem %s5, 64
      %v3278 = vld [vmem:[%s3277] sm:$0xff]
      %v3279 = vld [vmem:[%s3277 + $0x8] sm:$0xff]
      %v3280 = vld [vmem:[%s3277 + $0x10] sm:$0xff]
      %v3281 = vld [vmem:[%s3277 + $0x18] sm:$0xff]
      %3283 = vset.pattern.permute.xlu0 0
      %3284 = vperm.xlu0 %3283, %v3278
      %v3285 = vpop.permute.xlu0 %3284
      %3288 = vset.pattern.permute.xlu0 0
      %3289 = vperm.xlu0 %3288, %v3279
      %v3290 = vpop.permute.xlu0 %3289
      %3293 = vset.pattern.permute.xlu0 0
      %3294 = vperm.xlu0 %3293, %v3280
      %v3295 = vpop.permute.xlu0 %3294
      %3298 = vset.pattern.permute.xlu0 0
      %3299 = vperm.xlu0 %3298, %v3281
      %v3300 = vpop.permute.xlu0 %3299
      %v3302 = vld [vmem:[#allocation2] sm:$0xff]
      %v3303 = vld [vmem:[#allocation2 + $0x8] sm:$0xff]
      %v3304 = vld [vmem:[#allocation2 + $0x10] sm:$0xff]
      %v3305 = vld [vmem:[#allocation2 + $0x18] sm:$0xff]
      %v3306 = vld [vmem:[#allocation2 + $0x20] sm:$0xff]
      %v3307 = vld [vmem:[#allocation2 + $0x30] sm:$0xff]
      %v3308 = vld [vmem:[#allocation2 + $0x38] sm:$0xff]
      %v3309 = vld [vmem:[#allocation2 + $0x40] sm:$0xff]
      %v3310 = vld [vmem:[#allocation2 + $0x48] sm:$0xff]
      %v3311 = vld [vmem:[#allocation2 + $0x50] sm:$0xff]
      %v3312 = vld [vmem:[#allocation2 + $0x60] sm:$0xff]
      %v3313 = vld [vmem:[#allocation2 + $0x68] sm:$0xff]
      %v3314 = vld [vmem:[#allocation2 + $0x70] sm:$0xff]
      %v3315 = vld [vmem:[#allocation2 + $0x78] sm:$0xff]
      %v3316 = vld [vmem:[#allocation2 + $0x80] sm:$0xff]
      %v3317 = vld [vmem:[#allocation2 + $0x90] sm:$0xff]
      %v3318 = vld [vmem:[#allocation2 + $0x98] sm:$0xff]
      %v3319 = vld [vmem:[#allocation2 + $0xa0] sm:$0xff]
      %v3320 = vld [vmem:[#allocation2 + $0xa8] sm:$0xff]
      %v3321 = vld [vmem:[#allocation2 + $0xb0] sm:$0xff]
      %3342 = vrot.lane.b32.xlu0 %v3302, 127
      %v3343 = vpop.permute.xlu0 %3342
      %3344 = vrot.lane.b32.xlu0 %v3303, 127
      %v3345 = vpop.permute.xlu0 %3344
      %3346 = vrot.lane.b32.xlu0 %v3304, 127
      %v3347 = vpop.permute.xlu0 %3346
      %3348 = vrot.lane.b32.xlu0 %v3305, 127
      %v3349 = vpop.permute.xlu0 %3348
      %3350 = vrot.lane.b32.xlu0 %v3306, 127
      %v3351 = vpop.permute.xlu0 %3350
      %3352 = vrot.lane.b32.xlu0 %v3307, 127
      %v3353 = vpop.permute.xlu0 %3352
      %3354 = vrot.lane.b32.xlu0 %v3308, 127
      %v3355 = vpop.permute.xlu0 %3354
      %3356 = vrot.lane.b32.xlu0 %v3309, 127
      %v3357 = vpop.permute.xlu0 %3356
      %3358 = vrot.lane.b32.xlu0 %v3310, 127
      %v3359 = vpop.permute.xlu0 %3358
      %3360 = vrot.lane.b32.xlu0 %v3311, 127
      %v3361 = vpop.permute.xlu0 %3360
      %3362 = vrot.lane.b32.xlu0 %v3312, 127
      %v3363 = vpop.permute.xlu0 %3362
      %3364 = vrot.lane.b32.xlu0 %v3313, 127
      %v3365 = vpop.permute.xlu0 %3364
      %3366 = vrot.lane.b32.xlu0 %v3314, 127
      %v3367 = vpop.permute.xlu0 %3366
      %3368 = vrot.lane.b32.xlu0 %v3315, 127
      %v3369 = vpop.permute.xlu0 %3368
      %3370 = vrot.lane.b32.xlu0 %v3316, 127
      %v3371 = vpop.permute.xlu0 %3370
      %3372 = vrot.lane.b32.xlu0 %v3317, 127
      %v3373 = vpop.permute.xlu0 %3372
      %3374 = vrot.lane.b32.xlu0 %v3318, 127
      %v3375 = vpop.permute.xlu0 %3374
      %3376 = vrot.lane.b32.xlu0 %v3319, 127
      %v3377 = vpop.permute.xlu0 %3376
      %3378 = vrot.lane.b32.xlu0 %v3320, 127
      %v3379 = vpop.permute.xlu0 %3378
      %3380 = vrot.lane.b32.xlu0 %v3321, 127
      %v3381 = vpop.permute.xlu0 %3380
      %v3382 = vsel %vm410, %v3343, %v3345
      %v3383 = vsel %vm410, %v3345, %v3347
      %v3384 = vsel %vm410, %v3347, %v3349
      %v3385 = vsel %vm410, %v3349, %v3351
      %v3386 = vsel %vm410, %v3353, %v3355
      %v3387 = vsel %vm410, %v3355, %v3357
      %v3388 = vsel %vm410, %v3357, %v3359
      %v3389 = vsel %vm410, %v3359, %v3361
      %v3390 = vsel %vm410, %v3363, %v3365
      %v3391 = vsel %vm410, %v3365, %v3367
      %v3392 = vsel %vm410, %v3367, %v3369
      %v3393 = vsel %vm410, %v3369, %v3371
      %v3394 = vsel %vm410, %v3373, %v3375
      %v3395 = vsel %vm410, %v3375, %v3377
      %v3396 = vsel %vm410, %v3377, %v3379
      %v3397 = vsel %vm410, %v3379, %v3381
      %3418 = vrot.lane.b32.xlu0 %v3302, 126
      %v3419 = vpop.permute.xlu0 %3418
      %3420 = vrot.lane.b32.xlu0 %v3303, 126
      %v3421 = vpop.permute.xlu0 %3420
      %3422 = vrot.lane.b32.xlu0 %v3304, 126
      %v3423 = vpop.permute.xlu0 %3422
      %3424 = vrot.lane.b32.xlu0 %v3305, 126
      %v3425 = vpop.permute.xlu0 %3424
      %3426 = vrot.lane.b32.xlu0 %v3306, 126
      %v3427 = vpop.permute.xlu0 %3426
      %3428 = vrot.lane.b32.xlu0 %v3307, 126
      %v3429 = vpop.permute.xlu0 %3428
      %3430 = vrot.lane.b32.xlu0 %v3308, 126
      %v3431 = vpop.permute.xlu0 %3430
      %3432 = vrot.lane.b32.xlu0 %v3309, 126
      %v3433 = vpop.permute.xlu0 %3432
      %3434 = vrot.lane.b32.xlu0 %v3310, 126
      %v3435 = vpop.permute.xlu0 %3434
      %3436 = vrot.lane.b32.xlu0 %v3311, 126
      %v3437 = vpop.permute.xlu0 %3436
      %3438 = vrot.lane.b32.xlu0 %v3312, 126
      %v3439 = vpop.permute.xlu0 %3438
      %3440 = vrot.lane.b32.xlu0 %v3313, 126
      %v3441 = vpop.permute.xlu0 %3440
      %3442 = vrot.lane.b32.xlu0 %v3314, 126
      %v3443 = vpop.permute.xlu0 %3442
      %3444 = vrot.lane.b32.xlu0 %v3315, 126
      %v3445 = vpop.permute.xlu0 %3444
      %3446 = vrot.lane.b32.xlu0 %v3316, 126
      %v3447 = vpop.permute.xlu0 %3446
      %3448 = vrot.lane.b32.xlu0 %v3317, 126
      %v3449 = vpop.permute.xlu0 %3448
      %3450 = vrot.lane.b32.xlu0 %v3318, 126
      %v3451 = vpop.permute.xlu0 %3450
      %3452 = vrot.lane.b32.xlu0 %v3319, 126
      %v3453 = vpop.permute.xlu0 %3452
      %3454 = vrot.lane.b32.xlu0 %v3320, 126
      %v3455 = vpop.permute.xlu0 %3454
      %3456 = vrot.lane.b32.xlu0 %v3321, 126
      %v3457 = vpop.permute.xlu0 %3456
      %v3458 = vsel %vm430, %v3419, %v3421
      %v3459 = vsel %vm430, %v3421, %v3423
      %v3460 = vsel %vm430, %v3423, %v3425
      %v3461 = vsel %vm430, %v3425, %v3427
      %v3462 = vsel %vm430, %v3429, %v3431
      %v3463 = vsel %vm430, %v3431, %v3433
      %v3464 = vsel %vm430, %v3433, %v3435
      %v3465 = vsel %vm430, %v3435, %v3437
      %v3466 = vsel %vm430, %v3439, %v3441
      %v3467 = vsel %vm430, %v3441, %v3443
      %v3468 = vsel %vm430, %v3443, %v3445
      %v3469 = vsel %vm430, %v3445, %v3447
      %v3470 = vsel %vm430, %v3449, %v3451
      %v3471 = vsel %vm430, %v3451, %v3453
      %v3472 = vsel %vm430, %v3453, %v3455
      %v3473 = vsel %vm430, %v3455, %v3457
      %s3494 = scalar_lea.vmem %s4, 96
      %v3495 = vld [vmem:[%s3494] sm:$0xf]
      %v3496 = vld [vmem:[%s3494 + $0x4] sm:$0xf]
      %v3497 = vld [vmem:[%s3494 + $0x8] sm:$0xf]
      %v3498 = vld [vmem:[%s3494 + $0xc] sm:$0xf]
      %v3499 = vpack.c.bf16 %v3307, %v3302
      %v3500 = vpack.c.bf16 %v3308, %v3303
      %v3501 = vpack.c.bf16 %v3309, %v3304
      %v3502 = vpack.c.bf16 %v3310, %v3305
      %v3503 = vpack.c.bf16 %v3311, %v3306
      %v3504 = vpack.c.bf16 %v3317, %v3312
      %v3505 = vpack.c.bf16 %v3318, %v3313
      %v3506 = vpack.c.bf16 %v3319, %v3314
      %v3507 = vpack.c.bf16 %v3320, %v3315
      %v3508 = vpack.c.bf16 %v3321, %v3316
      %v3509 = vpack.c.bf16 %v3386, %v3382
      %v3510 = vpack.c.bf16 %v3387, %v3383
      %v3511 = vpack.c.bf16 %v3388, %v3384
      %v3512 = vpack.c.bf16 %v3389, %v3385
      %v3513 = vpack.c.bf16 %v3361, %v3351
      %v3514 = vpack.c.bf16 %v3394, %v3390
      %v3515 = vpack.c.bf16 %v3395, %v3391
      %v3516 = vpack.c.bf16 %v3396, %v3392
      %v3517 = vpack.c.bf16 %v3397, %v3393
      %v3518 = vpack.c.bf16 %v3381, %v3371
      %v3519 = vpack.c.bf16 %v3462, %v3458
      %v3520 = vpack.c.bf16 %v3463, %v3459
      %v3521 = vpack.c.bf16 %v3464, %v3460
      %v3522 = vpack.c.bf16 %v3465, %v3461
      %v3523 = vpack.c.bf16 %v3437, %v3427
      %v3524 = vpack.c.bf16 %v3470, %v3466
      %v3525 = vpack.c.bf16 %v3471, %v3467
      %v3526 = vpack.c.bf16 %v3472, %v3468
      %v3527 = vpack.c.bf16 %v3473, %v3469
      %v3528 = vpack.c.bf16 %v3457, %v3447
      %v3533 = vunpack.c.l.b16 %v3495
      %v3534 = vunpack.c.l.b16 %v3496
      %v3535 = vunpack.c.l.b16 %v3497
      %v3536 = vunpack.c.l.b16 %v3498
      %v3537 = vpack.c.b16 %v3534, %v3533
      %v3538 = vpack.c.b16 %v3536, %v3535
      %3569 = vrot.lane.b32.xlu0 %v3499, 25
      %v3570 = vpop.permute.xlu0 %3569
      %3571 = vrot.lane.b32.xlu0 %v3500, 25
      %v3572 = vpop.permute.xlu0 %3571
      %3573 = vrot.lane.b32.xlu0 %v3501, 25
      %v3574 = vpop.permute.xlu0 %3573
      %3575 = vrot.lane.b32.xlu0 %v3502, 25
      %v3576 = vpop.permute.xlu0 %3575
      %3577 = vrot.lane.b32.xlu0 %v3503, 25
      %v3578 = vpop.permute.xlu0 %3577
      %3579 = vrot.lane.b32.xlu0 %v3504, 25
      %v3580 = vpop.permute.xlu0 %3579
      %3581 = vrot.lane.b32.xlu0 %v3505, 25
      %v3582 = vpop.permute.xlu0 %3581
      %3583 = vrot.lane.b32.xlu0 %v3506, 25
      %v3584 = vpop.permute.xlu0 %3583
      %3585 = vrot.lane.b32.xlu0 %v3507, 25
      %v3586 = vpop.permute.xlu0 %3585
      %3587 = vrot.lane.b32.xlu0 %v3508, 25
      %v3588 = vpop.permute.xlu0 %3587
      %3589 = vrot.lane.b32.xlu0 %v3509, 25
      %v3590 = vpop.permute.xlu0 %3589
      %3591 = vrot.lane.b32.xlu0 %v3510, 25
      %v3592 = vpop.permute.xlu0 %3591
      %3593 = vrot.lane.b32.xlu0 %v3511, 25
      %v3594 = vpop.permute.xlu0 %3593
      %3595 = vrot.lane.b32.xlu0 %v3512, 25
      %v3596 = vpop.permute.xlu0 %3595
      %3597 = vrot.lane.b32.xlu0 %v3513, 25
      %v3598 = vpop.permute.xlu0 %3597
      %3599 = vrot.lane.b32.xlu0 %v3514, 25
      %v3600 = vpop.permute.xlu0 %3599
      %3601 = vrot.lane.b32.xlu0 %v3515, 25
      %v3602 = vpop.permute.xlu0 %3601
      %3603 = vrot.lane.b32.xlu0 %v3516, 25
      %v3604 = vpop.permute.xlu0 %3603
      %3605 = vrot.lane.b32.xlu0 %v3517, 25
      %v3606 = vpop.permute.xlu0 %3605
      %3607 = vrot.lane.b32.xlu0 %v3518, 25
      %v3608 = vpop.permute.xlu0 %3607
      %3609 = vrot.lane.b32.xlu0 %v3519, 25
      %v3610 = vpop.permute.xlu0 %3609
      %3611 = vrot.lane.b32.xlu0 %v3520, 25
      %v3612 = vpop.permute.xlu0 %3611
      %3613 = vrot.lane.b32.xlu0 %v3521, 25
      %v3614 = vpop.permute.xlu0 %3613
      %3615 = vrot.lane.b32.xlu0 %v3522, 25
      %v3616 = vpop.permute.xlu0 %3615
      %3617 = vrot.lane.b32.xlu0 %v3523, 25
      %v3618 = vpop.permute.xlu0 %3617
      %3619 = vrot.lane.b32.xlu0 %v3524, 25
      %v3620 = vpop.permute.xlu0 %3619
      %3621 = vrot.lane.b32.xlu0 %v3525, 25
      %v3622 = vpop.permute.xlu0 %3621
      %3623 = vrot.lane.b32.xlu0 %v3526, 25
      %v3624 = vpop.permute.xlu0 %3623
      %3625 = vrot.lane.b32.xlu0 %v3527, 25
      %v3626 = vpop.permute.xlu0 %3625
      %3627 = vrot.lane.b32.xlu0 %v3528, 25
      %v3628 = vpop.permute.xlu0 %3627
      %v3629 = vsel %vm494, %v3570, %v3572
      %v3630 = vsel %vm494, %v3572, %v3574
      %v3631 = vsel %vm494, %v3574, %v3576
      %v3632 = vsel %vm494, %v3576, %v3578
      %v3633 = vsel %vm494, %v3580, %v3582
      %v3634 = vsel %vm494, %v3582, %v3584
      %v3635 = vsel %vm494, %v3584, %v3586
      %v3636 = vsel %vm494, %v3586, %v3588
      %v3637 = vsel %vm494, %v3590, %v3592
      %v3638 = vsel %vm494, %v3592, %v3594
      %v3639 = vsel %vm494, %v3594, %v3596
      %v3640 = vsel %vm494, %v3596, %v3598
      %v3641 = vsel %vm494, %v3600, %v3602
      %v3642 = vsel %vm494, %v3602, %v3604
      %v3643 = vsel %vm494, %v3604, %v3606
      %v3644 = vsel %vm494, %v3606, %v3608
      %v3645 = vsel %vm494, %v3610, %v3612
      %v3646 = vsel %vm494, %v3612, %v3614
      %v3647 = vsel %vm494, %v3614, %v3616
      %v3648 = vsel %vm494, %v3616, %v3618
      %v3649 = vsel %vm494, %v3620, %v3622
      %v3650 = vsel %vm494, %v3622, %v3624
      %v3651 = vsel %vm494, %v3624, %v3626
      %v3652 = vsel %vm494, %v3626, %v3628
      %v3678 = vsel %vm1492, %v3537, 0
      %v3681 = vsel %vm1492, %v3538, 0
      %3683 = vmatprep.subr.bf16.mxu0 %v3630
      %3684 = vmatpush1.bf16.msra.mxu0 %v3629
      %3685 = vmatprep.subr.bf16.mxu0 %v3634
      %3686 = vmatpush1.bf16.msra.mxu0 %v3633
      %3687 = vmatprep.subr.bf16.mxu0 %v3638
      %3688 = vmatpush1.bf16.msra.mxu0 %v3637
      %3689 = vmatprep.subr.bf16.mxu0 %v3642
      %3690 = vmatpush1.bf16.msra.mxu0 %v3641
      %3691 = vmatprep.subr.bf16.mxu0 %v3646
      %3692 = vmatpush1.bf16.msra.mxu0 %v3645
      %3693 = vmatprep.subr.bf16.mxu0 %v3650
      %3694 = vmatpush1.bf16.msra.mxu0 %v3649
      %3695 = vmatprep.subr.bf16.mxu0 0
      %3696 = vmatpush1.bf16.msra.mxu0 0
      %3697 = vmatprep.subr.bf16.mxu0 0
      %3698 = vmatpush1.bf16.msra.mxu0 0
      %3699 = vmatprep.subr.bf16.mxu0 0
      %3700 = vmatpush1.bf16.msra.mxu0 0
      %3701 = vmatprep.subr.bf16.mxu0 0
      %3702 = vmatpush1.bf16.msra.mxu0 0
      %3703 = vmatprep.subr.bf16.mxu0 0
      %3704 = vmatpush1.bf16.msra.mxu0 0
      %3705 = vmatprep.subr.bf16.mxu0 0
      %3706 = vmatpush1.bf16.msra.mxu0 0
      %3707 = vmatprep.subr.bf16.mxu0 0
      %3708 = vmatpush1.bf16.msra.mxu0 0
      %3709 = vmatprep.subr.bf16.mxu0 0
      %3710 = vmatpush1.bf16.msra.mxu0 0
      %3711 = vmatprep.subr.bf16.mxu0 0
      %3712 = vmatpush1.bf16.msra.mxu0 0
      %3713 = vmatprep.subr.bf16.mxu0 0
      %3714 = vmatpush1.bf16.msra.mxu0 0
      %3715 = vmatprep.mubr.bf16.mxu0 0
      %3716 = vmatmul.mubr.bf16.gmra.mrb[0].mxu0 %v3678
      %v3717 = vpop.f32.mrb[0].mxu0
      %v3718 = vadd.f32 0.0, %v3717
      %v3719 = vpop.f32.mrb[0].mxu0
      %v3720 = vadd.f32 0.0, %v3719
      %v3721 = vpop.f32.mrb[0].mxu0
      %v3722 = vadd.f32 0.0, %v3721
      %v3723 = vpop.f32.mrb[0].mxu0
      %v3724 = vadd.f32 0.0, %v3723
      %3725 = vmatprep.mubr.bf16.mxu0 0
      %3726 = vmatmul.mubr.bf16.gmra.mrb[0].mxu0 %v3681
      %v3727 = vpop.f32.mrb[0].mxu0
      %v3728 = vadd.f32 0.0, %v3727
      %v3729 = vpop.f32.mrb[0].mxu0
      %v3730 = vadd.f32 0.0, %v3729
      %v3731 = vpop.f32.mrb[0].mxu0
      %v3732 = vadd.f32 0.0, %v3731
      %v3733 = vpop.f32.mrb[0].mxu0
      %v3734 = vadd.f32 0.0, %v3733
      %3735 = vdwg.mxu0
      %3736 = vmatprep.subr.bf16.mxu0 %v3632
      %3737 = vmatpush1.bf16.msra.mxu0 %v3631
      %3738 = vmatprep.subr.bf16.mxu0 %v3636
      %3739 = vmatpush1.bf16.msra.mxu0 %v3635
      %3740 = vmatprep.subr.bf16.mxu0 %v3640
      %3741 = vmatpush1.bf16.msra.mxu0 %v3639
      %3742 = vmatprep.subr.bf16.mxu0 %v3644
      %3743 = vmatpush1.bf16.msra.mxu0 %v3643
      %3744 = vmatprep.subr.bf16.mxu0 %v3648
      %3745 = vmatpush1.bf16.msra.mxu0 %v3647
      %3746 = vmatprep.subr.bf16.mxu0 %v3652
      %3747 = vmatpush1.bf16.msra.mxu0 %v3651
      %3748 = vmatprep.subr.bf16.mxu0 0
      %3749 = vmatpush1.bf16.msra.mxu0 0
      %3750 = vmatprep.subr.bf16.mxu0 0
      %3751 = vmatpush1.bf16.msra.mxu0 0
      %3752 = vmatprep.subr.bf16.mxu0 0
      %3753 = vmatpush1.bf16.msra.mxu0 0
      %3754 = vmatprep.subr.bf16.mxu0 0
      %3755 = vmatpush1.bf16.msra.mxu0 0
      %3756 = vmatprep.subr.bf16.mxu0 0
      %3757 = vmatpush1.bf16.msra.mxu0 0
      %3758 = vmatprep.subr.bf16.mxu0 0
      %3759 = vmatpush1.bf16.msra.mxu0 0
      %3760 = vmatprep.subr.bf16.mxu0 0
      %3761 = vmatpush1.bf16.msra.mxu0 0
      %3762 = vmatprep.subr.bf16.mxu0 0
      %3763 = vmatpush1.bf16.msra.mxu0 0
      %3764 = vmatprep.subr.bf16.mxu0 0
      %3765 = vmatpush1.bf16.msra.mxu0 0
      %3766 = vmatprep.subr.bf16.mxu0 0
      %3767 = vmatpush1.bf16.msra.mxu0 0
      %3768 = vmatprep.mubr.bf16.mxu0 0
      %3769 = vmatmul.mubr.bf16.gmra.mrb[0].mxu0 %v3678
      %v3770 = vpop.f32.mrb[0].mxu0
      %v3771 = vadd.f32 0.0, %v3770
      %v3772 = vpop.f32.mrb[0].mxu0
      %v3773 = vadd.f32 0.0, %v3772
      %v3774 = vpop.f32.mrb[0].mxu0
      %v3775 = vadd.f32 0.0, %v3774
      %v3776 = vpop.f32.mrb[0].mxu0
      %v3777 = vadd.f32 0.0, %v3776
      %3778 = vmatprep.mubr.bf16.mxu0 0
      %3779 = vmatmul.mubr.bf16.gmra.mrb[0].mxu0 %v3681
      %v3780 = vpop.f32.mrb[0].mxu0
      %v3781 = vadd.f32 0.0, %v3780
      %v3782 = vpop.f32.mrb[0].mxu0
      %v3783 = vadd.f32 0.0, %v3782
      %v3784 = vpop.f32.mrb[0].mxu0
      %v3785 = vadd.f32 0.0, %v3784
      %v3786 = vpop.f32.mrb[0].mxu0
      %v3787 = vadd.f32 0.0, %v3786
      %3788 = vdwg.mxu0
      %v3789 = vadd.f32 %v3285, %v3718
      %v3790 = vadd.f32 %v3285, %v3720
      %v3791 = vadd.f32 %v3285, %v3771
      %v3792 = vadd.f32 %v3285, %v3773
      %v3793 = vadd.f32 %v3290, %v3722
      %v3794 = vadd.f32 %v3290, %v3724
      %v3795 = vadd.f32 %v3290, %v3775
      %v3796 = vadd.f32 %v3290, %v3777
      %v3797 = vadd.f32 %v3295, %v3728
      %v3798 = vadd.f32 %v3295, %v3730
      %v3799 = vadd.f32 %v3295, %v3781
      %v3800 = vadd.f32 %v3295, %v3783
      %v3801 = vadd.f32 %v3300, %v3732
      %v3802 = vadd.f32 %v3300, %v3734
      %v3803 = vadd.f32 %v3300, %v3785
      %v3804 = vadd.f32 %v3300, %v3787
      %s3813 = scalar_lea.vmem %s4, 112
      %v3814 = vld [vmem:[%s3813] sm:$0xf]
      %v3815 = vld [vmem:[%s3813 + $0x4] sm:$0xf]
      %v3816 = vld [vmem:[%s3813 + $0x8] sm:$0xf]
      %v3817 = vld [vmem:[%s3813 + $0xc] sm:$0xf]
      %v3818 = vpack.c.bf16 %v3355, %v3345
      %v3819 = vpack.c.bf16 %v3375, %v3365
      %v3820 = vpack.c.bf16 %v3431, %v3421
      %v3821 = vpack.c.bf16 %v3451, %v3441
      %v3826 = vunpack.c.l.b16 %v3814
      %v3827 = vunpack.c.l.b16 %v3815
      %v3828 = vunpack.c.l.b16 %v3816
      %v3829 = vunpack.c.l.b16 %v3817
      %v3830 = vpack.c.b16 %v3827, %v3826
      %v3831 = vpack.c.b16 %v3829, %v3828
      %3836 = vrot.lane.b32.xlu0 %v3499, 1
      %v3837 = vpop.permute.xlu0 %3836
      %3838 = vrot.lane.b32.xlu0 %v3500, 1
      %v3839 = vpop.permute.xlu0 %3838
      %3840 = vrot.lane.b32.xlu0 %v3501, 1
      %v3841 = vpop.permute.xlu0 %3840
      %3842 = vrot.lane.b32.xlu0 %v3502, 1
      %v3843 = vpop.permute.xlu0 %3842
      %3844 = vrot.lane.b32.xlu0 %v3503, 1
      %v3845 = vpop.permute.xlu0 %3844
      %3846 = vrot.lane.b32.xlu0 %v3504, 1
      %v3847 = vpop.permute.xlu0 %3846
      %3848 = vrot.lane.b32.xlu0 %v3505, 1
      %v3849 = vpop.permute.xlu0 %3848
      %3850 = vrot.lane.b32.xlu0 %v3506, 1
      %v3851 = vpop.permute.xlu0 %3850
      %3852 = vrot.lane.b32.xlu0 %v3507, 1
      %v3853 = vpop.permute.xlu0 %3852
      %3854 = vrot.lane.b32.xlu0 %v3508, 1
      %v3855 = vpop.permute.xlu0 %3854
      %3856 = vrot.lane.b32.xlu0 %v3818, 1
      %v3857 = vpop.permute.xlu0 %3856
      %3858 = vrot.lane.b32.xlu0 %v3510, 1
      %v3859 = vpop.permute.xlu0 %3858
      %3860 = vrot.lane.b32.xlu0 %v3511, 1
      %v3861 = vpop.permute.xlu0 %3860
      %3862 = vrot.lane.b32.xlu0 %v3512, 1
      %v3863 = vpop.permute.xlu0 %3862
      %3864 = vrot.lane.b32.xlu0 %v3513, 1
      %v3865 = vpop.permute.xlu0 %3864
      %3866 = vrot.lane.b32.xlu0 %v3819, 1
      %v3867 = vpop.permute.xlu0 %3866
      %3868 = vrot.lane.b32.xlu0 %v3515, 1
      %v3869 = vpop.permute.xlu0 %3868
      %3870 = vrot.lane.b32.xlu0 %v3516, 1
      %v3871 = vpop.permute.xlu0 %3870
      %3872 = vrot.lane.b32.xlu0 %v3517, 1
      %v3873 = vpop.permute.xlu0 %3872
      %3874 = vrot.lane.b32.xlu0 %v3518, 1
      %v3875 = vpop.permute.xlu0 %3874
      %3876 = vrot.lane.b32.xlu0 %v3820, 1
      %v3877 = vpop.permute.xlu0 %3876
      %3878 = vrot.lane.b32.xlu0 %v3520, 1
      %v3879 = vpop.permute.xlu0 %3878
      %3880 = vrot.lane.b32.xlu0 %v3521, 1
      %v3881 = vpop.permute.xlu0 %3880
      %3882 = vrot.lane.b32.xlu0 %v3522, 1
      %v3883 = vpop.permute.xlu0 %3882
      %3884 = vrot.lane.b32.xlu0 %v3523, 1
      %v3885 = vpop.permute.xlu0 %3884
      %3886 = vrot.lane.b32.xlu0 %v3821, 1
      %v3887 = vpop.permute.xlu0 %3886
      %3888 = vrot.lane.b32.xlu0 %v3525, 1
      %v3889 = vpop.permute.xlu0 %3888
      %3890 = vrot.lane.b32.xlu0 %v3526, 1
      %v3891 = vpop.permute.xlu0 %3890
      %3892 = vrot.lane.b32.xlu0 %v3527, 1
      %v3893 = vpop.permute.xlu0 %3892
      %3894 = vrot.lane.b32.xlu0 %v3528, 1
      %v3895 = vpop.permute.xlu0 %3894
      %v3896 = vsel %vm690, %v3837, %v3839
      %v3897 = vsel %vm690, %v3839, %v3841
      %v3898 = vsel %vm690, %v3841, %v3843
      %v3899 = vsel %vm690, %v3843, %v3845
      %v3900 = vsel %vm690, %v3847, %v3849
      %v3901 = vsel %vm690, %v3849, %v3851
      %v3902 = vsel %vm690, %v3851, %v3853
      %v3903 = vsel %vm690, %v3853, %v3855
      %v3904 = vsel %vm690, %v3857, %v3859
      %v3905 = vsel %vm690, %v3859, %v3861
      %v3906 = vsel %vm690, %v3861, %v3863
      %v3907 = vsel %vm690, %v3863, %v3865
      %v3908 = vsel %vm690, %v3867, %v3869
      %v3909 = vsel %vm690, %v3869, %v3871
      %v3910 = vsel %vm690, %v3871, %v3873
      %v3911 = vsel %vm690, %v3873, %v3875
      %v3912 = vsel %vm690, %v3877, %v3879
      %v3913 = vsel %vm690, %v3879, %v3881
      %v3914 = vsel %vm690, %v3881, %v3883
      %v3915 = vsel %vm690, %v3883, %v3885
      %v3916 = vsel %vm690, %v3887, %v3889
      %v3917 = vsel %vm690, %v3889, %v3891
      %v3918 = vsel %vm690, %v3891, %v3893
      %v3919 = vsel %vm690, %v3893, %v3895
      %v3945 = vsel %vm1492, %v3830, 0
      %v3948 = vsel %vm1492, %v3831, 0
      %3950 = vmatprep.subr.bf16.mxu0 %v3897
      %3951 = vmatpush1.bf16.msra.mxu0 %v3896
      %3952 = vmatprep.subr.bf16.mxu0 %v3901
      %3953 = vmatpush1.bf16.msra.mxu0 %v3900
      %3954 = vmatprep.subr.bf16.mxu0 %v3905
      %3955 = vmatpush1.bf16.msra.mxu0 %v3904
      %3956 = vmatprep.subr.bf16.mxu0 %v3909
      %3957 = vmatpush1.bf16.msra.mxu0 %v3908
      %3958 = vmatprep.subr.bf16.mxu0 %v3913
      %3959 = vmatpush1.bf16.msra.mxu0 %v3912
      %3960 = vmatprep.subr.bf16.mxu0 %v3917
      %3961 = vmatpush1.bf16.msra.mxu0 %v3916
      %3962 = vmatprep.subr.bf16.mxu0 0
      %3963 = vmatpush1.bf16.msra.mxu0 0
      %3964 = vmatprep.subr.bf16.mxu0 0
      %3965 = vmatpush1.bf16.msra.mxu0 0
      %3966 = vmatprep.subr.bf16.mxu0 0
      %3967 = vmatpush1.bf16.msra.mxu0 0
      %3968 = vmatprep.subr.bf16.mxu0 0
      %3969 = vmatpush1.bf16.msra.mxu0 0
      %3970 = vmatprep.subr.bf16.mxu0 0
      %3971 = vmatpush1.bf16.msra.mxu0 0
      %3972 = vmatprep.subr.bf16.mxu0 0
      %3973 = vmatpush1.bf16.msra.mxu0 0
      %3974 = vmatprep.subr.bf16.mxu0 0
      %3975 = vmatpush1.bf16.msra.mxu0 0
      %3976 = vmatprep.subr.bf16.mxu0 0
      %3977 = vmatpush1.bf16.msra.mxu0 0
      %3978 = vmatprep.subr.bf16.mxu0 0
      %3979 = vmatpush1.bf16.msra.mxu0 0
      %3980 = vmatprep.subr.bf16.mxu0 0
      %3981 = vmatpush1.bf16.msra.mxu0 0
      %3982 = vmatprep.mubr.bf16.mxu0 0
      %3983 = vmatmul.mubr.bf16.gmra.mrb[0].mxu0 %v3945
      %v3984 = vpop.f32.mrb[0].mxu0
      %v3985 = vadd.f32 0.0, %v3984
      %v3986 = vpop.f32.mrb[0].mxu0
      %v3987 = vadd.f32 0.0, %v3986
      %v3988 = vpop.f32.mrb[0].mxu0
      %v3989 = vadd.f32 0.0, %v3988
      %v3990 = vpop.f32.mrb[0].mxu0
      %v3991 = vadd.f32 0.0, %v3990
      %3992 = vmatprep.mubr.bf16.mxu0 0
      %3993 = vmatmul.mubr.bf16.gmra.mrb[0].mxu0 %v3948
      %v3994 = vpop.f32.mrb[0].mxu0
      %v3995 = vadd.f32 0.0, %v3994
      %v3996 = vpop.f32.mrb[0].mxu0
      %v3997 = vadd.f32 0.0, %v3996
      %v3998 = vpop.f32.mrb[0].mxu0
      %v3999 = vadd.f32 0.0, %v3998
      %v4000 = vpop.f32.mrb[0].mxu0
      %v4001 = vadd.f32 0.0, %v4000
      %4002 = vdwg.mxu0
      %4003 = vmatprep.subr.bf16.mxu0 %v3899
      %4004 = vmatpush1.bf16.msra.mxu0 %v3898
      %4005 = vmatprep.subr.bf16.mxu0 %v3903
      %4006 = vmatpush1.bf16.msra.mxu0 %v3902
      %4007 = vmatprep.subr.bf16.mxu0 %v3907
      %4008 = vmatpush1.bf16.msra.mxu0 %v3906
      %4009 = vmatprep.subr.bf16.mxu0 %v3911
      %4010 = vmatpush1.bf16.msra.mxu0 %v3910
      %4011 = vmatprep.subr.bf16.mxu0 %v3915
      %4012 = vmatpush1.bf16.msra.mxu0 %v3914
      %4013 = vmatprep.subr.bf16.mxu0 %v3919
      %4014 = vmatpush1.bf16.msra.mxu0 %v3918
      %4015 = vmatprep.subr.bf16.mxu0 0
      %4016 = vmatpush1.bf16.msra.mxu0 0
      %4017 = vmatprep.subr.bf16.mxu0 0
      %4018 = vmatpush1.bf16.msra.mxu0 0
      %4019 = vmatprep.subr.bf16.mxu0 0
      %4020 = vmatpush1.bf16.msra.mxu0 0
      %4021 = vmatprep.subr.bf16.mxu0 0
      %4022 = vmatpush1.bf16.msra.mxu0 0
      %4023 = vmatprep.subr.bf16.mxu0 0
      %4024 = vmatpush1.bf16.msra.mxu0 0
      %4025 = vmatprep.subr.bf16.mxu0 0
      %4026 = vmatpush1.bf16.msra.mxu0 0
      %4027 = vmatprep.subr.bf16.mxu0 0
      %4028 = vmatpush1.bf16.msra.mxu0 0
      %4029 = vmatprep.subr.bf16.mxu0 0
      %4030 = vmatpush1.bf16.msra.mxu0 0
      %4031 = vmatprep.subr.bf16.mxu0 0
      %4032 = vmatpush1.bf16.msra.mxu0 0
      %4033 = vmatprep.subr.bf16.mxu0 0
      %4034 = vmatpush1.bf16.msra.mxu0 0
      %4035 = vmatprep.mubr.bf16.mxu0 0
      %4036 = vmatmul.mubr.bf16.gmra.mrb[0].mxu0 %v3945
      %v4037 = vpop.f32.mrb[0].mxu0
      %v4038 = vadd.f32 0.0, %v4037
      %v4039 = vpop.f32.mrb[0].mxu0
      %v4040 = vadd.f32 0.0, %v4039
      %v4041 = vpop.f32.mrb[0].mxu0
      %v4042 = vadd.f32 0.0, %v4041
      %v4043 = vpop.f32.mrb[0].mxu0
      %v4044 = vadd.f32 0.0, %v4043
      %4045 = vmatprep.mubr.bf16.mxu0 0
      %4046 = vmatmul.mubr.bf16.gmra.mrb[0].mxu0 %v3948
      %v4047 = vpop.f32.mrb[0].mxu0
      %v4048 = vadd.f32 0.0, %v4047
      %v4049 = vpop.f32.mrb[0].mxu0
      %v4050 = vadd.f32 0.0, %v4049
      %v4051 = vpop.f32.mrb[0].mxu0
      %v4052 = vadd.f32 0.0, %v4051
      %v4053 = vpop.f32.mrb[0].mxu0
      %v4054 = vadd.f32 0.0, %v4053
      %4055 = vdwg.mxu0
      %v4056 = vadd.f32 %v3789, %v3985
      %v4057 = vadd.f32 %v3790, %v3987
      %v4058 = vadd.f32 %v3791, %v4038
      %v4059 = vadd.f32 %v3792, %v4040
      %v4060 = vadd.f32 %v3793, %v3989
      %v4061 = vadd.f32 %v3794, %v3991
      %v4062 = vadd.f32 %v3795, %v4042
      %v4063 = vadd.f32 %v3796, %v4044
      %v4064 = vadd.f32 %v3797, %v3995
      %v4065 = vadd.f32 %v3798, %v3997
      %v4066 = vadd.f32 %v3799, %v4048
      %v4067 = vadd.f32 %v3800, %v4050
      %v4068 = vadd.f32 %v3801, %v3999
      %v4069 = vadd.f32 %v3802, %v4001
      %v4070 = vadd.f32 %v3803, %v4052
      %v4071 = vadd.f32 %v3804, %v4054
      %s4072 = scalar_lea.vmem %s4, 128
      %v4073 = vld [vmem:[%s4072] sm:$0xf]
      %v4074 = vld [vmem:[%s4072 + $0x4] sm:$0xf]
      %v4075 = vld [vmem:[%s4072 + $0x8] sm:$0xf]
      %v4076 = vld [vmem:[%s4072 + $0xc] sm:$0xf]
      %v4081 = vunpack.c.l.b16 %v4073
      %v4082 = vunpack.c.l.b16 %v4074
      %v4083 = vunpack.c.l.b16 %v4075
      %v4084 = vunpack.c.l.b16 %v4076
      %v4085 = vpack.c.b16 %v4082, %v4081
      %v4086 = vpack.c.b16 %v4084, %v4083
      %4087 = vrot.lane.b32.xlu0 %v3500, 105
      %v4088 = vpop.permute.xlu0 %4087
      %4089 = vrot.lane.b32.xlu0 %v3501, 105
      %v4090 = vpop.permute.xlu0 %4089
      %4091 = vrot.lane.b32.xlu0 %v3502, 105
      %v4092 = vpop.permute.xlu0 %4091
      %4093 = vrot.lane.b32.xlu0 %v3503, 105
      %v4094 = vpop.permute.xlu0 %4093
      %4095 = vrot.lane.b32.xlu0 %v3505, 105
      %v4096 = vpop.permute.xlu0 %4095
      %4097 = vrot.lane.b32.xlu0 %v3506, 105
      %v4098 = vpop.permute.xlu0 %4097
      %4099 = vrot.lane.b32.xlu0 %v3507, 105
      %v4100 = vpop.permute.xlu0 %4099
      %4101 = vrot.lane.b32.xlu0 %v3508, 105
      %v4102 = vpop.permute.xlu0 %4101
      %4103 = vrot.lane.b32.xlu0 %v3510, 105
      %v4104 = vpop.permute.xlu0 %4103
      %4105 = vrot.lane.b32.xlu0 %v3511, 105
      %v4106 = vpop.permute.xlu0 %4105
      %4107 = vrot.lane.b32.xlu0 %v3512, 105
      %v4108 = vpop.permute.xlu0 %4107
      %4109 = vrot.lane.b32.xlu0 %v3513, 105
      %v4110 = vpop.permute.xlu0 %4109
      %4111 = vrot.lane.b32.xlu0 %v3515, 105
      %v4112 = vpop.permute.xlu0 %4111
      %4113 = vrot.lane.b32.xlu0 %v3516, 105
      %v4114 = vpop.permute.xlu0 %4113
      %4115 = vrot.lane.b32.xlu0 %v3517, 105
      %v4116 = vpop.permute.xlu0 %4115
      %4117 = vrot.lane.b32.xlu0 %v3518, 105
      %v4118 = vpop.permute.xlu0 %4117
      %4119 = vrot.lane.b32.xlu0 %v3520, 105
      %v4120 = vpop.permute.xlu0 %4119
      %4121 = vrot.lane.b32.xlu0 %v3521, 105
      %v4122 = vpop.permute.xlu0 %4121
      %4123 = vrot.lane.b32.xlu0 %v3522, 105
      %v4124 = vpop.permute.xlu0 %4123
      %4125 = vrot.lane.b32.xlu0 %v3523, 105
      %v4126 = vpop.permute.xlu0 %4125
      %4127 = vrot.lane.b32.xlu0 %v3525, 105
      %v4128 = vpop.permute.xlu0 %4127
      %4129 = vrot.lane.b32.xlu0 %v3526, 105
      %v4130 = vpop.permute.xlu0 %4129
      %4131 = vrot.lane.b32.xlu0 %v3527, 105
      %v4132 = vpop.permute.xlu0 %4131
      %4133 = vrot.lane.b32.xlu0 %v3528, 105
      %v4134 = vpop.permute.xlu0 %4133
      %v4135 = vsel %vm874, %v4088, %v4090
      %v4136 = vsel %vm874, %v4090, %v4092
      %v4137 = vsel %vm874, %v4092, %v4094
      %v4138 = vsel %vm874, %v4096, %v4098
      %v4139 = vsel %vm874, %v4098, %v4100
      %v4140 = vsel %vm874, %v4100, %v4102
      %v4141 = vsel %vm874, %v4104, %v4106
      %v4142 = vsel %vm874, %v4106, %v4108
      %v4143 = vsel %vm874, %v4108, %v4110
      %v4144 = vsel %vm874, %v4112, %v4114
      %v4145 = vsel %vm874, %v4114, %v4116
      %v4146 = vsel %vm874, %v4116, %v4118
      %v4147 = vsel %vm874, %v4120, %v4122
      %v4148 = vsel %vm874, %v4122, %v4124
      %v4149 = vsel %vm874, %v4124, %v4126
      %v4150 = vsel %vm874, %v4128, %v4130
      %v4151 = vsel %vm874, %v4130, %v4132
      %v4152 = vsel %vm874, %v4132, %v4134
      %v4178 = vsel %vm1492, %v4085, 0
      %v4181 = vsel %vm1492, %v4086, 0
      %4183 = vmatprep.subr.bf16.mxu0 %v4136
      %4184 = vmatpush1.bf16.msra.mxu0 %v4135
      %4185 = vmatprep.subr.bf16.mxu0 %v4139
      %4186 = vmatpush1.bf16.msra.mxu0 %v4138
      %4187 = vmatprep.subr.bf16.mxu0 %v4142
      %4188 = vmatpush1.bf16.msra.mxu0 %v4141
      %4189 = vmatprep.subr.bf16.mxu0 %v4145
      %4190 = vmatpush1.bf16.msra.mxu0 %v4144
      %4191 = vmatprep.subr.bf16.mxu0 %v4148
      %4192 = vmatpush1.bf16.msra.mxu0 %v4147
      %4193 = vmatprep.subr.bf16.mxu0 %v4151
      %4194 = vmatpush1.bf16.msra.mxu0 %v4150
      %4195 = vmatprep.subr.bf16.mxu0 0
      %4196 = vmatpush1.bf16.msra.mxu0 0
      %4197 = vmatprep.subr.bf16.mxu0 0
      %4198 = vmatpush1.bf16.msra.mxu0 0
      %4199 = vmatprep.subr.bf16.mxu0 0
      %4200 = vmatpush1.bf16.msra.mxu0 0
      %4201 = vmatprep.subr.bf16.mxu0 0
      %4202 = vmatpush1.bf16.msra.mxu0 0
      %4203 = vmatprep.subr.bf16.mxu0 0
      %4204 = vmatpush1.bf16.msra.mxu0 0
      %4205 = vmatprep.subr.bf16.mxu0 0
      %4206 = vmatpush1.bf16.msra.mxu0 0
      %4207 = vmatprep.subr.bf16.mxu0 0
      %4208 = vmatpush1.bf16.msra.mxu0 0
      %4209 = vmatprep.subr.bf16.mxu0 0
      %4210 = vmatpush1.bf16.msra.mxu0 0
      %4211 = vmatprep.subr.bf16.mxu0 0
      %4212 = vmatpush1.bf16.msra.mxu0 0
      %4213 = vmatprep.subr.bf16.mxu0 0
      %4214 = vmatpush1.bf16.msra.mxu0 0
      %4215 = vmatprep.mubr.bf16.mxu0 0
      %4216 = vmatmul.mubr.bf16.gmra.mrb[0].mxu0 %v4178
      %v4217 = vpop.f32.mrb[0].mxu0
      %v4218 = vadd.f32 0.0, %v4217
      %v4219 = vpop.f32.mrb[0].mxu0
      %v4220 = vadd.f32 0.0, %v4219
      %v4221 = vpop.f32.mrb[0].mxu0
      %v4222 = vadd.f32 0.0, %v4221
      %v4223 = vpop.f32.mrb[0].mxu0
      %v4224 = vadd.f32 0.0, %v4223
      %4225 = vmatprep.mubr.bf16.mxu0 0
      %4226 = vmatmul.mubr.bf16.gmra.mrb[0].mxu0 %v4181
      %v4227 = vpop.f32.mrb[0].mxu0
      %v4228 = vadd.f32 0.0, %v4227
      %v4229 = vpop.f32.mrb[0].mxu0
      %v4230 = vadd.f32 0.0, %v4229
      %v4231 = vpop.f32.mrb[0].mxu0
      %v4232 = vadd.f32 0.0, %v4231
      %v4233 = vpop.f32.mrb[0].mxu0
      %v4234 = vadd.f32 0.0, %v4233
      %4235 = vdwg.mxu0
      %4236 = vmatprep.subr.bf16.mxu0 %v4094
      %4237 = vmatpush1.bf16.msra.mxu0 %v4137
      %4238 = vmatprep.subr.bf16.mxu0 %v4102
      %4239 = vmatpush1.bf16.msra.mxu0 %v4140
      %4240 = vmatprep.subr.bf16.mxu0 %v4110
      %4241 = vmatpush1.bf16.msra.mxu0 %v4143
      %4242 = vmatprep.subr.bf16.mxu0 %v4118
      %4243 = vmatpush1.bf16.msra.mxu0 %v4146
      %4244 = vmatprep.subr.bf16.mxu0 %v4126
      %4245 = vmatpush1.bf16.msra.mxu0 %v4149
      %4246 = vmatprep.subr.bf16.mxu0 %v4134
      %4247 = vmatpush1.bf16.msra.mxu0 %v4152
      %4248 = vmatprep.subr.bf16.mxu0 0
      %4249 = vmatpush1.bf16.msra.mxu0 0
      %4250 = vmatprep.subr.bf16.mxu0 0
      %4251 = vmatpush1.bf16.msra.mxu0 0
      %4252 = vmatprep.subr.bf16.mxu0 0
      %4253 = vmatpush1.bf16.msra.mxu0 0
      %4254 = vmatprep.subr.bf16.mxu0 0
      %4255 = vmatpush1.bf16.msra.mxu0 0
      %4256 = vmatprep.subr.bf16.mxu0 0
      %4257 = vmatpush1.bf16.msra.mxu0 0
      %4258 = vmatprep.subr.bf16.mxu0 0
      %4259 = vmatpush1.bf16.msra.mxu0 0
      %4260 = vmatprep.subr.bf16.mxu0 0
      %4261 = vmatpush1.bf16.msra.mxu0 0
      %4262 = vmatprep.subr.bf16.mxu0 0
      %4263 = vmatpush1.bf16.msra.mxu0 0
      %4264 = vmatprep.subr.bf16.mxu0 0
      %4265 = vmatpush1.bf16.msra.mxu0 0
      %4266 = vmatprep.subr.bf16.mxu0 0
      %4267 = vmatpush1.bf16.msra.mxu0 0
      %4268 = vmatprep.mubr.bf16.mxu0 0
      %4269 = vmatmul.mubr.bf16.gmra.mrb[0].mxu0 %v4178
      %v4270 = vpop.f32.mrb[0].mxu0
      %v4271 = vadd.f32 0.0, %v4270
      %v4272 = vpop.f32.mrb[0].mxu0
      %v4273 = vadd.f32 0.0, %v4272
      %v4274 = vpop.f32.mrb[0].mxu0
      %v4275 = vadd.f32 0.0, %v4274
      %v4276 = vpop.f32.mrb[0].mxu0
      %v4277 = vadd.f32 0.0, %v4276
      %4278 = vmatprep.mubr.bf16.mxu0 0
      %4279 = vmatmul.mubr.bf16.gmra.mrb[0].mxu0 %v4181
      %v4280 = vpop.f32.mrb[0].mxu0
      %v4281 = vadd.f32 0.0, %v4280
      %v4282 = vpop.f32.mrb[0].mxu0
      %v4283 = vadd.f32 0.0, %v4282
      %v4284 = vpop.f32.mrb[0].mxu0
      %v4285 = vadd.f32 0.0, %v4284
      %v4286 = vpop.f32.mrb[0].mxu0
      %v4287 = vadd.f32 0.0, %v4286
      %4288 = vdwg.mxu0
      %v4289 = vadd.f32 %v4056, %v4218
      %v4290 = vadd.f32 %v4057, %v4220
      %v4291 = vadd.f32 %v4058, %v4271
      %v4292 = vadd.f32 %v4059, %v4273
      %v4293 = vadd.f32 %v4060, %v4222
      %v4294 = vadd.f32 %v4061, %v4224
      %v4295 = vadd.f32 %v4062, %v4275
      %v4296 = vadd.f32 %v4063, %v4277
      %v4297 = vadd.f32 %v4064, %v4228
      %v4298 = vadd.f32 %v4065, %v4230
      %v4299 = vadd.f32 %v4066, %v4281
      %v4300 = vadd.f32 %v4067, %v4283
      %v4301 = vadd.f32 %v4068, %v4232
      %v4302 = vadd.f32 %v4069, %v4234
      %v4303 = vadd.f32 %v4070, %v4285
      %v4304 = vadd.f32 %v4071, %v4287
      %v4305 = vmax.f32 %v4289, 0.0
      %v4306 = vmax.f32 %v4290, 0.0
      %v4307 = vmax.f32 %v4291, 0.0
      %v4308 = vmax.f32 %v4292, 0.0
      %v4309 = vmax.f32 %v4293, 0.0
      %v4310 = vmax.f32 %v4294, 0.0
      %v4311 = vmax.f32 %v4295, 0.0
      %v4312 = vmax.f32 %v4296, 0.0
      %v4313 = vmax.f32 %v4297, 0.0
      %v4314 = vmax.f32 %v4298, 0.0
      %v4315 = vmax.f32 %v4299, 0.0
      %v4316 = vmax.f32 %v4300, 0.0
      %v4317 = vmax.f32 %v4301, 0.0
      %v4318 = vmax.f32 %v4302, 0.0
      %v4319 = vmax.f32 %v4303, 0.0
      %v4320 = vmax.f32 %v4304, 0.0
      %v4321 = vsel %vm1058, %v4305, 0.0
      %v4322 = vsel %vm1059, %v4306, 0.0
      %v4323 = vsel %vm1060, %v4307, 0.0
      %v4324 = vsel %vm1061, %v4308, 0.0
      %v4325 = vsel %vm1058, %v4309, 0.0
      %v4326 = vsel %vm1059, %v4310, 0.0
      %v4327 = vsel %vm1060, %v4311, 0.0
      %v4328 = vsel %vm1061, %v4312, 0.0
      %v4329 = vsel %vm1058, %v4313, 0.0
      %v4330 = vsel %vm1059, %v4314, 0.0
      %v4331 = vsel %vm1060, %v4315, 0.0
      %v4332 = vsel %vm1061, %v4316, 0.0
      %v4333 = vsel %vm1058, %v4317, 0.0
      %v4334 = vsel %vm1059, %v4318, 0.0
      %v4335 = vsel %vm1060, %v4319, 0.0
      %v4336 = vsel %vm1061, %v4320, 0.0
      %4337 = vst [vmem:[#allocation3 + $0x8] sm:$0xff] %v4321
      %4338 = vst [vmem:[#allocation3 + $0x10] sm:$0xff] %v4322
      %4339 = vst [vmem:[#allocation3 + $0x18] sm:$0xff] %v4323
      %4340 = vst.msk [vmem:[#allocation3 + $0x20] sm:$0xff] %vm314, %v4324
      %4341 = vst [vmem:[#allocation3 + $0x38] sm:$0xff] %v4325
      %4342 = vst [vmem:[#allocation3 + $0x40] sm:$0xff] %v4326
      %4343 = vst [vmem:[#allocation3 + $0x48] sm:$0xff] %v4327
      %4344 = vst.msk [vmem:[#allocation3 + $0x50] sm:$0xff] %vm314, %v4328
      %4345 = vst [vmem:[#allocation3 + $0x68] sm:$0xff] %v4329
      %4346 = vst [vmem:[#allocation3 + $0x70] sm:$0xff] %v4330
      %4347 = vst [vmem:[#allocation3 + $0x78] sm:$0xff] %v4331
      %4348 = vst.msk [vmem:[#allocation3 + $0x80] sm:$0xff] %vm314, %v4332
      %4349 = vst [vmem:[#allocation3 + $0x98] sm:$0xff] %v4333
      %4350 = vst [vmem:[#allocation3 + $0xa0] sm:$0xff] %v4334
      %4351 = vst [vmem:[#allocation3 + $0xa8] sm:$0xff] %v4335
      %4352 = vst.msk [vmem:[#allocation3 + $0xb0] sm:$0xff] %vm314, %v4336
      %s4353 = scalar_lea.vmem %s5, 96
      %v4354 = vld [vmem:[%s4353] sm:$0xff]
      %v4355 = vld [vmem:[%s4353 + $0x8] sm:$0xff]
      %v4356 = vld [vmem:[%s4353 + $0x10] sm:$0xff]
      %v4357 = vld [vmem:[%s4353 + $0x18] sm:$0xff]
      %4359 = vset.pattern.permute.xlu0 0
      %4360 = vperm.xlu0 %4359, %v4354
      %v4361 = vpop.permute.xlu0 %4360
      %4364 = vset.pattern.permute.xlu0 0
      %4365 = vperm.xlu0 %4364, %v4355
      %v4366 = vpop.permute.xlu0 %4365
      %4369 = vset.pattern.permute.xlu0 0
      %4370 = vperm.xlu0 %4369, %v4356
      %v4371 = vpop.permute.xlu0 %4370
      %4374 = vset.pattern.permute.xlu0 0
      %4375 = vperm.xlu0 %4374, %v4357
      %v4376 = vpop.permute.xlu0 %4375
      %v4378 = vld [vmem:[#allocation3] sm:$0xff]
      %v4379 = vld [vmem:[#allocation3 + $0x8] sm:$0xff]
      %v4380 = vld [vmem:[#allocation3 + $0x10] sm:$0xff]
      %v4381 = vld [vmem:[#allocation3 + $0x18] sm:$0xff]
      %v4382 = vld [vmem:[#allocation3 + $0x20] sm:$0xff]
      %v4383 = vld [vmem:[#allocation3 + $0x30] sm:$0xff]
      %v4384 = vld [vmem:[#allocation3 + $0x38] sm:$0xff]
      %v4385 = vld [vmem:[#allocation3 + $0x40] sm:$0xff]
      %v4386 = vld [vmem:[#allocation3 + $0x48] sm:$0xff]
      %v4387 = vld [vmem:[#allocation3 + $0x50] sm:$0xff]
      %v4388 = vld [vmem:[#allocation3 + $0x60] sm:$0xff]
      %v4389 = vld [vmem:[#allocation3 + $0x68] sm:$0xff]
      %v4390 = vld [vmem:[#allocation3 + $0x70] sm:$0xff]
      %v4391 = vld [vmem:[#allocation3 + $0x78] sm:$0xff]
      %v4392 = vld [vmem:[#allocation3 + $0x80] sm:$0xff]
      %v4393 = vld [vmem:[#allocation3 + $0x90] sm:$0xff]
      %v4394 = vld [vmem:[#allocation3 + $0x98] sm:$0xff]
      %v4395 = vld [vmem:[#allocation3 + $0xa0] sm:$0xff]
      %v4396 = vld [vmem:[#allocation3 + $0xa8] sm:$0xff]
      %v4397 = vld [vmem:[#allocation3 + $0xb0] sm:$0xff]
      %4418 = vrot.lane.b32.xlu0 %v4378, 127
      %v4419 = vpop.permute.xlu0 %4418
      %4420 = vrot.lane.b32.xlu0 %v4379, 127
      %v4421 = vpop.permute.xlu0 %4420
      %4422 = vrot.lane.b32.xlu0 %v4380, 127
      %v4423 = vpop.permute.xlu0 %4422
      %4424 = vrot.lane.b32.xlu0 %v4381, 127
      %v4425 = vpop.permute.xlu0 %4424
      %4426 = vrot.lane.b32.xlu0 %v4382, 127
      %v4427 = vpop.permute.xlu0 %4426
      %4428 = vrot.lane.b32.xlu0 %v4383, 127
      %v4429 = vpop.permute.xlu0 %4428
      %4430 = vrot.lane.b32.xlu0 %v4384, 127
      %v4431 = vpop.permute.xlu0 %4430
      %4432 = vrot.lane.b32.xlu0 %v4385, 127
      %v4433 = vpop.permute.xlu0 %4432
      %4434 = vrot.lane.b32.xlu0 %v4386, 127
      %v4435 = vpop.permute.xlu0 %4434
      %4436 = vrot.lane.b32.xlu0 %v4387, 127
      %v4437 = vpop.permute.xlu0 %4436
      %4438 = vrot.lane.b32.xlu0 %v4388, 127
      %v4439 = vpop.permute.xlu0 %4438
      %4440 = vrot.lane.b32.xlu0 %v4389, 127
      %v4441 = vpop.permute.xlu0 %4440
      %4442 = vrot.lane.b32.xlu0 %v4390, 127
      %v4443 = vpop.permute.xlu0 %4442
      %4444 = vrot.lane.b32.xlu0 %v4391, 127
      %v4445 = vpop.permute.xlu0 %4444
      %4446 = vrot.lane.b32.xlu0 %v4392, 127
      %v4447 = vpop.permute.xlu0 %4446
      %4448 = vrot.lane.b32.xlu0 %v4393, 127
      %v4449 = vpop.permute.xlu0 %4448
      %4450 = vrot.lane.b32.xlu0 %v4394, 127
      %v4451 = vpop.permute.xlu0 %4450
      %4452 = vrot.lane.b32.xlu0 %v4395, 127
      %v4453 = vpop.permute.xlu0 %4452
      %4454 = vrot.lane.b32.xlu0 %v4396, 127
      %v4455 = vpop.permute.xlu0 %4454
      %4456 = vrot.lane.b32.xlu0 %v4397, 127
      %v4457 = vpop.permute.xlu0 %4456
      %v4458 = vsel %vm410, %v4419, %v4421
      %v4459 = vsel %vm410, %v4421, %v4423
      %v4460 = vsel %vm410, %v4423, %v4425
      %v4461 = vsel %vm410, %v4425, %v4427
      %v4462 = vsel %vm410, %v4429, %v4431
      %v4463 = vsel %vm410, %v4431, %v4433
      %v4464 = vsel %vm410, %v4433, %v4435
      %v4465 = vsel %vm410, %v4435, %v4437
      %v4466 = vsel %vm410, %v4439, %v4441
      %v4467 = vsel %vm410, %v4441, %v4443
      %v4468 = vsel %vm410, %v4443, %v4445
      %v4469 = vsel %vm410, %v4445, %v4447
      %v4470 = vsel %vm410, %v4449, %v4451
      %v4471 = vsel %vm410, %v4451, %v4453
      %v4472 = vsel %vm410, %v4453, %v4455
      %v4473 = vsel %vm410, %v4455, %v4457
      %4494 = vrot.lane.b32.xlu0 %v4378, 126
      %v4495 = vpop.permute.xlu0 %4494
      %4496 = vrot.lane.b32.xlu0 %v4379, 126
      %v4497 = vpop.permute.xlu0 %4496
      %4498 = vrot.lane.b32.xlu0 %v4380, 126
      %v4499 = vpop.permute.xlu0 %4498
      %4500 = vrot.lane.b32.xlu0 %v4381, 126
      %v4501 = vpop.permute.xlu0 %4500
      %4502 = vrot.lane.b32.xlu0 %v4382, 126
      %v4503 = vpop.permute.xlu0 %4502
      %4504 = vrot.lane.b32.xlu0 %v4383, 126
      %v4505 = vpop.permute.xlu0 %4504
      %4506 = vrot.lane.b32.xlu0 %v4384, 126
      %v4507 = vpop.permute.xlu0 %4506
      %4508 = vrot.lane.b32.xlu0 %v4385, 126
      %v4509 = vpop.permute.xlu0 %4508
      %4510 = vrot.lane.b32.xlu0 %v4386, 126
      %v4511 = vpop.permute.xlu0 %4510
      %4512 = vrot.lane.b32.xlu0 %v4387, 126
      %v4513 = vpop.permute.xlu0 %4512
      %4514 = vrot.lane.b32.xlu0 %v4388, 126
      %v4515 = vpop.permute.xlu0 %4514
      %4516 = vrot.lane.b32.xlu0 %v4389, 126
      %v4517 = vpop.permute.xlu0 %4516
      %4518 = vrot.lane.b32.xlu0 %v4390, 126
      %v4519 = vpop.permute.xlu0 %4518
      %4520 = vrot.lane.b32.xlu0 %v4391, 126
      %v4521 = vpop.permute.xlu0 %4520
      %4522 = vrot.lane.b32.xlu0 %v4392, 126
      %v4523 = vpop.permute.xlu0 %4522
      %4524 = vrot.lane.b32.xlu0 %v4393, 126
      %v4525 = vpop.permute.xlu0 %4524
      %4526 = vrot.lane.b32.xlu0 %v4394, 126
      %v4527 = vpop.permute.xlu0 %4526
      %4528 = vrot.lane.b32.xlu0 %v4395, 126
      %v4529 = vpop.permute.xlu0 %4528
      %4530 = vrot.lane.b32.xlu0 %v4396, 126
      %v4531 = vpop.permute.xlu0 %4530
      %4532 = vrot.lane.b32.xlu0 %v4397, 126
      %v4533 = vpop.permute.xlu0 %4532
      %v4534 = vsel %vm430, %v4495, %v4497
      %v4535 = vsel %vm430, %v4497, %v4499
      %v4536 = vsel %vm430, %v4499, %v4501
      %v4537 = vsel %vm430, %v4501, %v4503
      %v4538 = vsel %vm430, %v4505, %v4507
      %v4539 = vsel %vm430, %v4507, %v4509
      %v4540 = vsel %vm430, %v4509, %v4511
      %v4541 = vsel %vm430, %v4511, %v4513
      %v4542 = vsel %vm430, %v4515, %v4517
      %v4543 = vsel %vm430, %v4517, %v4519
      %v4544 = vsel %vm430, %v4519, %v4521
      %v4545 = vsel %vm430, %v4521, %v4523
      %v4546 = vsel %vm430, %v4525, %v4527
      %v4547 = vsel %vm430, %v4527, %v4529
      %v4548 = vsel %vm430, %v4529, %v4531
      %v4549 = vsel %vm430, %v4531, %v4533
      %s4570 = scalar_lea.vmem %s4, 144
      %v4571 = vld [vmem:[%s4570] sm:$0xf]
      %v4572 = vld [vmem:[%s4570 + $0x4] sm:$0xf]
      %v4573 = vld [vmem:[%s4570 + $0x8] sm:$0xf]
      %v4574 = vld [vmem:[%s4570 + $0xc] sm:$0xf]
      %v4575 = vpack.c.bf16 %v4383, %v4378
      %v4576 = vpack.c.bf16 %v4384, %v4379
      %v4577 = vpack.c.bf16 %v4385, %v4380
      %v4578 = vpack.c.bf16 %v4386, %v4381
      %v4579 = vpack.c.bf16 %v4387, %v4382
      %v4580 = vpack.c.bf16 %v4393, %v4388
      %v4581 = vpack.c.bf16 %v4394, %v4389
      %v4582 = vpack.c.bf16 %v4395, %v4390
      %v4583 = vpack.c.bf16 %v4396, %v4391
      %v4584 = vpack.c.bf16 %v4397, %v4392
      %v4585 = vpack.c.bf16 %v4462, %v4458
      %v4586 = vpack.c.bf16 %v4463, %v4459
      %v4587 = vpack.c.bf16 %v4464, %v4460
      %v4588 = vpack.c.bf16 %v4465, %v4461
      %v4589 = vpack.c.bf16 %v4437, %v4427
      %v4590 = vpack.c.bf16 %v4470, %v4466
      %v4591 = vpack.c.bf16 %v4471, %v4467
      %v4592 = vpack.c.bf16 %v4472, %v4468
      %v4593 = vpack.c.bf16 %v4473, %v4469
      %v4594 = vpack.c.bf16 %v4457, %v4447
      %v4595 = vpack.c.bf16 %v4538, %v4534
      %v4596 = vpack.c.bf16 %v4539, %v4535
      %v4597 = vpack.c.bf16 %v4540, %v4536
      %v4598 = vpack.c.bf16 %v4541, %v4537
      %v4599 = vpack.c.bf16 %v4513, %v4503
      %v4600 = vpack.c.bf16 %v4546, %v4542
      %v4601 = vpack.c.bf16 %v4547, %v4543
      %v4602 = vpack.c.bf16 %v4548, %v4544
      %v4603 = vpack.c.bf16 %v4549, %v4545
      %v4604 = vpack.c.bf16 %v4533, %v4523
      %v4609 = vunpack.c.l.b16 %v4571
      %v4610 = vunpack.c.l.b16 %v4572
      %v4611 = vunpack.c.l.b16 %v4573
      %v4612 = vunpack.c.l.b16 %v4574
      %v4613 = vpack.c.b16 %v4610, %v4609
      %v4614 = vpack.c.b16 %v4612, %v4611
      %4645 = vrot.lane.b32.xlu0 %v4575, 25
      %v4646 = vpop.permute.xlu0 %4645
      %4647 = vrot.lane.b32.xlu0 %v4576, 25
      %v4648 = vpop.permute.xlu0 %4647
      %4649 = vrot.lane.b32.xlu0 %v4577, 25
      %v4650 = vpop.permute.xlu0 %4649
      %4651 = vrot.lane.b32.xlu0 %v4578, 25
      %v4652 = vpop.permute.xlu0 %4651
      %4653 = vrot.lane.b32.xlu0 %v4579, 25
      %v4654 = vpop.permute.xlu0 %4653
      %4655 = vrot.lane.b32.xlu0 %v4580, 25
      %v4656 = vpop.permute.xlu0 %4655
      %4657 = vrot.lane.b32.xlu0 %v4581, 25
      %v4658 = vpop.permute.xlu0 %4657
      %4659 = vrot.lane.b32.xlu0 %v4582, 25
      %v4660 = vpop.permute.xlu0 %4659
      %4661 = vrot.lane.b32.xlu0 %v4583, 25
      %v4662 = vpop.permute.xlu0 %4661
      %4663 = vrot.lane.b32.xlu0 %v4584, 25
      %v4664 = vpop.permute.xlu0 %4663
      %4665 = vrot.lane.b32.xlu0 %v4585, 25
      %v4666 = vpop.permute.xlu0 %4665
      %4667 = vrot.lane.b32.xlu0 %v4586, 25
      %v4668 = vpop.permute.xlu0 %4667
      %4669 = vrot.lane.b32.xlu0 %v4587, 25
      %v4670 = vpop.permute.xlu0 %4669
      %4671 = vrot.lane.b32.xlu0 %v4588, 25
      %v4672 = vpop.permute.xlu0 %4671
      %4673 = vrot.lane.b32.xlu0 %v4589, 25
      %v4674 = vpop.permute.xlu0 %4673
      %4675 = vrot.lane.b32.xlu0 %v4590, 25
      %v4676 = vpop.permute.xlu0 %4675
      %4677 = vrot.lane.b32.xlu0 %v4591, 25
      %v4678 = vpop.permute.xlu0 %4677
      %4679 = vrot.lane.b32.xlu0 %v4592, 25
      %v4680 = vpop.permute.xlu0 %4679
      %4681 = vrot.lane.b32.xlu0 %v4593, 25
      %v4682 = vpop.permute.xlu0 %4681
      %4683 = vrot.lane.b32.xlu0 %v4594, 25
      %v4684 = vpop.permute.xlu0 %4683
      %4685 = vrot.lane.b32.xlu0 %v4595, 25
      %v4686 = vpop.permute.xlu0 %4685
      %4687 = vrot.lane.b32.xlu0 %v4596, 25
      %v4688 = vpop.permute.xlu0 %4687
      %4689 = vrot.lane.b32.xlu0 %v4597, 25
      %v4690 = vpop.permute.xlu0 %4689
      %4691 = vrot.lane.b32.xlu0 %v4598, 25
      %v4692 = vpop.permute.xlu0 %4691
      %4693 = vrot.lane.b32.xlu0 %v4599, 25
      %v4694 = vpop.permute.xlu0 %4693
      %4695 = vrot.lane.b32.xlu0 %v4600, 25
      %v4696 = vpop.permute.xlu0 %4695
      %4697 = vrot.lane.b32.xlu0 %v4601, 25
      %v4698 = vpop.permute.xlu0 %4697
      %4699 = vrot.lane.b32.xlu0 %v4602, 25
      %v4700 = vpop.permute.xlu0 %4699
      %4701 = vrot.lane.b32.xlu0 %v4603, 25
      %v4702 = vpop.permute.xlu0 %4701
      %4703 = vrot.lane.b32.xlu0 %v4604, 25
      %v4704 = vpop.permute.xlu0 %4703
      %v4705 = vsel %vm494, %v4646, %v4648
      %v4706 = vsel %vm494, %v4648, %v4650
      %v4707 = vsel %vm494, %v4650, %v4652
      %v4708 = vsel %vm494, %v4652, %v4654
      %v4709 = vsel %vm494, %v4656, %v4658
      %v4710 = vsel %vm494, %v4658, %v4660
      %v4711 = vsel %vm494, %v4660, %v4662
      %v4712 = vsel %vm494, %v4662, %v4664
      %v4713 = vsel %vm494, %v4666, %v4668
      %v4714 = vsel %vm494, %v4668, %v4670
      %v4715 = vsel %vm494, %v4670, %v4672
      %v4716 = vsel %vm494, %v4672, %v4674
      %v4717 = vsel %vm494, %v4676, %v4678
      %v4718 = vsel %vm494, %v4678, %v4680
      %v4719 = vsel %vm494, %v4680, %v4682
      %v4720 = vsel %vm494, %v4682, %v4684
      %v4721 = vsel %vm494, %v4686, %v4688
      %v4722 = vsel %vm494, %v4688, %v4690
      %v4723 = vsel %vm494, %v4690, %v4692
      %v4724 = vsel %vm494, %v4692, %v4694
      %v4725 = vsel %vm494, %v4696, %v4698
      %v4726 = vsel %vm494, %v4698, %v4700
      %v4727 = vsel %vm494, %v4700, %v4702
      %v4728 = vsel %vm494, %v4702, %v4704
      %v4754 = vsel %vm1492, %v4613, 0
      %v4757 = vsel %vm1492, %v4614, 0
      %4759 = vmatprep.subr.bf16.mxu0 %v4706
      %4760 = vmatpush1.bf16.msra.mxu0 %v4705
      %4761 = vmatprep.subr.bf16.mxu0 %v4710
      %4762 = vmatpush1.bf16.msra.mxu0 %v4709
      %4763 = vmatprep.subr.bf16.mxu0 %v4714
      %4764 = vmatpush1.bf16.msra.mxu0 %v4713
      %4765 = vmatprep.subr.bf16.mxu0 %v4718
      %4766 = vmatpush1.bf16.msra.mxu0 %v4717
      %4767 = vmatprep.subr.bf16.mxu0 %v4722
      %4768 = vmatpush1.bf16.msra.mxu0 %v4721
      %4769 = vmatprep.subr.bf16.mxu0 %v4726
      %4770 = vmatpush1.bf16.msra.mxu0 %v4725
      %4771 = vmatprep.subr.bf16.mxu0 0
      %4772 = vmatpush1.bf16.msra.mxu0 0
      %4773 = vmatprep.subr.bf16.mxu0 0
      %4774 = vmatpush1.bf16.msra.mxu0 0
      %4775 = vmatprep.subr.bf16.mxu0 0
      %4776 = vmatpush1.bf16.msra.mxu0 0
      %4777 = vmatprep.subr.bf16.mxu0 0
      %4778 = vmatpush1.bf16.msra.mxu0 0
      %4779 = vmatprep.subr.bf16.mxu0 0
      %4780 = vmatpush1.bf16.msra.mxu0 0
      %4781 = vmatprep.subr.bf16.mxu0 0
      %4782 = vmatpush1.bf16.msra.mxu0 0
      %4783 = vmatprep.subr.bf16.mxu0 0
      %4784 = vmatpush1.bf16.msra.mxu0 0
      %4785 = vmatprep.subr.bf16.mxu0 0
      %4786 = vmatpush1.bf16.msra.mxu0 0
      %4787 = vmatprep.subr.bf16.mxu0 0
      %4788 = vmatpush1.bf16.msra.mxu0 0
      %4789 = vmatprep.subr.bf16.mxu0 0
      %4790 = vmatpush1.bf16.msra.mxu0 0
      %4791 = vmatprep.mubr.bf16.mxu0 0
      %4792 = vmatmul.mubr.bf16.gmra.mrb[0].mxu0 %v4754
      %v4793 = vpop.f32.mrb[0].mxu0
      %v4794 = vadd.f32 0.0, %v4793
      %v4795 = vpop.f32.mrb[0].mxu0
      %v4796 = vadd.f32 0.0, %v4795
      %v4797 = vpop.f32.mrb[0].mxu0
      %v4798 = vadd.f32 0.0, %v4797
      %v4799 = vpop.f32.mrb[0].mxu0
      %v4800 = vadd.f32 0.0, %v4799
      %4801 = vmatprep.mubr.bf16.mxu0 0
      %4802 = vmatmul.mubr.bf16.gmra.mrb[0].mxu0 %v4757
      %v4803 = vpop.f32.mrb[0].mxu0
      %v4804 = vadd.f32 0.0, %v4803
      %v4805 = vpop.f32.mrb[0].mxu0
      %v4806 = vadd.f32 0.0, %v4805
      %v4807 = vpop.f32.mrb[0].mxu0
      %v4808 = vadd.f32 0.0, %v4807
      %v4809 = vpop.f32.mrb[0].mxu0
      %v4810 = vadd.f32 0.0, %v4809
      %4811 = vdwg.mxu0
      %4812 = vmatprep.subr.bf16.mxu0 %v4708
      %4813 = vmatpush1.bf16.msra.mxu0 %v4707
      %4814 = vmatprep.subr.bf16.mxu0 %v4712
      %4815 = vmatpush1.bf16.msra.mxu0 %v4711
      %4816 = vmatprep.subr.bf16.mxu0 %v4716
      %4817 = vmatpush1.bf16.msra.mxu0 %v4715
      %4818 = vmatprep.subr.bf16.mxu0 %v4720
      %4819 = vmatpush1.bf16.msra.mxu0 %v4719
      %4820 = vmatprep.subr.bf16.mxu0 %v4724
      %4821 = vmatpush1.bf16.msra.mxu0 %v4723
      %4822 = vmatprep.subr.bf16.mxu0 %v4728
      %4823 = vmatpush1.bf16.msra.mxu0 %v4727
      %4824 = vmatprep.subr.bf16.mxu0 0
      %4825 = vmatpush1.bf16.msra.mxu0 0
      %4826 = vmatprep.subr.bf16.mxu0 0
      %4827 = vmatpush1.bf16.msra.mxu0 0
      %4828 = vmatprep.subr.bf16.mxu0 0
      %4829 = vmatpush1.bf16.msra.mxu0 0
      %4830 = vmatprep.subr.bf16.mxu0 0
      %4831 = vmatpush1.bf16.msra.mxu0 0
      %4832 = vmatprep.subr.bf16.mxu0 0
      %4833 = vmatpush1.bf16.msra.mxu0 0
      %4834 = vmatprep.subr.bf16.mxu0 0
      %4835 = vmatpush1.bf16.msra.mxu0 0
      %4836 = vmatprep.subr.bf16.mxu0 0
      %4837 = vmatpush1.bf16.msra.mxu0 0
      %4838 = vmatprep.subr.bf16.mxu0 0
      %4839 = vmatpush1.bf16.msra.mxu0 0
      %4840 = vmatprep.subr.bf16.mxu0 0
      %4841 = vmatpush1.bf16.msra.mxu0 0
      %4842 = vmatprep.subr.bf16.mxu0 0
      %4843 = vmatpush1.bf16.msra.mxu0 0
      %4844 = vmatprep.mubr.bf16.mxu0 0
      %4845 = vmatmul.mubr.bf16.gmra.mrb[0].mxu0 %v4754
      %v4846 = vpop.f32.mrb[0].mxu0
      %v4847 = vadd.f32 0.0, %v4846
      %v4848 = vpop.f32.mrb[0].mxu0
      %v4849 = vadd.f32 0.0, %v4848
      %v4850 = vpop.f32.mrb[0].mxu0
      %v4851 = vadd.f32 0.0, %v4850
      %v4852 = vpop.f32.mrb[0].mxu0
      %v4853 = vadd.f32 0.0, %v4852
      %4854 = vmatprep.mubr.bf16.mxu0 0
      %4855 = vmatmul.mubr.bf16.gmra.mrb[0].mxu0 %v4757
      %v4856 = vpop.f32.mrb[0].mxu0
      %v4857 = vadd.f32 0.0, %v4856
      %v4858 = vpop.f32.mrb[0].mxu0
      %v4859 = vadd.f32 0.0, %v4858
      %v4860 = vpop.f32.mrb[0].mxu0
      %v4861 = vadd.f32 0.0, %v4860
      %v4862 = vpop.f32.mrb[0].mxu0
      %v4863 = vadd.f32 0.0, %v4862
      %4864 = vdwg.mxu0
      %v4865 = vadd.f32 %v4361, %v4794
      %v4866 = vadd.f32 %v4361, %v4796
      %v4867 = vadd.f32 %v4361, %v4847
      %v4868 = vadd.f32 %v4361, %v4849
      %v4869 = vadd.f32 %v4366, %v4798
      %v4870 = vadd.f32 %v4366, %v4800
      %v4871 = vadd.f32 %v4366, %v4851
      %v4872 = vadd.f32 %v4366, %v4853
      %v4873 = vadd.f32 %v4371, %v4804
      %v4874 = vadd.f32 %v4371, %v4806
      %v4875 = vadd.f32 %v4371, %v4857
      %v4876 = vadd.f32 %v4371, %v4859
      %v4877 = vadd.f32 %v4376, %v4808
      %v4878 = vadd.f32 %v4376, %v4810
      %v4879 = vadd.f32 %v4376, %v4861
      %v4880 = vadd.f32 %v4376, %v4863
      %s4889 = scalar_lea.vmem %s4, 160
      %v4890 = vld [vmem:[%s4889] sm:$0xf]
      %v4891 = vld [vmem:[%s4889 + $0x4] sm:$0xf]
      %v4892 = vld [vmem:[%s4889 + $0x8] sm:$0xf]
      %v4893 = vld [vmem:[%s4889 + $0xc] sm:$0xf]
      %v4894 = vpack.c.bf16 %v4431, %v4421
      %v4895 = vpack.c.bf16 %v4451, %v4441
      %v4896 = vpack.c.bf16 %v4507, %v4497
      %v4897 = vpack.c.bf16 %v4527, %v4517
      %v4902 = vunpack.c.l.b16 %v4890
      %v4903 = vunpack.c.l.b16 %v4891
      %v4904 = vunpack.c.l.b16 %v4892
      %v4905 = vunpack.c.l.b16 %v4893
      %v4906 = vpack.c.b16 %v4903, %v4902
      %v4907 = vpack.c.b16 %v4905, %v4904
      %4912 = vrot.lane.b32.xlu0 %v4575, 1
      %v4913 = vpop.permute.xlu0 %4912
      %4914 = vrot.lane.b32.xlu0 %v4576, 1
      %v4915 = vpop.permute.xlu0 %4914
      %4916 = vrot.lane.b32.xlu0 %v4577, 1
      %v4917 = vpop.permute.xlu0 %4916
      %4918 = vrot.lane.b32.xlu0 %v4578, 1
      %v4919 = vpop.permute.xlu0 %4918
      %4920 = vrot.lane.b32.xlu0 %v4579, 1
      %v4921 = vpop.permute.xlu0 %4920
      %4922 = vrot.lane.b32.xlu0 %v4580, 1
      %v4923 = vpop.permute.xlu0 %4922
      %4924 = vrot.lane.b32.xlu0 %v4581, 1
      %v4925 = vpop.permute.xlu0 %4924
      %4926 = vrot.lane.b32.xlu0 %v4582, 1
      %v4927 = vpop.permute.xlu0 %4926
      %4928 = vrot.lane.b32.xlu0 %v4583, 1
      %v4929 = vpop.permute.xlu0 %4928
      %4930 = vrot.lane.b32.xlu0 %v4584, 1
      %v4931 = vpop.permute.xlu0 %4930
      %4932 = vrot.lane.b32.xlu0 %v4894, 1
      %v4933 = vpop.permute.xlu0 %4932
      %4934 = vrot.lane.b32.xlu0 %v4586, 1
      %v4935 = vpop.permute.xlu0 %4934
      %4936 = vrot.lane.b32.xlu0 %v4587, 1
      %v4937 = vpop.permute.xlu0 %4936
      %4938 = vrot.lane.b32.xlu0 %v4588, 1
      %v4939 = vpop.permute.xlu0 %4938
      %4940 = vrot.lane.b32.xlu0 %v4589, 1
      %v4941 = vpop.permute.xlu0 %4940
      %4942 = vrot.lane.b32.xlu0 %v4895, 1
      %v4943 = vpop.permute.xlu0 %4942
      %4944 = vrot.lane.b32.xlu0 %v4591, 1
      %v4945 = vpop.permute.xlu0 %4944
      %4946 = vrot.lane.b32.xlu0 %v4592, 1
      %v4947 = vpop.permute.xlu0 %4946
      %4948 = vrot.lane.b32.xlu0 %v4593, 1
      %v4949 = vpop.permute.xlu0 %4948
      %4950 = vrot.lane.b32.xlu0 %v4594, 1
      %v4951 = vpop.permute.xlu0 %4950
      %4952 = vrot.lane.b32.xlu0 %v4896, 1
      %v4953 = vpop.permute.xlu0 %4952
      %4954 = vrot.lane.b32.xlu0 %v4596, 1
      %v4955 = vpop.permute.xlu0 %4954
      %4956 = vrot.lane.b32.xlu0 %v4597, 1
      %v4957 = vpop.permute.xlu0 %4956
      %4958 = vrot.lane.b32.xlu0 %v4598, 1
      %v4959 = vpop.permute.xlu0 %4958
      %4960 = vrot.lane.b32.xlu0 %v4599, 1
      %v4961 = vpop.permute.xlu0 %4960
      %4962 = vrot.lane.b32.xlu0 %v4897, 1
      %v4963 = vpop.permute.xlu0 %4962
      %4964 = vrot.lane.b32.xlu0 %v4601, 1
      %v4965 = vpop.permute.xlu0 %4964
      %4966 = vrot.lane.b32.xlu0 %v4602, 1
      %v4967 = vpop.permute.xlu0 %4966
      %4968 = vrot.lane.b32.xlu0 %v4603, 1
      %v4969 = vpop.permute.xlu0 %4968
      %4970 = vrot.lane.b32.xlu0 %v4604, 1
      %v4971 = vpop.permute.xlu0 %4970
      %v4972 = vsel %vm690, %v4913, %v4915
      %v4973 = vsel %vm690, %v4915, %v4917
      %v4974 = vsel %vm690, %v4917, %v4919
      %v4975 = vsel %vm690, %v4919, %v4921
      %v4976 = vsel %vm690, %v4923, %v4925
      %v4977 = vsel %vm690, %v4925, %v4927
      %v4978 = vsel %vm690, %v4927, %v4929
      %v4979 = vsel %vm690, %v4929, %v4931
      %v4980 = vsel %vm690, %v4933, %v4935
      %v4981 = vsel %vm690, %v4935, %v4937
      %v4982 = vsel %vm690, %v4937, %v4939
      %v4983 = vsel %vm690, %v4939, %v4941
      %v4984 = vsel %vm690, %v4943, %v4945
      %v4985 = vsel %vm690, %v4945, %v4947
      %v4986 = vsel %vm690, %v4947, %v4949
      %v4987 = vsel %vm690, %v4949, %v4951
      %v4988 = vsel %vm690, %v4953, %v4955
      %v4989 = vsel %vm690, %v4955, %v4957
      %v4990 = vsel %vm690, %v4957, %v4959
      %v4991 = vsel %vm690, %v4959, %v4961
      %v4992 = vsel %vm690, %v4963, %v4965
      %v4993 = vsel %vm690, %v4965, %v4967
      %v4994 = vsel %vm690, %v4967, %v4969
      %v4995 = vsel %vm690, %v4969, %v4971
      %v5021 = vsel %vm1492, %v4906, 0
      %v5024 = vsel %vm1492, %v4907, 0
      %5026 = vmatprep.subr.bf16.mxu0 %v4973
      %5027 = vmatpush1.bf16.msra.mxu0 %v4972
      %5028 = vmatprep.subr.bf16.mxu0 %v4977
      %5029 = vmatpush1.bf16.msra.mxu0 %v4976
      %5030 = vmatprep.subr.bf16.mxu0 %v4981
      %5031 = vmatpush1.bf16.msra.mxu0 %v4980
      %5032 = vmatprep.subr.bf16.mxu0 %v4985
      %5033 = vmatpush1.bf16.msra.mxu0 %v4984
      %5034 = vmatprep.subr.bf16.mxu0 %v4989
      %5035 = vmatpush1.bf16.msra.mxu0 %v4988
      %5036 = vmatprep.subr.bf16.mxu0 %v4993
      %5037 = vmatpush1.bf16.msra.mxu0 %v4992
      %5038 = vmatprep.subr.bf16.mxu0 0
      %5039 = vmatpush1.bf16.msra.mxu0 0
      %5040 = vmatprep.subr.bf16.mxu0 0
      %5041 = vmatpush1.bf16.msra.mxu0 0
      %5042 = vmatprep.subr.bf16.mxu0 0
      %5043 = vmatpush1.bf16.msra.mxu0 0
      %5044 = vmatprep.subr.bf16.mxu0 0
      %5045 = vmatpush1.bf16.msra.mxu0 0
      %5046 = vmatprep.subr.bf16.mxu0 0
      %5047 = vmatpush1.bf16.msra.mxu0 0
      %5048 = vmatprep.subr.bf16.mxu0 0
      %5049 = vmatpush1.bf16.msra.mxu0 0
      %5050 = vmatprep.subr.bf16.mxu0 0
      %5051 = vmatpush1.bf16.msra.mxu0 0
      %5052 = vmatprep.subr.bf16.mxu0 0
      %5053 = vmatpush1.bf16.msra.mxu0 0
      %5054 = vmatprep.subr.bf16.mxu0 0
      %5055 = vmatpush1.bf16.msra.mxu0 0
      %5056 = vmatprep.subr.bf16.mxu0 0
      %5057 = vmatpush1.bf16.msra.mxu0 0
      %5058 = vmatprep.mubr.bf16.mxu0 0
      %5059 = vmatmul.mubr.bf16.gmra.mrb[0].mxu0 %v5021
      %v5060 = vpop.f32.mrb[0].mxu0
      %v5061 = vadd.f32 0.0, %v5060
      %v5062 = vpop.f32.mrb[0].mxu0
      %v5063 = vadd.f32 0.0, %v5062
      %v5064 = vpop.f32.mrb[0].mxu0
      %v5065 = vadd.f32 0.0, %v5064
      %v5066 = vpop.f32.mrb[0].mxu0
      %v5067 = vadd.f32 0.0, %v5066
      %5068 = vmatprep.mubr.bf16.mxu0 0
      %5069 = vmatmul.mubr.bf16.gmra.mrb[0].mxu0 %v5024
      %v5070 = vpop.f32.mrb[0].mxu0
      %v5071 = vadd.f32 0.0, %v5070
      %v5072 = vpop.f32.mrb[0].mxu0
      %v5073 = vadd.f32 0.0, %v5072
      %v5074 = vpop.f32.mrb[0].mxu0
      %v5075 = vadd.f32 0.0, %v5074
      %v5076 = vpop.f32.mrb[0].mxu0
      %v5077 = vadd.f32 0.0, %v5076
      %5078 = vdwg.mxu0
      %5079 = vmatprep.subr.bf16.mxu0 %v4975
      %5080 = vmatpush1.bf16.msra.mxu0 %v4974
      %5081 = vmatprep.subr.bf16.mxu0 %v4979
      %5082 = vmatpush1.bf16.msra.mxu0 %v4978
      %5083 = vmatprep.subr.bf16.mxu0 %v4983
      %5084 = vmatpush1.bf16.msra.mxu0 %v4982
      %5085 = vmatprep.subr.bf16.mxu0 %v4987
      %5086 = vmatpush1.bf16.msra.mxu0 %v4986
      %5087 = vmatprep.subr.bf16.mxu0 %v4991
      %5088 = vmatpush1.bf16.msra.mxu0 %v4990
      %5089 = vmatprep.subr.bf16.mxu0 %v4995
      %5090 = vmatpush1.bf16.msra.mxu0 %v4994
      %5091 = vmatprep.subr.bf16.mxu0 0
      %5092 = vmatpush1.bf16.msra.mxu0 0
      %5093 = vmatprep.subr.bf16.mxu0 0
      %5094 = vmatpush1.bf16.msra.mxu0 0
      %5095 = vmatprep.subr.bf16.mxu0 0
      %5096 = vmatpush1.bf16.msra.mxu0 0
      %5097 = vmatprep.subr.bf16.mxu0 0
      %5098 = vmatpush1.bf16.msra.mxu0 0
      %5099 = vmatprep.subr.bf16.mxu0 0
      %5100 = vmatpush1.bf16.msra.mxu0 0
      %5101 = vmatprep.subr.bf16.mxu0 0
      %5102 = vmatpush1.bf16.msra.mxu0 0
      %5103 = vmatprep.subr.bf16.mxu0 0
      %5104 = vmatpush1.bf16.msra.mxu0 0
      %5105 = vmatprep.subr.bf16.mxu0 0
      %5106 = vmatpush1.bf16.msra.mxu0 0
      %5107 = vmatprep.subr.bf16.mxu0 0
      %5108 = vmatpush1.bf16.msra.mxu0 0
      %5109 = vmatprep.subr.bf16.mxu0 0
      %5110 = vmatpush1.bf16.msra.mxu0 0
      %5111 = vmatprep.mubr.bf16.mxu0 0
      %5112 = vmatmul.mubr.bf16.gmra.mrb[0].mxu0 %v5021
      %v5113 = vpop.f32.mrb[0].mxu0
      %v5114 = vadd.f32 0.0, %v5113
      %v5115 = vpop.f32.mrb[0].mxu0
      %v5116 = vadd.f32 0.0, %v5115
      %v5117 = vpop.f32.mrb[0].mxu0
      %v5118 = vadd.f32 0.0, %v5117
      %v5119 = vpop.f32.mrb[0].mxu0
      %v5120 = vadd.f32 0.0, %v5119
      %5121 = vmatprep.mubr.bf16.mxu0 0
      %5122 = vmatmul.mubr.bf16.gmra.mrb[0].mxu0 %v5024
      %v5123 = vpop.f32.mrb[0].mxu0
      %v5124 = vadd.f32 0.0, %v5123
      %v5125 = vpop.f32.mrb[0].mxu0
      %v5126 = vadd.f32 0.0, %v5125
      %v5127 = vpop.f32.mrb[0].mxu0
      %v5128 = vadd.f32 0.0, %v5127
      %v5129 = vpop.f32.mrb[0].mxu0
      %v5130 = vadd.f32 0.0, %v5129
      %5131 = vdwg.mxu0
      %v5132 = vadd.f32 %v4865, %v5061
      %v5133 = vadd.f32 %v4866, %v5063
      %v5134 = vadd.f32 %v4867, %v5114
      %v5135 = vadd.f32 %v4868, %v5116
      %v5136 = vadd.f32 %v4869, %v5065
      %v5137 = vadd.f32 %v4870, %v5067
      %v5138 = vadd.f32 %v4871, %v5118
      %v5139 = vadd.f32 %v4872, %v5120
      %v5140 = vadd.f32 %v4873, %v5071
      %v5141 = vadd.f32 %v4874, %v5073
      %v5142 = vadd.f32 %v4875, %v5124
      %v5143 = vadd.f32 %v4876, %v5126
      %v5144 = vadd.f32 %v4877, %v5075
      %v5145 = vadd.f32 %v4878, %v5077
      %v5146 = vadd.f32 %v4879, %v5128
      %v5147 = vadd.f32 %v4880, %v5130
      %s5148 = scalar_lea.vmem %s4, 176
      %v5149 = vld [vmem:[%s5148] sm:$0xf]
      %v5150 = vld [vmem:[%s5148 + $0x4] sm:$0xf]
      %v5151 = vld [vmem:[%s5148 + $0x8] sm:$0xf]
      %v5152 = vld [vmem:[%s5148 + $0xc] sm:$0xf]
      %v5157 = vunpack.c.l.b16 %v5149
      %v5158 = vunpack.c.l.b16 %v5150
      %v5159 = vunpack.c.l.b16 %v5151
      %v5160 = vunpack.c.l.b16 %v5152
      %v5161 = vpack.c.b16 %v5158, %v5157
      %v5162 = vpack.c.b16 %v5160, %v5159
      %5163 = vrot.lane.b32.xlu0 %v4576, 105
      %v5164 = vpop.permute.xlu0 %5163
      %5165 = vrot.lane.b32.xlu0 %v4577, 105
      %v5166 = vpop.permute.xlu0 %5165
      %5167 = vrot.lane.b32.xlu0 %v4578, 105
      %v5168 = vpop.permute.xlu0 %5167
      %5169 = vrot.lane.b32.xlu0 %v4579, 105
      %v5170 = vpop.permute.xlu0 %5169
      %5171 = vrot.lane.b32.xlu0 %v4581, 105
      %v5172 = vpop.permute.xlu0 %5171
      %5173 = vrot.lane.b32.xlu0 %v4582, 105
      %v5174 = vpop.permute.xlu0 %5173
      %5175 = vrot.lane.b32.xlu0 %v4583, 105
      %v5176 = vpop.permute.xlu0 %5175
      %5177 = vrot.lane.b32.xlu0 %v4584, 105
      %v5178 = vpop.permute.xlu0 %5177
      %5179 = vrot.lane.b32.xlu0 %v4586, 105
      %v5180 = vpop.permute.xlu0 %5179
      %5181 = vrot.lane.b32.xlu0 %v4587, 105
      %v5182 = vpop.permute.xlu0 %5181
      %5183 = vrot.lane.b32.xlu0 %v4588, 105
      %v5184 = vpop.permute.xlu0 %5183
      %5185 = vrot.lane.b32.xlu0 %v4589, 105
      %v5186 = vpop.permute.xlu0 %5185
      %5187 = vrot.lane.b32.xlu0 %v4591, 105
      %v5188 = vpop.permute.xlu0 %5187
      %5189 = vrot.lane.b32.xlu0 %v4592, 105
      %v5190 = vpop.permute.xlu0 %5189
      %5191 = vrot.lane.b32.xlu0 %v4593, 105
      %v5192 = vpop.permute.xlu0 %5191
      %5193 = vrot.lane.b32.xlu0 %v4594, 105
      %v5194 = vpop.permute.xlu0 %5193
      %5195 = vrot.lane.b32.xlu0 %v4596, 105
      %v5196 = vpop.permute.xlu0 %5195
      %5197 = vrot.lane.b32.xlu0 %v4597, 105
      %v5198 = vpop.permute.xlu0 %5197
      %5199 = vrot.lane.b32.xlu0 %v4598, 105
      %v5200 = vpop.permute.xlu0 %5199
      %5201 = vrot.lane.b32.xlu0 %v4599, 105
      %v5202 = vpop.permute.xlu0 %5201
      %5203 = vrot.lane.b32.xlu0 %v4601, 105
      %v5204 = vpop.permute.xlu0 %5203
      %5205 = vrot.lane.b32.xlu0 %v4602, 105
      %v5206 = vpop.permute.xlu0 %5205
      %5207 = vrot.lane.b32.xlu0 %v4603, 105
      %v5208 = vpop.permute.xlu0 %5207
      %5209 = vrot.lane.b32.xlu0 %v4604, 105
      %v5210 = vpop.permute.xlu0 %5209
      %v5211 = vsel %vm874, %v5164, %v5166
      %v5212 = vsel %vm874, %v5166, %v5168
      %v5213 = vsel %vm874, %v5168, %v5170
      %v5214 = vsel %vm874, %v5172, %v5174
      %v5215 = vsel %vm874, %v5174, %v5176
      %v5216 = vsel %vm874, %v5176, %v5178
      %v5217 = vsel %vm874, %v5180, %v5182
      %v5218 = vsel %vm874, %v5182, %v5184
      %v5219 = vsel %vm874, %v5184, %v5186
      %v5220 = vsel %vm874, %v5188, %v5190
      %v5221 = vsel %vm874, %v5190, %v5192
      %v5222 = vsel %vm874, %v5192, %v5194
      %v5223 = vsel %vm874, %v5196, %v5198
      %v5224 = vsel %vm874, %v5198, %v5200
      %v5225 = vsel %vm874, %v5200, %v5202
      %v5226 = vsel %vm874, %v5204, %v5206
      %v5227 = vsel %vm874, %v5206, %v5208
      %v5228 = vsel %vm874, %v5208, %v5210
      %v5254 = vsel %vm1492, %v5161, 0
      %v5257 = vsel %vm1492, %v5162, 0
      %5259 = vmatprep.subr.bf16.mxu0 %v5212
      %5260 = vmatpush1.bf16.msra.mxu0 %v5211
      %5261 = vmatprep.subr.bf16.mxu0 %v5215
      %5262 = vmatpush1.bf16.msra.mxu0 %v5214
      %5263 = vmatprep.subr.bf16.mxu0 %v5218
      %5264 = vmatpush1.bf16.msra.mxu0 %v5217
      %5265 = vmatprep.subr.bf16.mxu0 %v5221
      %5266 = vmatpush1.bf16.msra.mxu0 %v5220
      %5267 = vmatprep.subr.bf16.mxu0 %v5224
      %5268 = vmatpush1.bf16.msra.mxu0 %v5223
      %5269 = vmatprep.subr.bf16.mxu0 %v5227
      %5270 = vmatpush1.bf16.msra.mxu0 %v5226
      %5271 = vmatprep.subr.bf16.mxu0 0
      %5272 = vmatpush1.bf16.msra.mxu0 0
      %5273 = vmatprep.subr.bf16.mxu0 0
      %5274 = vmatpush1.bf16.msra.mxu0 0
      %5275 = vmatprep.subr.bf16.mxu0 0
      %5276 = vmatpush1.bf16.msra.mxu0 0
      %5277 = vmatprep.subr.bf16.mxu0 0
      %5278 = vmatpush1.bf16.msra.mxu0 0
      %5279 = vmatprep.subr.bf16.mxu0 0
      %5280 = vmatpush1.bf16.msra.mxu0 0
      %5281 = vmatprep.subr.bf16.mxu0 0
      %5282 = vmatpush1.bf16.msra.mxu0 0
      %5283 = vmatprep.subr.bf16.mxu0 0
      %5284 = vmatpush1.bf16.msra.mxu0 0
      %5285 = vmatprep.subr.bf16.mxu0 0
      %5286 = vmatpush1.bf16.msra.mxu0 0
      %5287 = vmatprep.subr.bf16.mxu0 0
      %5288 = vmatpush1.bf16.msra.mxu0 0
      %5289 = vmatprep.subr.bf16.mxu0 0
      %5290 = vmatpush1.bf16.msra.mxu0 0
      %5291 = vmatprep.mubr.bf16.mxu0 0
      %5292 = vmatmul.mubr.bf16.gmra.mrb[0].mxu0 %v5254
      %v5293 = vpop.f32.mrb[0].mxu0
      %v5294 = vadd.f32 0.0, %v5293
      %v5295 = vpop.f32.mrb[0].mxu0
      %v5296 = vadd.f32 0.0, %v5295
      %v5297 = vpop.f32.mrb[0].mxu0
      %v5298 = vadd.f32 0.0, %v5297
      %v5299 = vpop.f32.mrb[0].mxu0
      %v5300 = vadd.f32 0.0, %v5299
      %5301 = vmatprep.mubr.bf16.mxu0 0
      %5302 = vmatmul.mubr.bf16.gmra.mrb[0].mxu0 %v5257
      %v5303 = vpop.f32.mrb[0].mxu0
      %v5304 = vadd.f32 0.0, %v5303
      %v5305 = vpop.f32.mrb[0].mxu0
      %v5306 = vadd.f32 0.0, %v5305
      %v5307 = vpop.f32.mrb[0].mxu0
      %v5308 = vadd.f32 0.0, %v5307
      %v5309 = vpop.f32.mrb[0].mxu0
      %v5310 = vadd.f32 0.0, %v5309
      %5311 = vdwg.mxu0
      %5312 = vmatprep.subr.bf16.mxu0 %v5170
      %5313 = vmatpush1.bf16.msra.mxu0 %v5213
      %5314 = vmatprep.subr.bf16.mxu0 %v5178
      %5315 = vmatpush1.bf16.msra.mxu0 %v5216
      %5316 = vmatprep.subr.bf16.mxu0 %v5186
      %5317 = vmatpush1.bf16.msra.mxu0 %v5219
      %5318 = vmatprep.subr.bf16.mxu0 %v5194
      %5319 = vmatpush1.bf16.msra.mxu0 %v5222
      %5320 = vmatprep.subr.bf16.mxu0 %v5202
      %5321 = vmatpush1.bf16.msra.mxu0 %v5225
      %5322 = vmatprep.subr.bf16.mxu0 %v5210
      %5323 = vmatpush1.bf16.msra.mxu0 %v5228
      %5324 = vmatprep.subr.bf16.mxu0 0
      %5325 = vmatpush1.bf16.msra.mxu0 0
      %5326 = vmatprep.subr.bf16.mxu0 0
      %5327 = vmatpush1.bf16.msra.mxu0 0
      %5328 = vmatprep.subr.bf16.mxu0 0
      %5329 = vmatpush1.bf16.msra.mxu0 0
      %5330 = vmatprep.subr.bf16.mxu0 0
      %5331 = vmatpush1.bf16.msra.mxu0 0
      %5332 = vmatprep.subr.bf16.mxu0 0
      %5333 = vmatpush1.bf16.msra.mxu0 0
      %5334 = vmatprep.subr.bf16.mxu0 0
      %5335 = vmatpush1.bf16.msra.mxu0 0
      %5336 = vmatprep.subr.bf16.mxu0 0
      %5337 = vmatpush1.bf16.msra.mxu0 0
      %5338 = vmatprep.subr.bf16.mxu0 0
      %5339 = vmatpush1.bf16.msra.mxu0 0
      %5340 = vmatprep.subr.bf16.mxu0 0
      %5341 = vmatpush1.bf16.msra.mxu0 0
      %5342 = vmatprep.subr.bf16.mxu0 0
      %5343 = vmatpush1.bf16.msra.mxu0 0
      %5344 = vmatprep.mubr.bf16.mxu0 0
      %5345 = vmatmul.mubr.bf16.gmra.mrb[0].mxu0 %v5254
      %v5346 = vpop.f32.mrb[0].mxu0
      %v5347 = vadd.f32 0.0, %v5346
      %v5348 = vpop.f32.mrb[0].mxu0
      %v5349 = vadd.f32 0.0, %v5348
      %v5350 = vpop.f32.mrb[0].mxu0
      %v5351 = vadd.f32 0.0, %v5350
      %v5352 = vpop.f32.mrb[0].mxu0
      %v5353 = vadd.f32 0.0, %v5352
      %5354 = vmatprep.mubr.bf16.mxu0 0
      %5355 = vmatmul.mubr.bf16.gmra.mrb[0].mxu0 %v5257
      %v5356 = vpop.f32.mrb[0].mxu0
      %v5357 = vadd.f32 0.0, %v5356
      %v5358 = vpop.f32.mrb[0].mxu0
      %v5359 = vadd.f32 0.0, %v5358
      %v5360 = vpop.f32.mrb[0].mxu0
      %v5361 = vadd.f32 0.0, %v5360
      %v5362 = vpop.f32.mrb[0].mxu0
      %v5363 = vadd.f32 0.0, %v5362
      %5364 = vdwg.mxu0
      %v5365 = vadd.f32 %v5132, %v5294
      %v5366 = vadd.f32 %v5133, %v5296
      %v5367 = vadd.f32 %v5134, %v5347
      %v5368 = vadd.f32 %v5135, %v5349
      %v5369 = vadd.f32 %v5136, %v5298
      %v5370 = vadd.f32 %v5137, %v5300
      %v5371 = vadd.f32 %v5138, %v5351
      %v5372 = vadd.f32 %v5139, %v5353
      %v5373 = vadd.f32 %v5140, %v5304
      %v5374 = vadd.f32 %v5141, %v5306
      %v5375 = vadd.f32 %v5142, %v5357
      %v5376 = vadd.f32 %v5143, %v5359
      %v5377 = vadd.f32 %v5144, %v5308
      %v5378 = vadd.f32 %v5145, %v5310
      %v5379 = vadd.f32 %v5146, %v5361
      %v5380 = vadd.f32 %v5147, %v5363
      %v5381 = vld [vmem:[#allocation2 + $0x8] sm:$0xff]
      %v5382 = vld [vmem:[#allocation2 + $0x10] sm:$0xff]
      %v5383 = vld [vmem:[#allocation2 + $0x18] sm:$0xff]
      %v5384 = vld [vmem:[#allocation2 + $0x20] sm:$0xff]
      %v5385 = vld [vmem:[#allocation2 + $0x38] sm:$0xff]
      %v5386 = vld [vmem:[#allocation2 + $0x40] sm:$0xff]
      %v5387 = vld [vmem:[#allocation2 + $0x48] sm:$0xff]
      %v5388 = vld [vmem:[#allocation2 + $0x50] sm:$0xff]
      %v5389 = vld [vmem:[#allocation2 + $0x68] sm:$0xff]
      %v5390 = vld [vmem:[#allocation2 + $0x70] sm:$0xff]
      %v5391 = vld [vmem:[#allocation2 + $0x78] sm:$0xff]
      %v5392 = vld [vmem:[#allocation2 + $0x80] sm:$0xff]
      %v5393 = vld [vmem:[#allocation2 + $0x98] sm:$0xff]
      %v5394 = vld [vmem:[#allocation2 + $0xa0] sm:$0xff]
      %v5395 = vld [vmem:[#allocation2 + $0xa8] sm:$0xff]
      %v5396 = vld [vmem:[#allocation2 + $0xb0] sm:$0xff]
      %v5397 = vmul.f32 %v5365, 0.1
      %v5398 = vmul.f32 %v5366, 0.1
      %v5399 = vmul.f32 %v5367, 0.1
      %v5400 = vmul.f32 %v5368, 0.1
      %v5401 = vmul.f32 %v5369, 0.1
      %v5402 = vmul.f32 %v5370, 0.1
      %v5403 = vmul.f32 %v5371, 0.1
      %v5404 = vmul.f32 %v5372, 0.1
      %v5405 = vmul.f32 %v5373, 0.1
      %v5406 = vmul.f32 %v5374, 0.1
      %v5407 = vmul.f32 %v5375, 0.1
      %v5408 = vmul.f32 %v5376, 0.1
      %v5409 = vmul.f32 %v5377, 0.1
      %v5410 = vmul.f32 %v5378, 0.1
      %v5411 = vmul.f32 %v5379, 0.1
      %v5412 = vmul.f32 %v5380, 0.1
      %v5413 = vadd.f32 %v5381, %v5397
      %v5414 = vadd.f32 %v5382, %v5398
      %v5415 = vadd.f32 %v5383, %v5399
      %v5416 = vadd.f32 %v5384, %v5400
      %v5417 = vadd.f32 %v5385, %v5401
      %v5418 = vadd.f32 %v5386, %v5402
      %v5419 = vadd.f32 %v5387, %v5403
      %v5420 = vadd.f32 %v5388, %v5404
      %v5421 = vadd.f32 %v5389, %v5405
      %v5422 = vadd.f32 %v5390, %v5406
      %v5423 = vadd.f32 %v5391, %v5407
      %v5424 = vadd.f32 %v5392, %v5408
      %v5425 = vadd.f32 %v5393, %v5409
      %v5426 = vadd.f32 %v5394, %v5410
      %v5427 = vadd.f32 %v5395, %v5411
      %v5428 = vadd.f32 %v5396, %v5412
      %v5429 = vsel %vm1058, %v5413, 0.0
      %v5430 = vsel %vm1059, %v5414, 0.0
      %v5431 = vsel %vm1060, %v5415, 0.0
      %v5432 = vsel %vm1061, %v5416, 0.0
      %v5433 = vsel %vm1058, %v5417, 0.0
      %v5434 = vsel %vm1059, %v5418, 0.0
      %v5435 = vsel %vm1060, %v5419, 0.0
      %v5436 = vsel %vm1061, %v5420, 0.0
      %v5437 = vsel %vm1058, %v5421, 0.0
      %v5438 = vsel %vm1059, %v5422, 0.0
      %v5439 = vsel %vm1060, %v5423, 0.0
      %v5440 = vsel %vm1061, %v5424, 0.0
      %v5441 = vsel %vm1058, %v5425, 0.0
      %v5442 = vsel %vm1059, %v5426, 0.0
      %v5443 = vsel %vm1060, %v5427, 0.0
      %v5444 = vsel %vm1061, %v5428, 0.0
      %5445 = vst [vmem:[#allocation2 + $0x8] sm:$0xff] %v5429
      %5446 = vst [vmem:[#allocation2 + $0x10] sm:$0xff] %v5430
      %5447 = vst [vmem:[#allocation2 + $0x18] sm:$0xff] %v5431
      %5448 = vst.msk [vmem:[#allocation2 + $0x20] sm:$0xff] %vm314, %v5432
      %5449 = vst [vmem:[#allocation2 + $0x38] sm:$0xff] %v5433
      %5450 = vst [vmem:[#allocation2 + $0x40] sm:$0xff] %v5434
      %5451 = vst [vmem:[#allocation2 + $0x48] sm:$0xff] %v5435
      %5452 = vst.msk [vmem:[#allocation2 + $0x50] sm:$0xff] %vm314, %v5436
      %5453 = vst [vmem:[#allocation2 + $0x68] sm:$0xff] %v5437
      %5454 = vst [vmem:[#allocation2 + $0x70] sm:$0xff] %v5438
      %5455 = vst [vmem:[#allocation2 + $0x78] sm:$0xff] %v5439
      %5456 = vst.msk [vmem:[#allocation2 + $0x80] sm:$0xff] %vm314, %v5440
      %5457 = vst [vmem:[#allocation2 + $0x98] sm:$0xff] %v5441
      %5458 = vst [vmem:[#allocation2 + $0xa0] sm:$0xff] %v5442
      %5459 = vst [vmem:[#allocation2 + $0xa8] sm:$0xff] %v5443
      %5460 = vst.msk [vmem:[#allocation2 + $0xb0] sm:$0xff] %vm314, %v5444
      %v5461 = vld [vmem:[%s7] sm:$0xf]
      %5463 = vset.pattern.permute.xlu0 0
      %5464 = vperm.xlu0 %5463, %v5461
      %v5465 = vpop.permute.xlu0 %5464
      %v5467 = vld [vmem:[#allocation2] sm:$0xff]
      %v5468 = vld [vmem:[#allocation2 + $0x8] sm:$0xff]
      %v5469 = vld [vmem:[#allocation2 + $0x10] sm:$0xff]
      %v5470 = vld [vmem:[#allocation2 + $0x18] sm:$0xff]
      %v5471 = vld [vmem:[#allocation2 + $0x20] sm:$0xff]
      %v5472 = vld [vmem:[#allocation2 + $0x30] sm:$0xff]
      %v5473 = vld [vmem:[#allocation2 + $0x38] sm:$0xff]
      %v5474 = vld [vmem:[#allocation2 + $0x40] sm:$0xff]
      %v5475 = vld [vmem:[#allocation2 + $0x48] sm:$0xff]
      %v5476 = vld [vmem:[#allocation2 + $0x50] sm:$0xff]
      %v5477 = vld [vmem:[#allocation2 + $0x60] sm:$0xff]
      %v5478 = vld [vmem:[#allocation2 + $0x68] sm:$0xff]
      %v5479 = vld [vmem:[#allocation2 + $0x70] sm:$0xff]
      %v5480 = vld [vmem:[#allocation2 + $0x78] sm:$0xff]
      %v5481 = vld [vmem:[#allocation2 + $0x80] sm:$0xff]
      %v5482 = vld [vmem:[#allocation2 + $0x90] sm:$0xff]
      %v5483 = vld [vmem:[#allocation2 + $0x98] sm:$0xff]
      %v5484 = vld [vmem:[#allocation2 + $0xa0] sm:$0xff]
      %v5485 = vld [vmem:[#allocation2 + $0xa8] sm:$0xff]
      %v5486 = vld [vmem:[#allocation2 + $0xb0] sm:$0xff]
      %5507 = vrot.lane.b32.xlu0 %v5467, 127
      %v5508 = vpop.permute.xlu0 %5507
      %5509 = vrot.lane.b32.xlu0 %v5468, 127
      %v5510 = vpop.permute.xlu0 %5509
      %5511 = vrot.lane.b32.xlu0 %v5469, 127
      %v5512 = vpop.permute.xlu0 %5511
      %5513 = vrot.lane.b32.xlu0 %v5470, 127
      %v5514 = vpop.permute.xlu0 %5513
      %5515 = vrot.lane.b32.xlu0 %v5471, 127
      %v5516 = vpop.permute.xlu0 %5515
      %5517 = vrot.lane.b32.xlu0 %v5472, 127
      %v5518 = vpop.permute.xlu0 %5517
      %5519 = vrot.lane.b32.xlu0 %v5473, 127
      %v5520 = vpop.permute.xlu0 %5519
      %5521 = vrot.lane.b32.xlu0 %v5474, 127
      %v5522 = vpop.permute.xlu0 %5521
      %5523 = vrot.lane.b32.xlu0 %v5475, 127
      %v5524 = vpop.permute.xlu0 %5523
      %5525 = vrot.lane.b32.xlu0 %v5476, 127
      %v5526 = vpop.permute.xlu0 %5525
      %5527 = vrot.lane.b32.xlu0 %v5477, 127
      %v5528 = vpop.permute.xlu0 %5527
      %5529 = vrot.lane.b32.xlu0 %v5478, 127
      %v5530 = vpop.permute.xlu0 %5529
      %5531 = vrot.lane.b32.xlu0 %v5479, 127
      %v5532 = vpop.permute.xlu0 %5531
      %5533 = vrot.lane.b32.xlu0 %v5480, 127
      %v5534 = vpop.permute.xlu0 %5533
      %5535 = vrot.lane.b32.xlu0 %v5481, 127
      %v5536 = vpop.permute.xlu0 %5535
      %5537 = vrot.lane.b32.xlu0 %v5482, 127
      %v5538 = vpop.permute.xlu0 %5537
      %5539 = vrot.lane.b32.xlu0 %v5483, 127
      %v5540 = vpop.permute.xlu0 %5539
      %5541 = vrot.lane.b32.xlu0 %v5484, 127
      %v5542 = vpop.permute.xlu0 %5541
      %5543 = vrot.lane.b32.xlu0 %v5485, 127
      %v5544 = vpop.permute.xlu0 %5543
      %5545 = vrot.lane.b32.xlu0 %v5486, 127
      %v5546 = vpop.permute.xlu0 %5545
      %v5547 = vsel %vm410, %v5508, %v5510
      %v5548 = vsel %vm410, %v5510, %v5512
      %v5549 = vsel %vm410, %v5512, %v5514
      %v5550 = vsel %vm410, %v5514, %v5516
      %v5551 = vsel %vm410, %v5518, %v5520
      %v5552 = vsel %vm410, %v5520, %v5522
      %v5553 = vsel %vm410, %v5522, %v5524
      %v5554 = vsel %vm410, %v5524, %v5526
      %v5555 = vsel %vm410, %v5528, %v5530
      %v5556 = vsel %vm410, %v5530, %v5532
      %v5557 = vsel %vm410, %v5532, %v5534
      %v5558 = vsel %vm410, %v5534, %v5536
      %v5559 = vsel %vm410, %v5538, %v5540
      %v5560 = vsel %vm410, %v5540, %v5542
      %v5561 = vsel %vm410, %v5542, %v5544
      %v5562 = vsel %vm410, %v5544, %v5546
      %5583 = vrot.lane.b32.xlu0 %v5467, 126
      %v5584 = vpop.permute.xlu0 %5583
      %5585 = vrot.lane.b32.xlu0 %v5468, 126
      %v5586 = vpop.permute.xlu0 %5585
      %5587 = vrot.lane.b32.xlu0 %v5469, 126
      %v5588 = vpop.permute.xlu0 %5587
      %5589 = vrot.lane.b32.xlu0 %v5470, 126
      %v5590 = vpop.permute.xlu0 %5589
      %5591 = vrot.lane.b32.xlu0 %v5471, 126
      %v5592 = vpop.permute.xlu0 %5591
      %5593 = vrot.lane.b32.xlu0 %v5472, 126
      %v5594 = vpop.permute.xlu0 %5593
      %5595 = vrot.lane.b32.xlu0 %v5473, 126
      %v5596 = vpop.permute.xlu0 %5595
      %5597 = vrot.lane.b32.xlu0 %v5474, 126
      %v5598 = vpop.permute.xlu0 %5597
      %5599 = vrot.lane.b32.xlu0 %v5475, 126
      %v5600 = vpop.permute.xlu0 %5599
      %5601 = vrot.lane.b32.xlu0 %v5476, 126
      %v5602 = vpop.permute.xlu0 %5601
      %5603 = vrot.lane.b32.xlu0 %v5477, 126
      %v5604 = vpop.permute.xlu0 %5603
      %5605 = vrot.lane.b32.xlu0 %v5478, 126
      %v5606 = vpop.permute.xlu0 %5605
      %5607 = vrot.lane.b32.xlu0 %v5479, 126
      %v5608 = vpop.permute.xlu0 %5607
      %5609 = vrot.lane.b32.xlu0 %v5480, 126
      %v5610 = vpop.permute.xlu0 %5609
      %5611 = vrot.lane.b32.xlu0 %v5481, 126
      %v5612 = vpop.permute.xlu0 %5611
      %5613 = vrot.lane.b32.xlu0 %v5482, 126
      %v5614 = vpop.permute.xlu0 %5613
      %5615 = vrot.lane.b32.xlu0 %v5483, 126
      %v5616 = vpop.permute.xlu0 %5615
      %5617 = vrot.lane.b32.xlu0 %v5484, 126
      %v5618 = vpop.permute.xlu0 %5617
      %5619 = vrot.lane.b32.xlu0 %v5485, 126
      %v5620 = vpop.permute.xlu0 %5619
      %5621 = vrot.lane.b32.xlu0 %v5486, 126
      %v5622 = vpop.permute.xlu0 %5621
      %v5623 = vsel %vm430, %v5584, %v5586
      %v5624 = vsel %vm430, %v5586, %v5588
      %v5625 = vsel %vm430, %v5588, %v5590
      %v5626 = vsel %vm430, %v5590, %v5592
      %v5627 = vsel %vm430, %v5594, %v5596
      %v5628 = vsel %vm430, %v5596, %v5598
      %v5629 = vsel %vm430, %v5598, %v5600
      %v5630 = vsel %vm430, %v5600, %v5602
      %v5631 = vsel %vm430, %v5604, %v5606
      %v5632 = vsel %vm430, %v5606, %v5608
      %v5633 = vsel %vm430, %v5608, %v5610
      %v5634 = vsel %vm430, %v5610, %v5612
      %v5635 = vsel %vm430, %v5614, %v5616
      %v5636 = vsel %vm430, %v5616, %v5618
      %v5637 = vsel %vm430, %v5618, %v5620
      %v5638 = vsel %vm430, %v5620, %v5622
      %v5659 = vld [vmem:[%s6] sm:$0x3]
      %v5660 = vpack.c.bf16 %v5472, %v5467
      %v5661 = vpack.c.bf16 %v5473, %v5468
      %v5662 = vpack.c.bf16 %v5474, %v5469
      %v5663 = vpack.c.bf16 %v5475, %v5470
      %v5664 = vpack.c.bf16 %v5476, %v5471
      %v5665 = vpack.c.bf16 %v5482, %v5477
      %v5666 = vpack.c.bf16 %v5483, %v5478
      %v5667 = vpack.c.bf16 %v5484, %v5479
      %v5668 = vpack.c.bf16 %v5485, %v5480
      %v5669 = vpack.c.bf16 %v5486, %v5481
      %v5670 = vpack.c.bf16 %v5551, %v5547
      %v5671 = vpack.c.bf16 %v5552, %v5548
      %v5672 = vpack.c.bf16 %v5553, %v5549
      %v5673 = vpack.c.bf16 %v5554, %v5550
      %v5674 = vpack.c.bf16 %v5526, %v5516
      %v5675 = vpack.c.bf16 %v5559, %v5555
      %v5676 = vpack.c.bf16 %v5560, %v5556
      %v5677 = vpack.c.bf16 %v5561, %v5557
      %v5678 = vpack.c.bf16 %v5562, %v5558
      %v5679 = vpack.c.bf16 %v5546, %v5536
      %v5680 = vpack.c.bf16 %v5627, %v5623
      %v5681 = vpack.c.bf16 %v5628, %v5624
      %v5682 = vpack.c.bf16 %v5629, %v5625
      %v5683 = vpack.c.bf16 %v5630, %v5626
      %v5684 = vpack.c.bf16 %v5602, %v5592
      %v5685 = vpack.c.bf16 %v5635, %v5631
      %v5686 = vpack.c.bf16 %v5636, %v5632
      %v5687 = vpack.c.bf16 %v5637, %v5633
      %v5688 = vpack.c.bf16 %v5638, %v5634
      %v5689 = vpack.c.bf16 %v5622, %v5612
      %5720 = vrot.lane.b32.xlu0 %v5660, 25
      %v5721 = vpop.permute.xlu0 %5720
      %5722 = vrot.lane.b32.xlu0 %v5661, 25
      %v5723 = vpop.permute.xlu0 %5722
      %5724 = vrot.lane.b32.xlu0 %v5662, 25
      %v5725 = vpop.permute.xlu0 %5724
      %5726 = vrot.lane.b32.xlu0 %v5663, 25
      %v5727 = vpop.permute.xlu0 %5726
      %5728 = vrot.lane.b32.xlu0 %v5664, 25
      %v5729 = vpop.permute.xlu0 %5728
      %5730 = vrot.lane.b32.xlu0 %v5665, 25
      %v5731 = vpop.permute.xlu0 %5730
      %5732 = vrot.lane.b32.xlu0 %v5666, 25
      %v5733 = vpop.permute.xlu0 %5732
      %5734 = vrot.lane.b32.xlu0 %v5667, 25
      %v5735 = vpop.permute.xlu0 %5734
      %5736 = vrot.lane.b32.xlu0 %v5668, 25
      %v5737 = vpop.permute.xlu0 %5736
      %5738 = vrot.lane.b32.xlu0 %v5669, 25
      %v5739 = vpop.permute.xlu0 %5738
      %5740 = vrot.lane.b32.xlu0 %v5670, 25
      %v5741 = vpop.permute.xlu0 %5740
      %5742 = vrot.lane.b32.xlu0 %v5671, 25
      %v5743 = vpop.permute.xlu0 %5742
      %5744 = vrot.lane.b32.xlu0 %v5672, 25
      %v5745 = vpop.permute.xlu0 %5744
      %5746 = vrot.lane.b32.xlu0 %v5673, 25
      %v5747 = vpop.permute.xlu0 %5746
      %5748 = vrot.lane.b32.xlu0 %v5674, 25
      %v5749 = vpop.permute.xlu0 %5748
      %5750 = vrot.lane.b32.xlu0 %v5675, 25
      %v5751 = vpop.permute.xlu0 %5750
      %5752 = vrot.lane.b32.xlu0 %v5676, 25
      %v5753 = vpop.permute.xlu0 %5752
      %5754 = vrot.lane.b32.xlu0 %v5677, 25
      %v5755 = vpop.permute.xlu0 %5754
      %5756 = vrot.lane.b32.xlu0 %v5678, 25
      %v5757 = vpop.permute.xlu0 %5756
      %5758 = vrot.lane.b32.xlu0 %v5679, 25
      %v5759 = vpop.permute.xlu0 %5758
      %5760 = vrot.lane.b32.xlu0 %v5680, 25
      %v5761 = vpop.permute.xlu0 %5760
      %5762 = vrot.lane.b32.xlu0 %v5681, 25
      %v5763 = vpop.permute.xlu0 %5762
      %5764 = vrot.lane.b32.xlu0 %v5682, 25
      %v5765 = vpop.permute.xlu0 %5764
      %5766 = vrot.lane.b32.xlu0 %v5683, 25
      %v5767 = vpop.permute.xlu0 %5766
      %5768 = vrot.lane.b32.xlu0 %v5684, 25
      %v5769 = vpop.permute.xlu0 %5768
      %5770 = vrot.lane.b32.xlu0 %v5685, 25
      %v5771 = vpop.permute.xlu0 %5770
      %5772 = vrot.lane.b32.xlu0 %v5686, 25
      %v5773 = vpop.permute.xlu0 %5772
      %5774 = vrot.lane.b32.xlu0 %v5687, 25
      %v5775 = vpop.permute.xlu0 %5774
      %5776 = vrot.lane.b32.xlu0 %v5688, 25
      %v5777 = vpop.permute.xlu0 %5776
      %5778 = vrot.lane.b32.xlu0 %v5689, 25
      %v5779 = vpop.permute.xlu0 %5778
      %v5780 = vsel %vm494, %v5721, %v5723
      %v5781 = vsel %vm494, %v5723, %v5725
      %v5782 = vsel %vm494, %v5725, %v5727
      %v5783 = vsel %vm494, %v5727, %v5729
      %v5784 = vsel %vm494, %v5731, %v5733
      %v5785 = vsel %vm494, %v5733, %v5735
      %v5786 = vsel %vm494, %v5735, %v5737
      %v5787 = vsel %vm494, %v5737, %v5739
      %v5788 = vsel %vm494, %v5741, %v5743
      %v5789 = vsel %vm494, %v5743, %v5745
      %v5790 = vsel %vm494, %v5745, %v5747
      %v5791 = vsel %vm494, %v5747, %v5749
      %v5792 = vsel %vm494, %v5751, %v5753
      %v5793 = vsel %vm494, %v5753, %v5755
      %v5794 = vsel %vm494, %v5755, %v5757
      %v5795 = vsel %vm494, %v5757, %v5759
      %v5796 = vsel %vm494, %v5761, %v5763
      %v5797 = vsel %vm494, %v5763, %v5765
      %v5798 = vsel %vm494, %v5765, %v5767
      %v5799 = vsel %vm494, %v5767, %v5769
      %v5800 = vsel %vm494, %v5771, %v5773
      %v5801 = vsel %vm494, %v5773, %v5775
      %v5802 = vsel %vm494, %v5775, %v5777
      %v5803 = vsel %vm494, %v5777, %v5779
      %v5829 = vsel %vm1492, %v5659, 0
      %5831 = vmatprep.subr.bf16.mxu0 %v5781
      %5832 = vmatpush1.bf16.msra.mxu0 %v5780
      %5833 = vmatprep.subr.bf16.mxu0 %v5785
      %5834 = vmatpush1.bf16.msra.mxu0 %v5784
      %5835 = vmatprep.subr.bf16.mxu0 %v5789
      %5836 = vmatpush1.bf16.msra.mxu0 %v5788
      %5837 = vmatprep.subr.bf16.mxu0 %v5793
      %5838 = vmatpush1.bf16.msra.mxu0 %v5792
      %5839 = vmatprep.subr.bf16.mxu0 %v5797
      %5840 = vmatpush1.bf16.msra.mxu0 %v5796
      %5841 = vmatprep.subr.bf16.mxu0 %v5801
      %5842 = vmatpush1.bf16.msra.mxu0 %v5800
      %5843 = vmatprep.subr.bf16.mxu0 0
      %5844 = vmatpush1.bf16.msra.mxu0 0
      %5845 = vmatprep.subr.bf16.mxu0 0
      %5846 = vmatpush1.bf16.msra.mxu0 0
      %5847 = vmatprep.subr.bf16.mxu0 0
      %5848 = vmatpush1.bf16.msra.mxu0 0
      %5849 = vmatprep.subr.bf16.mxu0 0
      %5850 = vmatpush1.bf16.msra.mxu0 0
      %5851 = vmatprep.subr.bf16.mxu0 0
      %5852 = vmatpush1.bf16.msra.mxu0 0
      %5853 = vmatprep.subr.bf16.mxu0 0
      %5854 = vmatpush1.bf16.msra.mxu0 0
      %5855 = vmatprep.subr.bf16.mxu0 0
      %5856 = vmatpush1.bf16.msra.mxu0 0
      %5857 = vmatprep.subr.bf16.mxu0 0
      %5858 = vmatpush1.bf16.msra.mxu0 0
      %5859 = vmatprep.subr.bf16.mxu0 0
      %5860 = vmatpush1.bf16.msra.mxu0 0
      %5861 = vmatprep.subr.bf16.mxu0 0
      %5862 = vmatpush1.bf16.msra.mxu0 0
      %5863 = vmatprep.mubr.bf16.mxu0 0
      %5864 = vmatmul.mubr.bf16.gmra.mrb[0].mxu0 %v5829
      %v5865 = vpop.f32.mrb[0].mxu0
      %v5866 = vadd.f32 0.0, %v5865
      %v5867 = vpop.f32.mrb[0].mxu0
      %v5868 = vadd.f32 0.0, %v5867
      %v5869 = vpop.f32.mrb[0].mxu0
      %v5870 = vpop.f32.mrb[0].mxu0
      %5871 = vdwg.mxu0
      %5872 = vmatprep.subr.bf16.mxu0 %v5783
      %5873 = vmatpush1.bf16.msra.mxu0 %v5782
      %5874 = vmatprep.subr.bf16.mxu0 %v5787
      %5875 = vmatpush1.bf16.msra.mxu0 %v5786
      %5876 = vmatprep.subr.bf16.mxu0 %v5791
      %5877 = vmatpush1.bf16.msra.mxu0 %v5790
      %5878 = vmatprep.subr.bf16.mxu0 %v5795
      %5879 = vmatpush1.bf16.msra.mxu0 %v5794
      %5880 = vmatprep.subr.bf16.mxu0 %v5799
      %5881 = vmatpush1.bf16.msra.mxu0 %v5798
      %5882 = vmatprep.subr.bf16.mxu0 %v5803
      %5883 = vmatpush1.bf16.msra.mxu0 %v5802
      %5884 = vmatprep.subr.bf16.mxu0 0
      %5885 = vmatpush1.bf16.msra.mxu0 0
      %5886 = vmatprep.subr.bf16.mxu0 0
      %5887 = vmatpush1.bf16.msra.mxu0 0
      %5888 = vmatprep.subr.bf16.mxu0 0
      %5889 = vmatpush1.bf16.msra.mxu0 0
      %5890 = vmatprep.subr.bf16.mxu0 0
      %5891 = vmatpush1.bf16.msra.mxu0 0
      %5892 = vmatprep.subr.bf16.mxu0 0
      %5893 = vmatpush1.bf16.msra.mxu0 0
      %5894 = vmatprep.subr.bf16.mxu0 0
      %5895 = vmatpush1.bf16.msra.mxu0 0
      %5896 = vmatprep.subr.bf16.mxu0 0
      %5897 = vmatpush1.bf16.msra.mxu0 0
      %5898 = vmatprep.subr.bf16.mxu0 0
      %5899 = vmatpush1.bf16.msra.mxu0 0
      %5900 = vmatprep.subr.bf16.mxu0 0
      %5901 = vmatpush1.bf16.msra.mxu0 0
      %5902 = vmatprep.subr.bf16.mxu0 0
      %5903 = vmatpush1.bf16.msra.mxu0 0
      %5904 = vmatprep.mubr.bf16.mxu0 0
      %5905 = vmatmul.mubr.bf16.gmra.mrb[0].mxu0 %v5829
      %v5906 = vpop.f32.mrb[0].mxu0
      %v5907 = vadd.f32 0.0, %v5906
      %v5908 = vpop.f32.mrb[0].mxu0
      %v5909 = vadd.f32 0.0, %v5908
      %v5910 = vpop.f32.mrb[0].mxu0
      %v5911 = vpop.f32.mrb[0].mxu0
      %5912 = vdwg.mxu0
      %v5913 = vadd.f32 %v5465, %v5866
      %v5914 = vadd.f32 %v5465, %v5868
      %v5915 = vadd.f32 %v5465, %v5907
      %v5916 = vadd.f32 %v5465, %v5909
      %s5925 = scalar_lea.vmem %s6, 2
      %v5926 = vld [vmem:[%s5925] sm:$0x3]
      %v5927 = vpack.c.bf16 %v5520, %v5510
      %v5928 = vpack.c.bf16 %v5540, %v5530
      %v5929 = vpack.c.bf16 %v5596, %v5586
      %v5930 = vpack.c.bf16 %v5616, %v5606
      %5935 = vrot.lane.b32.xlu0 %v5660, 1
      %v5936 = vpop.permute.xlu0 %5935
      %5937 = vrot.lane.b32.xlu0 %v5661, 1
      %v5938 = vpop.permute.xlu0 %5937
      %5939 = vrot.lane.b32.xlu0 %v5662, 1
      %v5940 = vpop.permute.xlu0 %5939
      %5941 = vrot.lane.b32.xlu0 %v5663, 1
      %v5942 = vpop.permute.xlu0 %5941
      %5943 = vrot.lane.b32.xlu0 %v5664, 1
      %v5944 = vpop.permute.xlu0 %5943
      %5945 = vrot.lane.b32.xlu0 %v5665, 1
      %v5946 = vpop.permute.xlu0 %5945
      %5947 = vrot.lane.b32.xlu0 %v5666, 1
      %v5948 = vpop.permute.xlu0 %5947
      %5949 = vrot.lane.b32.xlu0 %v5667, 1
      %v5950 = vpop.permute.xlu0 %5949
      %5951 = vrot.lane.b32.xlu0 %v5668, 1
      %v5952 = vpop.permute.xlu0 %5951
      %5953 = vrot.lane.b32.xlu0 %v5669, 1
      %v5954 = vpop.permute.xlu0 %5953
      %5955 = vrot.lane.b32.xlu0 %v5927, 1
      %v5956 = vpop.permute.xlu0 %5955
      %5957 = vrot.lane.b32.xlu0 %v5671, 1
      %v5958 = vpop.permute.xlu0 %5957
      %5959 = vrot.lane.b32.xlu0 %v5672, 1
      %v5960 = vpop.permute.xlu0 %5959
      %5961 = vrot.lane.b32.xlu0 %v5673, 1
      %v5962 = vpop.permute.xlu0 %5961
      %5963 = vrot.lane.b32.xlu0 %v5674, 1
      %v5964 = vpop.permute.xlu0 %5963
      %5965 = vrot.lane.b32.xlu0 %v5928, 1
      %v5966 = vpop.permute.xlu0 %5965
      %5967 = vrot.lane.b32.xlu0 %v5676, 1
      %v5968 = vpop.permute.xlu0 %5967
      %5969 = vrot.lane.b32.xlu0 %v5677, 1
      %v5970 = vpop.permute.xlu0 %5969
      %5971 = vrot.lane.b32.xlu0 %v5678, 1
      %v5972 = vpop.permute.xlu0 %5971
      %5973 = vrot.lane.b32.xlu0 %v5679, 1
      %v5974 = vpop.permute.xlu0 %5973
      %5975 = vrot.lane.b32.xlu0 %v5929, 1
      %v5976 = vpop.permute.xlu0 %5975
      %5977 = vrot.lane.b32.xlu0 %v5681, 1
      %v5978 = vpop.permute.xlu0 %5977
      %5979 = vrot.lane.b32.xlu0 %v5682, 1
      %v5980 = vpop.permute.xlu0 %5979
      %5981 = vrot.lane.b32.xlu0 %v5683, 1
      %v5982 = vpop.permute.xlu0 %5981
      %5983 = vrot.lane.b32.xlu0 %v5684, 1
      %v5984 = vpop.permute.xlu0 %5983
      %5985 = vrot.lane.b32.xlu0 %v5930, 1
      %v5986 = vpop.permute.xlu0 %5985
      %5987 = vrot.lane.b32.xlu0 %v5686, 1
      %v5988 = vpop.permute.xlu0 %5987
      %5989 = vrot.lane.b32.xlu0 %v5687, 1
      %v5990 = vpop.permute.xlu0 %5989
      %5991 = vrot.lane.b32.xlu0 %v5688, 1
      %v5992 = vpop.permute.xlu0 %5991
      %5993 = vrot.lane.b32.xlu0 %v5689, 1
      %v5994 = vpop.permute.xlu0 %5993
      %v5995 = vsel %vm690, %v5936, %v5938
      %v5996 = vsel %vm690, %v5938, %v5940
      %v5997 = vsel %vm690, %v5940, %v5942
      %v5998 = vsel %vm690, %v5942, %v5944
      %v5999 = vsel %vm690, %v5946, %v5948
      %v6000 = vsel %vm690, %v5948, %v5950
      %v6001 = vsel %vm690, %v5950, %v5952
      %v6002 = vsel %vm690, %v5952, %v5954
      %v6003 = vsel %vm690, %v5956, %v5958
      %v6004 = vsel %vm690, %v5958, %v5960
      %v6005 = vsel %vm690, %v5960, %v5962
      %v6006 = vsel %vm690, %v5962, %v5964
      %v6007 = vsel %vm690, %v5966, %v5968
      %v6008 = vsel %vm690, %v5968, %v5970
      %v6009 = vsel %vm690, %v5970, %v5972
      %v6010 = vsel %vm690, %v5972, %v5974
      %v6011 = vsel %vm690, %v5976, %v5978
      %v6012 = vsel %vm690, %v5978, %v5980
      %v6013 = vsel %vm690, %v5980, %v5982
      %v6014 = vsel %vm690, %v5982, %v5984
      %v6015 = vsel %vm690, %v5986, %v5988
      %v6016 = vsel %vm690, %v5988, %v5990
      %v6017 = vsel %vm690, %v5990, %v5992
      %v6018 = vsel %vm690, %v5992, %v5994
      %v6044 = vsel %vm1492, %v5926, 0
      %6046 = vmatprep.subr.bf16.mxu0 %v5996
      %6047 = vmatpush1.bf16.msra.mxu0 %v5995
      %6048 = vmatprep.subr.bf16.mxu0 %v6000
      %6049 = vmatpush1.bf16.msra.mxu0 %v5999
      %6050 = vmatprep.subr.bf16.mxu0 %v6004
      %6051 = vmatpush1.bf16.msra.mxu0 %v6003
      %6052 = vmatprep.subr.bf16.mxu0 %v6008
      %6053 = vmatpush1.bf16.msra.mxu0 %v6007
      %6054 = vmatprep.subr.bf16.mxu0 %v6012
      %6055 = vmatpush1.bf16.msra.mxu0 %v6011
      %6056 = vmatprep.subr.bf16.mxu0 %v6016
      %6057 = vmatpush1.bf16.msra.mxu0 %v6015
      %6058 = vmatprep.subr.bf16.mxu0 0
      %6059 = vmatpush1.bf16.msra.mxu0 0
      %6060 = vmatprep.subr.bf16.mxu0 0
      %6061 = vmatpush1.bf16.msra.mxu0 0
      %6062 = vmatprep.subr.bf16.mxu0 0
      %6063 = vmatpush1.bf16.msra.mxu0 0
      %6064 = vmatprep.subr.bf16.mxu0 0
      %6065 = vmatpush1.bf16.msra.mxu0 0
      %6066 = vmatprep.subr.bf16.mxu0 0
      %6067 = vmatpush1.bf16.msra.mxu0 0
      %6068 = vmatprep.subr.bf16.mxu0 0
      %6069 = vmatpush1.bf16.msra.mxu0 0
      %6070 = vmatprep.subr.bf16.mxu0 0
      %6071 = vmatpush1.bf16.msra.mxu0 0
      %6072 = vmatprep.subr.bf16.mxu0 0
      %6073 = vmatpush1.bf16.msra.mxu0 0
      %6074 = vmatprep.subr.bf16.mxu0 0
      %6075 = vmatpush1.bf16.msra.mxu0 0
      %6076 = vmatprep.subr.bf16.mxu0 0
      %6077 = vmatpush1.bf16.msra.mxu0 0
      %6078 = vmatprep.mubr.bf16.mxu0 0
      %6079 = vmatmul.mubr.bf16.gmra.mrb[0].mxu0 %v6044
      %v6080 = vpop.f32.mrb[0].mxu0
      %v6081 = vadd.f32 0.0, %v6080
      %v6082 = vpop.f32.mrb[0].mxu0
      %v6083 = vadd.f32 0.0, %v6082
      %v6084 = vpop.f32.mrb[0].mxu0
      %v6085 = vpop.f32.mrb[0].mxu0
      %6086 = vdwg.mxu0
      %6087 = vmatprep.subr.bf16.mxu0 %v5998
      %6088 = vmatpush1.bf16.msra.mxu0 %v5997
      %6089 = vmatprep.subr.bf16.mxu0 %v6002
      %6090 = vmatpush1.bf16.msra.mxu0 %v6001
      %6091 = vmatprep.subr.bf16.mxu0 %v6006
      %6092 = vmatpush1.bf16.msra.mxu0 %v6005
      %6093 = vmatprep.subr.bf16.mxu0 %v6010
      %6094 = vmatpush1.bf16.msra.mxu0 %v6009
      %6095 = vmatprep.subr.bf16.mxu0 %v6014
      %6096 = vmatpush1.bf16.msra.mxu0 %v6013
      %6097 = vmatprep.subr.bf16.mxu0 %v6018
      %6098 = vmatpush1.bf16.msra.mxu0 %v6017
      %6099 = vmatprep.subr.bf16.mxu0 0
      %6100 = vmatpush1.bf16.msra.mxu0 0
      %6101 = vmatprep.subr.bf16.mxu0 0
      %6102 = vmatpush1.bf16.msra.mxu0 0
      %6103 = vmatprep.subr.bf16.mxu0 0
      %6104 = vmatpush1.bf16.msra.mxu0 0
      %6105 = vmatprep.subr.bf16.mxu0 0
      %6106 = vmatpush1.bf16.msra.mxu0 0
      %6107 = vmatprep.subr.bf16.mxu0 0
      %6108 = vmatpush1.bf16.msra.mxu0 0
      %6109 = vmatprep.subr.bf16.mxu0 0
      %6110 = vmatpush1.bf16.msra.mxu0 0
      %6111 = vmatprep.subr.bf16.mxu0 0
      %6112 = vmatpush1.bf16.msra.mxu0 0
      %6113 = vmatprep.subr.bf16.mxu0 0
      %6114 = vmatpush1.bf16.msra.mxu0 0
      %6115 = vmatprep.subr.bf16.mxu0 0
      %6116 = vmatpush1.bf16.msra.mxu0 0
      %6117 = vmatprep.subr.bf16.mxu0 0
      %6118 = vmatpush1.bf16.msra.mxu0 0
      %6119 = vmatprep.mubr.bf16.mxu0 0
      %6120 = vmatmul.mubr.bf16.gmra.mrb[0].mxu0 %v6044
      %v6121 = vpop.f32.mrb[0].mxu0
      %v6122 = vadd.f32 0.0, %v6121
      %v6123 = vpop.f32.mrb[0].mxu0
      %v6124 = vadd.f32 0.0, %v6123
      %v6125 = vpop.f32.mrb[0].mxu0
      %v6126 = vpop.f32.mrb[0].mxu0
      %6127 = vdwg.mxu0
      %v6128 = vadd.f32 %v5913, %v6081
      %v6129 = vadd.f32 %v5914, %v6083
      %v6130 = vadd.f32 %v5915, %v6122
      %v6131 = vadd.f32 %v5916, %v6124
      %s6132 = scalar_lea.vmem %s6, 4
      %v6133 = vld [vmem:[%s6132] sm:$0x3]
      %6134 = vrot.lane.b32.xlu0 %v5661, 105
      %v6135 = vpop.permute.xlu0 %6134
      %6136 = vrot.lane.b32.xlu0 %v5662, 105
      %v6137 = vpop.permute.xlu0 %6136
      %6138 = vrot.lane.b32.xlu0 %v5663, 105
      %v6139 = vpop.permute.xlu0 %6138
      %6140 = vrot.lane.b32.xlu0 %v5664, 105
      %v6141 = vpop.permute.xlu0 %6140
      %6142 = vrot.lane.b32.xlu0 %v5666, 105
      %v6143 = vpop.permute.xlu0 %6142
      %6144 = vrot.lane.b32.xlu0 %v5667, 105
      %v6145 = vpop.permute.xlu0 %6144
      %6146 = vrot.lane.b32.xlu0 %v5668, 105
      %v6147 = vpop.permute.xlu0 %6146
      %6148 = vrot.lane.b32.xlu0 %v5669, 105
      %v6149 = vpop.permute.xlu0 %6148
      %6150 = vrot.lane.b32.xlu0 %v5671, 105
      %v6151 = vpop.permute.xlu0 %6150
      %6152 = vrot.lane.b32.xlu0 %v5672, 105
      %v6153 = vpop.permute.xlu0 %6152
      %6154 = vrot.lane.b32.xlu0 %v5673, 105
      %v6155 = vpop.permute.xlu0 %6154
      %6156 = vrot.lane.b32.xlu0 %v5674, 105
      %v6157 = vpop.permute.xlu0 %6156
      %6158 = vrot.lane.b32.xlu0 %v5676, 105
      %v6159 = vpop.permute.xlu0 %6158
      %6160 = vrot.lane.b32.xlu0 %v5677, 105
      %v6161 = vpop.permute.xlu0 %6160
      %6162 = vrot.lane.b32.xlu0 %v5678, 105
      %v6163 = vpop.permute.xlu0 %6162
      %6164 = vrot.lane.b32.xlu0 %v5679, 105
      %v6165 = vpop.permute.xlu0 %6164
      %6166 = vrot.lane.b32.xlu0 %v5681, 105
      %v6167 = vpop.permute.xlu0 %6166
      %6168 = vrot.lane.b32.xlu0 %v5682, 105
      %v6169 = vpop.permute.xlu0 %6168
      %6170 = vrot.lane.b32.xlu0 %v5683, 105
      %v6171 = vpop.permute.xlu0 %6170
      %6172 = vrot.lane.b32.xlu0 %v5684, 105
      %v6173 = vpop.permute.xlu0 %6172
      %6174 = vrot.lane.b32.xlu0 %v5686, 105
      %v6175 = vpop.permute.xlu0 %6174
      %6176 = vrot.lane.b32.xlu0 %v5687, 105
      %v6177 = vpop.permute.xlu0 %6176
      %6178 = vrot.lane.b32.xlu0 %v5688, 105
      %v6179 = vpop.permute.xlu0 %6178
      %6180 = vrot.lane.b32.xlu0 %v5689, 105
      %v6181 = vpop.permute.xlu0 %6180
      %v6182 = vsel %vm874, %v6135, %v6137
      %v6183 = vsel %vm874, %v6137, %v6139
      %v6184 = vsel %vm874, %v6139, %v6141
      %v6185 = vsel %vm874, %v6143, %v6145
      %v6186 = vsel %vm874, %v6145, %v6147
      %v6187 = vsel %vm874, %v6147, %v6149
      %v6188 = vsel %vm874, %v6151, %v6153
      %v6189 = vsel %vm874, %v6153, %v6155
      %v6190 = vsel %vm874, %v6155, %v6157
      %v6191 = vsel %vm874, %v6159, %v6161
      %v6192 = vsel %vm874, %v6161, %v6163
      %v6193 = vsel %vm874, %v6163, %v6165
      %v6194 = vsel %vm874, %v6167, %v6169
      %v6195 = vsel %vm874, %v6169, %v6171
      %v6196 = vsel %vm874, %v6171, %v6173
      %v6197 = vsel %vm874, %v6175, %v6177
      %v6198 = vsel %vm874, %v6177, %v6179
      %v6199 = vsel %vm874, %v6179, %v6181
      %v6225 = vsel %vm1492, %v6133, 0
      %6227 = vmatprep.subr.bf16.mxu0 %v6183
      %6228 = vmatpush1.bf16.msra.mxu0 %v6182
      %6229 = vmatprep.subr.bf16.mxu0 %v6186
      %6230 = vmatpush1.bf16.msra.mxu0 %v6185
      %6231 = vmatprep.subr.bf16.mxu0 %v6189
      %6232 = vmatpush1.bf16.msra.mxu0 %v6188
      %6233 = vmatprep.subr.bf16.mxu0 %v6192
      %6234 = vmatpush1.bf16.msra.mxu0 %v6191
      %6235 = vmatprep.subr.bf16.mxu0 %v6195
      %6236 = vmatpush1.bf16.msra.mxu0 %v6194
      %6237 = vmatprep.subr.bf16.mxu0 %v6198
      %6238 = vmatpush1.bf16.msra.mxu0 %v6197
      %6239 = vmatprep.subr.bf16.mxu0 0
      %6240 = vmatpush1.bf16.msra.mxu0 0
      %6241 = vmatprep.subr.bf16.mxu0 0
      %6242 = vmatpush1.bf16.msra.mxu0 0
      %6243 = vmatprep.subr.bf16.mxu0 0
      %6244 = vmatpush1.bf16.msra.mxu0 0
      %6245 = vmatprep.subr.bf16.mxu0 0
      %6246 = vmatpush1.bf16.msra.mxu0 0
      %6247 = vmatprep.subr.bf16.mxu0 0
      %6248 = vmatpush1.bf16.msra.mxu0 0
      %6249 = vmatprep.subr.bf16.mxu0 0
      %6250 = vmatpush1.bf16.msra.mxu0 0
      %6251 = vmatprep.subr.bf16.mxu0 0
      %6252 = vmatpush1.bf16.msra.mxu0 0
      %6253 = vmatprep.subr.bf16.mxu0 0
      %6254 = vmatpush1.bf16.msra.mxu0 0
      %6255 = vmatprep.subr.bf16.mxu0 0
      %6256 = vmatpush1.bf16.msra.mxu0 0
      %6257 = vmatprep.subr.bf16.mxu0 0
      %6258 = vmatpush1.bf16.msra.mxu0 0
      %6259 = vmatprep.mubr.bf16.mxu0 0
      %6260 = vmatmul.mubr.bf16.gmra.mrb[0].mxu0 %v6225
      %v6261 = vpop.f32.mrb[0].mxu0
      %v6262 = vadd.f32 0.0, %v6261
      %v6263 = vpop.f32.mrb[0].mxu0
      %v6264 = vadd.f32 0.0, %v6263
      %v6265 = vpop.f32.mrb[0].mxu0
      %v6266 = vpop.f32.mrb[0].mxu0
      %6267 = vdwg.mxu0
      %6268 = vmatprep.subr.bf16.mxu0 %v6141
      %6269 = vmatpush1.bf16.msra.mxu0 %v6184
      %6270 = vmatprep.subr.bf16.mxu0 %v6149
      %6271 = vmatpush1.bf16.msra.mxu0 %v6187
      %6272 = vmatprep.subr.bf16.mxu0 %v6157
      %6273 = vmatpush1.bf16.msra.mxu0 %v6190
      %6274 = vmatprep.subr.bf16.mxu0 %v6165
      %6275 = vmatpush1.bf16.msra.mxu0 %v6193
      %6276 = vmatprep.subr.bf16.mxu0 %v6173
      %6277 = vmatpush1.bf16.msra.mxu0 %v6196
      %6278 = vmatprep.subr.bf16.mxu0 %v6181
      %6279 = vmatpush1.bf16.msra.mxu0 %v6199
      %6280 = vmatprep.subr.bf16.mxu0 0
      %6281 = vmatpush1.bf16.msra.mxu0 0
      %6282 = vmatprep.subr.bf16.mxu0 0
      %6283 = vmatpush1.bf16.msra.mxu0 0
      %6284 = vmatprep.subr.bf16.mxu0 0
      %6285 = vmatpush1.bf16.msra.mxu0 0
      %6286 = vmatprep.subr.bf16.mxu0 0
      %6287 = vmatpush1.bf16.msra.mxu0 0
      %6288 = vmatprep.subr.bf16.mxu0 0
      %6289 = vmatpush1.bf16.msra.mxu0 0
      %6290 = vmatprep.subr.bf16.mxu0 0
      %6291 = vmatpush1.bf16.msra.mxu0 0
      %6292 = vmatprep.subr.bf16.mxu0 0
      %6293 = vmatpush1.bf16.msra.mxu0 0
      %6294 = vmatprep.subr.bf16.mxu0 0
      %6295 = vmatpush1.bf16.msra.mxu0 0
      %6296 = vmatprep.subr.bf16.mxu0 0
      %6297 = vmatpush1.bf16.msra.mxu0 0
      %6298 = vmatprep.subr.bf16.mxu0 0
      %6299 = vmatpush1.bf16.msra.mxu0 0
      %6300 = vmatprep.mubr.bf16.mxu0 0
      %6301 = vmatmul.mubr.bf16.gmra.mrb[0].mxu0 %v6225
      %v6302 = vpop.f32.mrb[0].mxu0
      %v6303 = vadd.f32 0.0, %v6302
      %v6304 = vpop.f32.mrb[0].mxu0
      %v6305 = vadd.f32 0.0, %v6304
      %v6306 = vpop.f32.mrb[0].mxu0
      %v6307 = vpop.f32.mrb[0].mxu0
      %6308 = vdwg.mxu0
      %v6309 = vadd.f32 %v6128, %v6262
      %v6310 = vadd.f32 %v6129, %v6264
      %v6311 = vadd.f32 %v6130, %v6303
      %v6312 = vadd.f32 %v6131, %v6305
      %v6313 = vld [vmem:[%s300] sm:$0xf]
      %v6314 = vld [vmem:[%s300 + $0x8] sm:$0xf]
      %v6315 = vld [vmem:[%s300 + $0x10] sm:$0xf]
      %v6316 = vld [vmem:[%s300 + $0x18] sm:$0xf]
      %v6317 = vadd.f32 %v6313, %v6309
      %v6318 = vadd.f32 %v6314, %v6310
      %v6319 = vadd.f32 %v6315, %v6311
      %v6320 = vadd.f32 %v6316, %v6312
      %v6321 = vsel %vm1058, %v6317, 0.0
      %v6322 = vsel %vm1059, %v6318, 0.0
      %v6323 = vsel %vm1060, %v6319, 0.0
      %v6324 = vsel %vm1061, %v6320, 0.0
      %v6329 = vcombine.low %v6321, %v6322
      %v6330 = vcombine.low %v6323, %v6324
      %6333 = vst [vmem:[%s305] sm:$0xff] %v6329
      %vm6334 = vcmask 392196
      %vm6335 = vmor %vm6334, %vm514
      %6336 = vst.msk [vmem:[%s305 + $0x8] sm:$0xff] %vm6335, %v6330
      %p6337 = scmp.lt.s32.totalorder %s19, 1
      %s6338 = scalar_select %p6337, %s19, 1
      %s6339 = smul.addr %s6338, 4
      %s6340 = smul.addr %s6339, 4
      %s6341 = scalar_lea.vmem %s8, %s6340
      // Predicated region
      $region53: #{edsr_forward.1} parent=51 // pred_check
        %p6342 = pneg %p210
      $region54: #{edsr_forward.1} parent=51 // pred_check_branch
        %6344 = sbr.rel (%p6342) target = $region56
      $region55: #{edsr_forward.1} parent=51 // pred_region
        _
      $region56: #{edsr_forward.1} parent=51 // pred_fallthru
        _
    $region52: #{edsr_forward.1} parent=5 // pred_fallthru
      _
    %p6345 = scmp.le.s32.totalorder 2, %s14
    // Predicated region
    $region57: #{edsr_forward.1} parent=5 // pred_check
      %p6346 = pneg %p6345
    $region58: #{edsr_forward.1} parent=5 // pred_check_branch
      %6348 = sbr.rel (%p6346) target = $region60
    $region59: #{edsr_forward.1} parent=5 // pred_region
      %s6349 = ssub.s32 %s14, 2
      // Predicated region
      $region61: #{edsr_forward.1} parent=59 // pred_check
        %p6350 = pneg %p216
      $region62: #{edsr_forward.1} parent=59 // pred_check_branch
        %6352 = sbr.rel (%p6350) target = $region64
      $region63: #{edsr_forward.1} parent=59 // pred_region
        %p6353 = scmp.lt.s32.totalorder %s20, 1
        %s6354 = scalar_select %p6353, %s20, 1
        %s6355 = smul.addr %s6354, 4
        %s6356 = smul.addr %s6355, 4
        %s6357 = scalar_lea.vmem %s8, %s6356
      $region64: #{edsr_forward.1} parent=59 // pred_fallthru
        _
    $region60: #{edsr_forward.1} parent=5 // pred_fallthru
      _
  $region6: #{edsr_forward.1} parent=0 // loop_footer
    %s18 = sadd.s32 1, %s14
  $region7: #{edsr_forward.1} parent=0 // loop_footer_branch
    %13 = sbr.rel target = $region3
  $region8: #{edsr_forward.1} parent=0 // loop_exit
    _

</llo_original>
